<compile_context>
chip_gen: v7x
topology: tpu7x:2x2x1
jax: 0.10.0
libtpu: 0.0.40
codegen_flags: <defaults>
</compile_context>

<pallas_src>
import jax
import jax.numpy as jnp
from jax.experimental import pallas as pl
from jax.experimental.pallas import tpu as pltpu


# ----------------------------- Pallas kernel --------------------------------


def _sppf_kernel(x_ref, w1_ref, s1_ref, b1_ref, w2_ref, s2_ref, b2_ref,
                 out_ref, padh_ref, padw_ref):
    """Fused SPPF for one batch image.

    x_ref  : (1, H, W, C1) f32    input tile, VMEM
    w1_ref : (C1, Cm)      bf16   cv1 1x1 weights (channel matrix)
    s1_ref : (1, Cm)       f32    cv1 folded-BN scale
    b1_ref : (1, Cm)       f32    cv1 folded-BN bias
    w2_ref : (4, Cm, C2)   bf16   cv2 1x1 weights, split by concat slot
    s2_ref : (1, C2)       f32    cv2 folded-BN scale
    b2_ref : (1, C2)       f32    cv2 folded-BN bias
    out_ref: (1, H, W, C2)
    padh_ref: (H+4, W, Cm) f32    -inf-padded scratch for the H-direction taps
    padw_ref: (H, W+16, Cm) f32   -inf-padded scratch for the W-direction taps
    """
    _, H, W, C1 = x_ref.shape
    Cm = w1_ref.shape[-1]
    C2 = out_ref.shape[-1]

    # Refresh only the -inf pad rows / cols the pool taps actually read
    # (interiors are rewritten inside every pool5; full memsets are avoided).
    padh_ref[0:2, :, :] = jnp.full((2, W, Cm), -jnp.inf, jnp.float32)
    padh_ref[H + 2:H + 4, :, :] = jnp.full((2, W, Cm), -jnp.inf, jnp.float32)
    padw_ref[:, 6:8, :] = jnp.full((H, 2, Cm), -jnp.inf, jnp.float32)
    padw_ref[:, W + 8:W + 10, :] = jnp.full((H, 2, Cm), -jnp.inf, jnp.float32)

    # ---- cv1: 1x1 conv as bf16 MXU matmul (f32 acc) + folded BN + SiLU ------
    x2d = x_ref[...].reshape(H * W, C1).astype(jnp.bfloat16)
    t = jnp.dot(x2d, w1_ref[...], preferred_element_type=jnp.float32)
    t = t * s1_ref[...] + b1_ref[...]
    t = t * jax.nn.sigmoid(t)                        # SiLU, f32
    t = t.reshape(H, W, Cm)

    # ---- 5x5 / stride-1 / pad-2 max pool, separable (H taps then W taps) ----
    def pool5(a):
        padh_ref[2:H + 2, :, :] = a                  # rows 0,1,H+2,H+3 stay -inf
        r = padh_ref[0:H, :, :]                      # leading-dim slices: aligned
        for i in range(1, 5):
            r = jnp.maximum(r, padh_ref[i:i + H, :, :])
        padw_ref[:, 8:8 + W, :] = r                  # sublane-aligned interior
        o = padw_ref[:, 6:6 + W, :]
        for j in range(1, 5):
            o = jnp.maximum(o, padw_ref[:, 6 + j:6 + j + W, :])
        return o

    y1 = pool5(t)
    y2 = pool5(y1)
    y3 = pool5(y2)

    # ---- cv2: 1x1 conv over concat([t,y1,y2,y3]) as 4 accumulated matmuls ----
    # Accumulator kept as a value (no VMEM scratch round trips).
    acc = jnp.dot(t.reshape(H * W, Cm).astype(jnp.bfloat16), w2_ref[0],
                  preferred_element_type=jnp.float32)
    acc = acc + jnp.dot(y1.reshape(H * W, Cm).astype(jnp.bfloat16), w2_ref[1],
                        preferred_element_type=jnp.float32)
    acc = acc + jnp.dot(y2.reshape(H * W, Cm).astype(jnp.bfloat16), w2_ref[2],
                        preferred_element_type=jnp.float32)
    acc = acc + jnp.dot(y3.reshape(H * W, Cm).astype(jnp.bfloat16), w2_ref[3],
                        preferred_element_type=jnp.float32)

    z = acc * s2_ref[...] + b2_ref[...]
    z = z * jax.nn.sigmoid(z)                        # SiLU, f32
    out_ref[...] = z.reshape(1, H, W, C2).astype(out_ref.dtype)


# ------------------------------ JAX wrapper ----------------------------------


def _vmem_limit_bytes(H, W, C1, Cm, C2):
    """Actual footprint (double-buffered activations, bf16 single-buffered
    params, pool scratch, live values) with headroom; capped for v7x (64 MiB)."""
    x_blk = H * W * C1 * 4
    out_blk = H * W * C2 * 4
    param_bytes = (C1 * Cm + 4 * Cm * C2) * 2 + 2 * (Cm + C2) * 4
    scratch = ((H + 4) * W * Cm + H * (W + 16) * Cm) * 4
    live = 5 * H * W * Cm * 4 + H * W * C2 * 4       # t, y1..y3 (+bf16 casts), acc
    need = 2 * (x_blk + out_blk) + param_bytes + scratch + live
    return int(min(max(2 * need, 32 * 1024 * 1024), 56 * 1024 * 1024))


def sppf_forward_nhwc(x, params):
    """SPPF forward on an NHWC activation (the fused Pallas kernel)."""
    N, H, W, C1 = x.shape
    w1 = params["w1"].astype(jnp.bfloat16)           # (C1, Cm)
    w2 = params["w2"].astype(jnp.bfloat16)           # (4, Cm, C2)
    Cm = w1.shape[-1]
    C2 = w2.shape[-1]
    s1 = params["s1"].reshape(1, Cm).astype(jnp.float32)
    b1 = params["b1"].reshape(1, Cm).astype(jnp.float32)
    s2 = params["s2"].reshape(1, C2).astype(jnp.float32)
    b2 = params["b2"].reshape(1, C2).astype(jnp.float32)

    flops = N * (2 * H * W * C1 * Cm                 # cv1 matmul
                 + 2 * H * W * 4 * Cm * C2           # cv2 matmuls
                 + 3 * 8 * H * W * Cm)               # 3 separable 5x5 pools
    bytes_accessed = (4 * N * H * W * (C1 + C2)
                      + 2 * (w1.size + w2.size) + 4 * 2 * (Cm + C2))
    cost = pl.CostEstimate(flops=flops,
                           transcendentals=N * H * W * (Cm + C2),
                           bytes_accessed=bytes_accessed)

    one = pl.Buffered(1)                             # grid-invariant params: no double buffer
    grid_spec = pltpu.PrefetchScalarGridSpec(
        num_scalar_prefetch=0,
        grid=(N,),
        in_specs=[
            pl.BlockSpec((1, H, W, C1), lambda n: (n, 0, 0, 0)),
            pl.BlockSpec((C1, Cm), lambda n: (0, 0), pipeline_mode=one),
            pl.BlockSpec((1, Cm), lambda n: (0, 0), pipeline_mode=one),
            pl.BlockSpec((1, Cm), lambda n: (0, 0), pipeline_mode=one),
            pl.BlockSpec((4, Cm, C2), lambda n: (0, 0, 0), pipeline_mode=one),
            pl.BlockSpec((1, C2), lambda n: (0, 0), pipeline_mode=one),
            pl.BlockSpec((1, C2), lambda n: (0, 0), pipeline_mode=one),
        ],
        out_specs=pl.BlockSpec((1, H, W, C2), lambda n: (n, 0, 0, 0)),
        scratch_shapes=[
            pltpu.VMEM((H + 4, W, Cm), jnp.float32),   # H-padded pool scratch
            pltpu.VMEM((H, W + 16, Cm), jnp.float32),  # W-padded pool scratch
        ],
    )

    return pl.pallas_call(
        _sppf_kernel,
        out_shape=jax.ShapeDtypeStruct((N, H, W, C2), x.dtype),
        grid_spec=grid_spec,
        compiler_params=pltpu.CompilerParams(
            dimension_semantics=("parallel",),
            vmem_limit_bytes=_vmem_limit_bytes(H, W, C1, Cm, C2)),
        cost_estimate=cost,
    )(x, w1, s1, b1, w2, s2, b2)


@jax.jit
def sppf_forward(x_nchw, params):
    """SPPF forward, NCHW in / NCHW out to match the PyTorch module."""
    # TODO(synk): if the surrounding network already runs NHWC, call
    # sppf_forward_nhwc directly and drop these two HBM-bound transposes.
    x = jnp.transpose(x_nchw, (0, 2, 3, 1))          # NCHW -> NHWC
    out = sppf_forward_nhwc(x, params)
    return jnp.transpose(out, (0, 3, 1, 2))          # NHWC -> NCHW


# ------------------------------ param setup ----------------------------------


def make_params(key, c1, c2, eps=1e-3):
    """Deterministic synthetic parameters (1x1 conv weights + folded BN)."""
    assert c1 % 2 == 0, "SPPF requires an even c1"
    c_ = c1 // 2
    ks = jax.random.split(key, 10)

    def bn_fold(kg, kb, km, kv, c):
        gamma = jax.random.uniform(kg, (c,), jnp.float32, 0.5, 1.5)
        beta = 0.1 * jax.random.normal(kb, (c,), jnp.float32)
        mean = 0.1 * jax.random.normal(km, (c,), jnp.float32)
        var = jax.random.uniform(kv, (c,), jnp.float32, 0.5, 1.5)
        scale = gamma / jnp.sqrt(var + eps)
        bias = beta - mean * scale
        return scale, bias

    # cv1 weight as a (Cin, Cout) channel matrix; cv2 weight as (4, c_, c2)
    # where slot j corresponds to concat input j (t, y1, y2, y3).
    w1 = 0.2 * jax.random.normal(ks[0], (c1, c_), jnp.float32)
    w2 = 0.2 * jax.random.normal(ks[1], (4, c_, c2), jnp.float32)
    s1, b1 = bn_fold(ks[2], ks[3], ks[4], ks[5], c_)
    s2, b2 = bn_fold(ks[6], ks[7], ks[8], ks[9], c2)
    return {"w1": w1, "s1": s1, "b1": b1, "w2": w2, "s2": s2, "b2": b2}


# ------------------------------ reference ------------------------------------


def _reference(x_nchw, params):
    """Pure-JAX reference (lax conv + reduce_window). Matmul inputs are cast
    to bf16 with f32 accumulation, matching the kernel's MXU precision."""
    x = jnp.transpose(x_nchw, (0, 2, 3, 1))

    def cbs(inp, w2d, s, b):   # 1x1 conv + folded BN + SiLU
        w4 = w2d.astype(jnp.bfloat16).reshape(1, 1, w2d.shape[0], w2d.shape[1])
        y = jax.lax.conv_general_dilated(
            inp.astype(jnp.bfloat16), w4, window_strides=(1, 1), padding="SAME",
            dimension_numbers=("NHWC", "HWIO", "NHWC"),
            preferred_element_type=jnp.float32)
        y = y * s + b
        return y * jax.nn.sigmoid(y)

    def pool(a):
        return jax.lax.reduce_window(
            a, -jnp.inf, jax.lax.max, (1, 5, 5, 1), (1, 1, 1, 1),
            [(0, 0), (2, 2), (2, 2), (0, 0)])

    t = cbs(x, params["w1"], params["s1"], params["b1"])
    y1 = pool(t)
    y2 = pool(y1)
    y3 = pool(y2)
    cat = jnp.concatenate([t, y1, y2, y3], axis=-1)
    w2cat = params["w2"].reshape(-1, params["w2"].shape[-1])
    out = cbs(cat, w2cat, params["s2"], params["b2"])
    return jnp.transpose(out, (0, 3, 1, 2))


# --------------------------------- main ---------------------------------------


if __name__ == "__main__":
    # Small case: SPPF(c1=4, c2=4, k=5) on N=2, 16x16 (NCHW, like PyTorch).
    key = jax.random.PRNGKey(0)
    kx, kp = jax.random.split(key)
    N, C, H, W = 2, 4, 16, 16
    x = jax.random.normal(kx, (N, C, H, W), jnp.float32)
    params = make_params(kp, c1=C, c2=C)

    out = jax.block_until_ready(sppf_forward(x, params))
    ref = _reference(x, params)
    assert out.shape == (N, C, H, W)
    assert jnp.allclose(out, ref, atol=5e-3, rtol=5e-3), "mismatch vs reference (small)"

    # Realistic-layout sanity check: W=20 (not a sublane multiple) and >=128
    # channels, exercising the padded/relayout paths the small case misses.
    k2x, k2p = jax.random.split(jax.random.PRNGKey(1))
    N2, C2_, H2, W2 = 1, 256, 20, 20
    x2 = jax.random.normal(k2x, (N2, C2_, H2, W2), jnp.float32)
    params2 = make_params(k2p, c1=C2_, c2=C2_)
    out2 = jax.block_until_ready(sppf_forward(x2, params2))
    ref2 = _reference(x2, params2)
    assert out2.shape == (N2, C2_, H2, W2)
    assert jnp.allclose(out2, ref2, atol=5e-3, rtol=5e-3), "mismatch vs reference (20x20x256)"

    print("KERNEL_OK")
</pallas_src>

<mosaic_0001>
module attributes {stable_mosaic.version = 11 : i64} {
  func.func @_sppf_kernel(%arg0: i32, %arg1: memref<1x16x16x4xf32, #tpu.memory_space<vmem>>, %arg2: memref<4x2xbf16, #tpu.memory_space<vmem>>, %arg3: memref<1x2xf32, #tpu.memory_space<vmem>>, %arg4: memref<1x2xf32, #tpu.memory_space<vmem>>, %arg5: memref<4x2x4xbf16, #tpu.memory_space<vmem>>, %arg6: memref<1x4xf32, #tpu.memory_space<vmem>>, %arg7: memref<1x4xf32, #tpu.memory_space<vmem>>, %arg8: memref<1x16x16x4xf32, #tpu.memory_space<vmem>>, %arg9: memref<20x16x2xf32, #tpu.memory_space<vmem>>, %arg10: memref<16x32x2xf32, #tpu.memory_space<vmem>>) attributes {dimension_semantics = [#tpu.dimension_semantics<parallel>], iteration_bounds = array<i64: 2>, scalar_prefetch = 0 : i64, scratch_operands = 2 : i64, tpu.core_type = #tpu.core_type<tc>, window_params = [{transform_indices = @transform_0, window_bounds = array<i64: 1, 16, 16, 4>}, {pipeline_mode = #tpu.pipeline_mode<synchronous>, transform_indices = @transform_1, window_bounds = array<i64: 4, 2>}, {pipeline_mode = #tpu.pipeline_mode<synchronous>, transform_indices = @transform_2, window_bounds = array<i64: 1, 2>}, {pipeline_mode = #tpu.pipeline_mode<synchronous>, transform_indices = @transform_3, window_bounds = array<i64: 1, 2>}, {pipeline_mode = #tpu.pipeline_mode<synchronous>, transform_indices = @transform_4, window_bounds = array<i64: 4, 2, 4>}, {pipeline_mode = #tpu.pipeline_mode<synchronous>, transform_indices = @transform_5, window_bounds = array<i64: 1, 4>}, {pipeline_mode = #tpu.pipeline_mode<synchronous>, transform_indices = @transform_6, window_bounds = array<i64: 1, 4>}, {transform_indices = @transform_7, window_bounds = array<i64: 1, 16, 16, 4>}]} {
    %cst = arith.constant 0xFF800000 : f32
    %0 = vector.broadcast %cst : f32 to vector<2x16x2xf32>
    %c0 = arith.constant 0 : index
    %c0_0 = arith.constant 0 : index
    %c0_1 = arith.constant 0 : index
    %1 = vector.load %arg9[%c0, %c0_0, %c0_1] : memref<20x16x2xf32, #tpu.memory_space<vmem>>, vector<2x16x2xf32>
    tpu.vector_store %arg9[%c0, %c0_0, %c0_1], %0 {strides = array<i32>} : memref<20x16x2xf32, #tpu.memory_space<vmem>>, vector<2x16x2xf32>,
    %cst_2 = arith.constant 0xFF800000 : f32
    %2 = vector.broadcast %cst_2 : f32 to vector<2x16x2xf32>
    %c18 = arith.constant 18 : index
    %c0_3 = arith.constant 0 : index
    %c0_4 = arith.constant 0 : index
    %3 = vector.load %arg9[%c18, %c0_3, %c0_4] : memref<20x16x2xf32, #tpu.memory_space<vmem>>, vector<2x16x2xf32>
    tpu.vector_store %arg9[%c18, %c0_3, %c0_4], %2 {strides = array<i32>} : memref<20x16x2xf32, #tpu.memory_space<vmem>>, vector<2x16x2xf32>,
    %cst_5 = arith.constant 0xFF800000 : f32
    %4 = vector.broadcast %cst_5 : f32 to vector<16x2x2xf32>
    %c0_6 = arith.constant 0 : index
    %c6 = arith.constant 6 : index
    %c0_7 = arith.constant 0 : index
    %5 = vector.load %arg10[%c0_6, %c6, %c0_7] : memref<16x32x2xf32, #tpu.memory_space<vmem>>, vector<16x2x2xf32>
    tpu.vector_store %arg10[%c0_6, %c6, %c0_7], %4 {strides = array<i32>} : memref<16x32x2xf32, #tpu.memory_space<vmem>>, vector<16x2x2xf32>,
    %cst_8 = arith.constant 0xFF800000 : f32
    %6 = vector.broadcast %cst_8 : f32 to vector<16x2x2xf32>
    %c0_9 = arith.constant 0 : index
    %c24 = arith.constant 24 : index
    %c0_10 = arith.constant 0 : index
    %7 = vector.load %arg10[%c0_9, %c24, %c0_10] : memref<16x32x2xf32, #tpu.memory_space<vmem>>, vector<16x2x2xf32>
    tpu.vector_store %arg10[%c0_9, %c24, %c0_10], %6 {strides = array<i32>} : memref<16x32x2xf32, #tpu.memory_space<vmem>>, vector<16x2x2xf32>,
    %c0_11 = arith.constant 0 : index
    %c0_12 = arith.constant 0 : index
    %c0_13 = arith.constant 0 : index
    %c0_14 = arith.constant 0 : index
    %8 = vector.load %arg1[%c0_11, %c0_12, %c0_13, %c0_14] : memref<1x16x16x4xf32, #tpu.memory_space<vmem>>, vector<1x16x16x4xf32>
    %9 = vector.shape_cast %8 : vector<1x16x16x4xf32> to vector<256x4xf32>
    %10 = arith.truncf %9 : vector<256x4xf32> to vector<256x4xbf16>
    %c0_15 = arith.constant 0 : index
    %c0_16 = arith.constant 0 : index
    %11 = vector.load %arg2[%c0_15, %c0_16] : memref<4x2xbf16, #tpu.memory_space<vmem>>, vector<4x2xbf16>
    %cst_17 = arith.constant dense<0.000000e+00> : vector<256x2xf32>
    %12 = tpu.matmul %10, %11, %cst_17 {dimension_numbers = #tpu.dot_dimension_numbers<[1], [0], [0], [1], [0, 0, 1, 1], [], []>} : vector<256x4xbf16>, vector<4x2xbf16>, vector<256x2xf32> -> vector<256x2xf32>
    %c0_18 = arith.constant 0 : index
    %c0_19 = arith.constant 0 : index
    %13 = vector.load %arg3[%c0_18, %c0_19] : memref<1x2xf32, #tpu.memory_space<vmem>>, vector<1x2xf32>
    %14 = vector.broadcast %13 : vector<1x2xf32> to vector<256x2xf32>
    %15 = arith.mulf %12, %14 : vector<256x2xf32>
    %c0_20 = arith.constant 0 : index
    %c0_21 = arith.constant 0 : index
    %16 = vector.load %arg4[%c0_20, %c0_21] : memref<1x2xf32, #tpu.memory_space<vmem>>, vector<1x2xf32>
    %17 = vector.broadcast %16 : vector<1x2xf32> to vector<256x2xf32>
    %18 = arith.addf %15, %17 : vector<256x2xf32>
    %19 = arith.negf %18 : vector<256x2xf32>
    %20 = math.exp %19 : vector<256x2xf32>
    %cst_22 = arith.constant 1.000000e+00 : f32
    %21 = vector.broadcast %cst_22 : f32 to vector<256x2xf32>
    %22 = arith.addf %21, %20 : vector<256x2xf32>
    %23 = arith.divf %21, %22 : vector<256x2xf32>
    %24 = arith.mulf %18, %23 : vector<256x2xf32>
    %25 = vector.shape_cast %24 : vector<256x2xf32> to vector<16x16x2xf32>
    %c2 = arith.constant 2 : index
    %c0_23 = arith.constant 0 : index
    %c0_24 = arith.constant 0 : index
    %26 = vector.load %arg9[%c2, %c0_23, %c0_24] : memref<20x16x2xf32, #tpu.memory_space<vmem>>, vector<16x16x2xf32>
    tpu.vector_store %arg9[%c2, %c0_23, %c0_24], %25 {strides = array<i32>} : memref<20x16x2xf32, #tpu.memory_space<vmem>>, vector<16x16x2xf32>,
    %c0_25 = arith.constant 0 : index
    %c0_26 = arith.constant 0 : index
    %c0_27 = arith.constant 0 : index
    %27 = vector.load %arg9[%c0_25, %c0_26, %c0_27] : memref<20x16x2xf32, #tpu.memory_space<vmem>>, vector<16x16x2xf32>
    %c1 = arith.constant 1 : index
    %c0_28 = arith.constant 0 : index
    %c0_29 = arith.constant 0 : index
    %28 = vector.load %arg9[%c1, %c0_28, %c0_29] : memref<20x16x2xf32, #tpu.memory_space<vmem>>, vector<16x16x2xf32>
    %29 = arith.maximumf %27, %28 : vector<16x16x2xf32>
    %c2_30 = arith.constant 2 : index
    %c0_31 = arith.constant 0 : index
    %c0_32 = arith.constant 0 : index
    %30 = vector.load %arg9[%c2_30, %c0_31, %c0_32] : memref<20x16x2xf32, #tpu.memory_space<vmem>>, vector<16x16x2xf32>
    %31 = arith.maximumf %29, %30 : vector<16x16x2xf32>
    %c3 = arith.constant 3 : index
    %c0_33 = arith.constant 0 : index
    %c0_34 = arith.constant 0 : index
    %32 = vector.load %arg9[%c3, %c0_33, %c0_34] : memref<20x16x2xf32, #tpu.memory_space<vmem>>, vector<16x16x2xf32>
    %33 = arith.maximumf %31, %32 : vector<16x16x2xf32>
    %c4 = arith.constant 4 : index
    %c0_35 = arith.constant 0 : index
    %c0_36 = arith.constant 0 : index
    %34 = vector.load %arg9[%c4, %c0_35, %c0_36] : memref<20x16x2xf32, #tpu.memory_space<vmem>>, vector<16x16x2xf32>
    %35 = arith.maximumf %33, %34 : vector<16x16x2xf32>
    %c0_37 = arith.constant 0 : index
    %c8 = arith.constant 8 : index
    %c0_38 = arith.constant 0 : index
    %36 = vector.load %arg10[%c0_37, %c8, %c0_38] : memref<16x32x2xf32, #tpu.memory_space<vmem>>, vector<16x16x2xf32>
    tpu.vector_store %arg10[%c0_37, %c8, %c0_38], %35 {strides = array<i32>} : memref<16x32x2xf32, #tpu.memory_space<vmem>>, vector<16x16x2xf32>,
    %c0_39 = arith.constant 0 : index
    %c6_40 = arith.constant 6 : index
    %c0_41 = arith.constant 0 : index
    %37 = vector.load %arg10[%c0_39, %c6_40, %c0_41] : memref<16x32x2xf32, #tpu.memory_space<vmem>>, vector<16x16x2xf32>
    %c0_42 = arith.constant 0 : index
    %c7 = arith.constant 7 : index
    %c0_43 = arith.constant 0 : index
    %38 = vector.load %arg10[%c0_42, %c7, %c0_43] : memref<16x32x2xf32, #tpu.memory_space<vmem>>, vector<16x16x2xf32>
    %39 = arith.maximumf %37, %38 : vector<16x16x2xf32>
    %c0_44 = arith.constant 0 : index
    %c8_45 = arith.constant 8 : index
    %c0_46 = arith.constant 0 : index
    %40 = vector.load %arg10[%c0_44, %c8_45, %c0_46] : memref<16x32x2xf32, #tpu.memory_space<vmem>>, vector<16x16x2xf32>
    %41 = arith.maximumf %39, %40 : vector<16x16x2xf32>
    %c0_47 = arith.constant 0 : index
    %c9 = arith.constant 9 : index
    %c0_48 = arith.constant 0 : index
    %42 = vector.load %arg10[%c0_47, %c9, %c0_48] : memref<16x32x2xf32, #tpu.memory_space<vmem>>, vector<16x16x2xf32>
    %43 = arith.maximumf %41, %42 : vector<16x16x2xf32>
    %c0_49 = arith.constant 0 : index
    %c10 = arith.constant 10 : index
    %c0_50 = arith.constant 0 : index
    %44 = vector.load %arg10[%c0_49, %c10, %c0_50] : memref<16x32x2xf32, #tpu.memory_space<vmem>>, vector<16x16x2xf32>
    %45 = arith.maximumf %43, %44 : vector<16x16x2xf32>
    %c2_51 = arith.constant 2 : index
    %c0_52 = arith.constant 0 : index
    %c0_53 = arith.constant 0 : index
    %46 = vector.load %arg9[%c2_51, %c0_52, %c0_53] : memref<20x16x2xf32, #tpu.memory_space<vmem>>, vector<16x16x2xf32>
    tpu.vector_store %arg9[%c2_51, %c0_52, %c0_53], %45 {strides = array<i32>} : memref<20x16x2xf32, #tpu.memory_space<vmem>>, vector<16x16x2xf32>,
    %c0_54 = arith.constant 0 : index
    %c0_55 = arith.constant 0 : index
    %c0_56 = arith.constant 0 : index
    %47 = vector.load %arg9[%c0_54, %c0_55, %c0_56] : memref<20x16x2xf32, #tpu.memory_space<vmem>>, vector<16x16x2xf32>
    %c1_57 = arith.constant 1 : index
    %c0_58 = arith.constant 0 : index
    %c0_59 = arith.constant 0 : index
    %48 = vector.load %arg9[%c1_57, %c0_58, %c0_59] : memref<20x16x2xf32, #tpu.memory_space<vmem>>, vector<16x16x2xf32>
    %49 = arith.maximumf %47, %48 : vector<16x16x2xf32>
    %c2_60 = arith.constant 2 : index
    %c0_61 = arith.constant 0 : index
    %c0_62 = arith.constant 0 : index
    %50 = vector.load %arg9[%c2_60, %c0_61, %c0_62] : memref<20x16x2xf32, #tpu.memory_space<vmem>>, vector<16x16x2xf32>
    %51 = arith.maximumf %49, %50 : vector<16x16x2xf32>
    %c3_63 = arith.constant 3 : index
    %c0_64 = arith.constant 0 : index
    %c0_65 = arith.constant 0 : index
    %52 = vector.load %arg9[%c3_63, %c0_64, %c0_65] : memref<20x16x2xf32, #tpu.memory_space<vmem>>, vector<16x16x2xf32>
    %53 = arith.maximumf %51, %52 : vector<16x16x2xf32>
    %c4_66 = arith.constant 4 : index
    %c0_67 = arith.constant 0 : index
    %c0_68 = arith.constant 0 : index
    %54 = vector.load %arg9[%c4_66, %c0_67, %c0_68] : memref<20x16x2xf32, #tpu.memory_space<vmem>>, vector<16x16x2xf32>
    %55 = arith.maximumf %53, %54 : vector<16x16x2xf32>
    %c0_69 = arith.constant 0 : index
    %c8_70 = arith.constant 8 : index
    %c0_71 = arith.constant 0 : index
    %56 = vector.load %arg10[%c0_69, %c8_70, %c0_71] : memref<16x32x2xf32, #tpu.memory_space<vmem>>, vector<16x16x2xf32>
    tpu.vector_store %arg10[%c0_69, %c8_70, %c0_71], %55 {strides = array<i32>} : memref<16x32x2xf32, #tpu.memory_space<vmem>>, vector<16x16x2xf32>,
    %c0_72 = arith.constant 0 : index
    %c6_73 = arith.constant 6 : index
    %c0_74 = arith.constant 0 : index
    %57 = vector.load %arg10[%c0_72, %c6_73, %c0_74] : memref<16x32x2xf32, #tpu.memory_space<vmem>>, vector<16x16x2xf32>
    %c0_75 = arith.constant 0 : index
    %c7_76 = arith.constant 7 : index
    %c0_77 = arith.constant 0 : index
    %58 = vector.load %arg10[%c0_75, %c7_76, %c0_77] : memref<16x32x2xf32, #tpu.memory_space<vmem>>, vector<16x16x2xf32>
    %59 = arith.maximumf %57, %58 : vector<16x16x2xf32>
    %c0_78 = arith.constant 0 : index
    %c8_79 = arith.constant 8 : index
    %c0_80 = arith.constant 0 : index
    %60 = vector.load %arg10[%c0_78, %c8_79, %c0_80] : memref<16x32x2xf32, #tpu.memory_space<vmem>>, vector<16x16x2xf32>
    %61 = arith.maximumf %59, %60 : vector<16x16x2xf32>
    %c0_81 = arith.constant 0 : index
    %c9_82 = arith.constant 9 : index
    %c0_83 = arith.constant 0 : index
    %62 = vector.load %arg10[%c0_81, %c9_82, %c0_83] : memref<16x32x2xf32, #tpu.memory_space<vmem>>, vector<16x16x2xf32>
    %63 = arith.maximumf %61, %62 : vector<16x16x2xf32>
    %c0_84 = arith.constant 0 : index
    %c10_85 = arith.constant 10 : index
    %c0_86 = arith.constant 0 : index
    %64 = vector.load %arg10[%c0_84, %c10_85, %c0_86] : memref<16x32x2xf32, #tpu.memory_space<vmem>>, vector<16x16x2xf32>
    %65 = arith.maximumf %63, %64 : vector<16x16x2xf32>
    %c2_87 = arith.constant 2 : index
    %c0_88 = arith.constant 0 : index
    %c0_89 = arith.constant 0 : index
    %66 = vector.load %arg9[%c2_87, %c0_88, %c0_89] : memref<20x16x2xf32, #tpu.memory_space<vmem>>, vector<16x16x2xf32>
    tpu.vector_store %arg9[%c2_87, %c0_88, %c0_89], %65 {strides = array<i32>} : memref<20x16x2xf32, #tpu.memory_space<vmem>>, vector<16x16x2xf32>,
    %c0_90 = arith.constant 0 : index
    %c0_91 = arith.constant 0 : index
    %c0_92 = arith.constant 0 : index
    %67 = vector.load %arg9[%c0_90, %c0_91, %c0_92] : memref<20x16x2xf32, #tpu.memory_space<vmem>>, vector<16x16x2xf32>
    %c1_93 = arith.constant 1 : index
    %c0_94 = arith.constant 0 : index
    %c0_95 = arith.constant 0 : index
    %68 = vector.load %arg9[%c1_93, %c0_94, %c0_95] : memref<20x16x2xf32, #tpu.memory_space<vmem>>, vector<16x16x2xf32>
    %69 = arith.maximumf %67, %68 : vector<16x16x2xf32>
    %c2_96 = arith.constant 2 : index
    %c0_97 = arith.constant 0 : index
    %c0_98 = arith.constant 0 : index
    %70 = vector.load %arg9[%c2_96, %c0_97, %c0_98] : memref<20x16x2xf32, #tpu.memory_space<vmem>>, vector<16x16x2xf32>
    %71 = arith.maximumf %69, %70 : vector<16x16x2xf32>
    %c3_99 = arith.constant 3 : index
    %c0_100 = arith.constant 0 : index
    %c0_101 = arith.constant 0 : index
    %72 = vector.load %arg9[%c3_99, %c0_100, %c0_101] : memref<20x16x2xf32, #tpu.memory_space<vmem>>, vector<16x16x2xf32>
    %73 = arith.maximumf %71, %72 : vector<16x16x2xf32>
    %c4_102 = arith.constant 4 : index
    %c0_103 = arith.constant 0 : index
    %c0_104 = arith.constant 0 : index
    %74 = vector.load %arg9[%c4_102, %c0_103, %c0_104] : memref<20x16x2xf32, #tpu.memory_space<vmem>>, vector<16x16x2xf32>
    %75 = arith.maximumf %73, %74 : vector<16x16x2xf32>
    %c0_105 = arith.constant 0 : index
    %c8_106 = arith.constant 8 : index
    %c0_107 = arith.constant 0 : index
    %76 = vector.load %arg10[%c0_105, %c8_106, %c0_107] : memref<16x32x2xf32, #tpu.memory_space<vmem>>, vector<16x16x2xf32>
    tpu.vector_store %arg10[%c0_105, %c8_106, %c0_107], %75 {strides = array<i32>} : memref<16x32x2xf32, #tpu.memory_space<vmem>>, vector<16x16x2xf32>,
    %c0_108 = arith.constant 0 : index
    %c6_109 = arith.constant 6 : index
    %c0_110 = arith.constant 0 : index
    %77 = vector.load %arg10[%c0_108, %c6_109, %c0_110] : memref<16x32x2xf32, #tpu.memory_space<vmem>>, vector<16x16x2xf32>
    %c0_111 = arith.constant 0 : index
    %c7_112 = arith.constant 7 : index
    %c0_113 = arith.constant 0 : index
    %78 = vector.load %arg10[%c0_111, %c7_112, %c0_113] : memref<16x32x2xf32, #tpu.memory_space<vmem>>, vector<16x16x2xf32>
    %79 = arith.maximumf %77, %78 : vector<16x16x2xf32>
    %c0_114 = arith.constant 0 : index
    %c8_115 = arith.constant 8 : index
    %c0_116 = arith.constant 0 : index
    %80 = vector.load %arg10[%c0_114, %c8_115, %c0_116] : memref<16x32x2xf32, #tpu.memory_space<vmem>>, vector<16x16x2xf32>
    %81 = arith.maximumf %79, %80 : vector<16x16x2xf32>
    %c0_117 = arith.constant 0 : index
    %c9_118 = arith.constant 9 : index
    %c0_119 = arith.constant 0 : index
    %82 = vector.load %arg10[%c0_117, %c9_118, %c0_119] : memref<16x32x2xf32, #tpu.memory_space<vmem>>, vector<16x16x2xf32>
    %83 = arith.maximumf %81, %82 : vector<16x16x2xf32>
    %c0_120 = arith.constant 0 : index
    %c10_121 = arith.constant 10 : index
    %c0_122 = arith.constant 0 : index
    %84 = vector.load %arg10[%c0_120, %c10_121, %c0_122] : memref<16x32x2xf32, #tpu.memory_space<vmem>>, vector<16x16x2xf32>
    %85 = arith.maximumf %83, %84 : vector<16x16x2xf32>
    %86 = vector.shape_cast %25 : vector<16x16x2xf32> to vector<256x2xf32>
    %87 = arith.truncf %86 : vector<256x2xf32> to vector<256x2xbf16>
    %c0_123 = arith.constant 0 : index
    %c0_124 = arith.constant 0 : index
    %c0_125 = arith.constant 0 : index
    %88 = vector.load %arg5[%c0_123, %c0_124, %c0_125] : memref<4x2x4xbf16, #tpu.memory_space<vmem>>, vector<1x2x4xbf16>
    %89 = vector.shape_cast %88 : vector<1x2x4xbf16> to vector<2x4xbf16>
    %cst_126 = arith.constant dense<0.000000e+00> : vector<256x4xf32>
    %90 = tpu.matmul %87, %89, %cst_126 {dimension_numbers = #tpu.dot_dimension_numbers<[1], [0], [0], [1], [0, 0, 1, 1], [], []>} : vector<256x2xbf16>, vector<2x4xbf16>, vector<256x4xf32> -> vector<256x4xf32>
    %91 = vector.shape_cast %45 : vector<16x16x2xf32> to vector<256x2xf32>
    %92 = arith.truncf %91 : vector<256x2xf32> to vector<256x2xbf16>
    %c1_127 = arith.constant 1 : index
    %c0_128 = arith.constant 0 : index
    %c0_129 = arith.constant 0 : index
    %93 = vector.load %arg5[%c1_127, %c0_128, %c0_129] : memref<4x2x4xbf16, #tpu.memory_space<vmem>>, vector<1x2x4xbf16>
    %94 = vector.shape_cast %93 : vector<1x2x4xbf16> to vector<2x4xbf16>
    %cst_130 = arith.constant dense<0.000000e+00> : vector<256x4xf32>
    %95 = tpu.matmul %92, %94, %cst_130 {dimension_numbers = #tpu.dot_dimension_numbers<[1], [0], [0], [1], [0, 0, 1, 1], [], []>} : vector<256x2xbf16>, vector<2x4xbf16>, vector<256x4xf32> -> vector<256x4xf32>
    %96 = arith.addf %90, %95 : vector<256x4xf32>
    %97 = vector.shape_cast %65 : vector<16x16x2xf32> to vector<256x2xf32>
    %98 = arith.truncf %97 : vector<256x2xf32> to vector<256x2xbf16>
    %c2_131 = arith.constant 2 : index
    %c0_132 = arith.constant 0 : index
    %c0_133 = arith.constant 0 : index
    %99 = vector.load %arg5[%c2_131, %c0_132, %c0_133] : memref<4x2x4xbf16, #tpu.memory_space<vmem>>, vector<1x2x4xbf16>
    %100 = vector.shape_cast %99 : vector<1x2x4xbf16> to vector<2x4xbf16>
    %cst_134 = arith.constant dense<0.000000e+00> : vector<256x4xf32>
    %101 = tpu.matmul %98, %100, %cst_134 {dimension_numbers = #tpu.dot_dimension_numbers<[1], [0], [0], [1], [0, 0, 1, 1], [], []>} : vector<256x2xbf16>, vector<2x4xbf16>, vector<256x4xf32> -> vector<256x4xf32>
    %102 = arith.addf %96, %101 : vector<256x4xf32>
    %103 = vector.shape_cast %85 : vector<16x16x2xf32> to vector<256x2xf32>
    %104 = arith.truncf %103 : vector<256x2xf32> to vector<256x2xbf16>
    %c3_135 = arith.constant 3 : index
    %c0_136 = arith.constant 0 : index
    %c0_137 = arith.constant 0 : index
    %105 = vector.load %arg5[%c3_135, %c0_136, %c0_137] : memref<4x2x4xbf16, #tpu.memory_space<vmem>>, vector<1x2x4xbf16>
    %106 = vector.shape_cast %105 : vector<1x2x4xbf16> to vector<2x4xbf16>
    %cst_138 = arith.constant dense<0.000000e+00> : vector<256x4xf32>
    %107 = tpu.matmul %104, %106, %cst_138 {dimension_numbers = #tpu.dot_dimension_numbers<[1], [0], [0], [1], [0, 0, 1, 1], [], []>} : vector<256x2xbf16>, vector<2x4xbf16>, vector<256x4xf32> -> vector<256x4xf32>
    %108 = arith.addf %102, %107 : vector<256x4xf32>
    %c0_139 = arith.constant 0 : index
    %c0_140 = arith.constant 0 : index
    %109 = vector.load %arg6[%c0_139, %c0_140] : memref<1x4xf32, #tpu.memory_space<vmem>>, vector<1x4xf32>
    %110 = vector.broadcast %109 : vector<1x4xf32> to vector<256x4xf32>
    %111 = arith.mulf %108, %110 : vector<256x4xf32>
    %c0_141 = arith.constant 0 : index
    %c0_142 = arith.constant 0 : index
    %112 = vector.load %arg7[%c0_141, %c0_142] : memref<1x4xf32, #tpu.memory_space<vmem>>, vector<1x4xf32>
    %113 = vector.broadcast %112 : vector<1x4xf32> to vector<256x4xf32>
    %114 = arith.addf %111, %113 : vector<256x4xf32>
    %115 = arith.negf %114 : vector<256x4xf32>
    %116 = math.exp %115 : vector<256x4xf32>
    %cst_143 = arith.constant 1.000000e+00 : f32
    %117 = vector.broadcast %cst_143 : f32 to vector<256x4xf32>
    %118 = arith.addf %117, %116 : vector<256x4xf32>
    %119 = arith.divf %117, %118 : vector<256x4xf32>
    %120 = arith.mulf %114, %119 : vector<256x4xf32>
    %121 = vector.shape_cast %120 : vector<256x4xf32> to vector<1x16x16x4xf32>
    %c0_144 = arith.constant 0 : index
    %c0_145 = arith.constant 0 : index
    %c0_146 = arith.constant 0 : index
    %c0_147 = arith.constant 0 : index
    %122 = vector.load %arg8[%c0_144, %c0_145, %c0_146, %c0_147] : memref<1x16x16x4xf32, #tpu.memory_space<vmem>>, vector<1x16x16x4xf32>
    tpu.vector_store %arg8[%c0_144, %c0_145, %c0_146, %c0_147], %121 {strides = array<i32>} : memref<1x16x16x4xf32, #tpu.memory_space<vmem>>, vector<1x16x16x4xf32>,
    return
  }
  func.func @transform_0(%arg0: i32) -> (i32, i32, i32, i32) {
    %c0_i32 = arith.constant 0 : i32
    %c0_i32_0 = arith.constant 0 : i32
    %c0_i32_1 = arith.constant 0 : i32
    %c0_i32_2 = arith.constant 0 : i32
    return %arg0, %c0_i32, %c0_i32_0, %c0_i32_1 : i32, i32, i32, i32
  }
  func.func @transform_1(%arg0: i32) -> (i32, i32) {
    %c0_i32 = arith.constant 0 : i32
    %c0_i32_0 = arith.constant 0 : i32
    %c0_i32_1 = arith.constant 0 : i32
    return %c0_i32, %c0_i32_0 : i32, i32
  }
  func.func @transform_2(%arg0: i32) -> (i32, i32) {
    %c0_i32 = arith.constant 0 : i32
    %c0_i32_0 = arith.constant 0 : i32
    %c0_i32_1 = arith.constant 0 : i32
    return %c0_i32, %c0_i32_0 : i32, i32
  }
  func.func @transform_3(%arg0: i32) -> (i32, i32) {
    %c0_i32 = arith.constant 0 : i32
    %c0_i32_0 = arith.constant 0 : i32
    %c0_i32_1 = arith.constant 0 : i32
    return %c0_i32, %c0_i32_0 : i32, i32
  }
  func.func @transform_4(%arg0: i32) -> (i32, i32, i32) {
    %c0_i32 = arith.constant 0 : i32
    %c0_i32_0 = arith.constant 0 : i32
    %c0_i32_1 = arith.constant 0 : i32
    %c0_i32_2 = arith.constant 0 : i32
    return %c0_i32, %c0_i32_0, %c0_i32_1 : i32, i32, i32
  }
  func.func @transform_5(%arg0: i32) -> (i32, i32) {
    %c0_i32 = arith.constant 0 : i32
    %c0_i32_0 = arith.constant 0 : i32
    %c0_i32_1 = arith.constant 0 : i32
    return %c0_i32, %c0_i32_0 : i32, i32
  }
  func.func @transform_6(%arg0: i32) -> (i32, i32) {
    %c0_i32 = arith.constant 0 : i32
    %c0_i32_0 = arith.constant 0 : i32
    %c0_i32_1 = arith.constant 0 : i32
    return %c0_i32, %c0_i32_0 : i32, i32
  }
  func.func @transform_7(%arg0: i32) -> (i32, i32, i32, i32) {
    %c0_i32 = arith.constant 0 : i32
    %c0_i32_0 = arith.constant 0 : i32
    %c0_i32_1 = arith.constant 0 : i32
    %c0_i32_2 = arith.constant 0 : i32
    return %arg0, %c0_i32, %c0_i32_0, %c0_i32_1 : i32, i32, i32, i32
  }
}

</mosaic_0001>

<llo_original>
// kernel: sppf_forward.1
$region0: #{sppf_forward.1}
  #allocation0 [shape = 'u32[]', space=smem, size = 0x4, offset = 0x4, fixed_abs, tag = 'smem constant byte address 0x4 - core index']
  #allocation1 [shape = 'u32[144,128]{1,0:T(1,128)}', space=vmem, size = 0x12000, scoped, tag = 'internal scratch']
  #allocation2 [shape = 'f32[20,16,2]{2,1,0:T(8,128)}', space=vmem, size = 0x28000, scoped, tag = 'scratch operand']
  #allocation3 [shape = 'f32[16,32,2]{2,1,0:T(8,128)}', space=vmem, size = 0x40000, scoped, tag = 'scratch operand']
  %s0 = inlined_call_operand.vmem [shape: f32[2,16,16,4], index: 0, kind: input, shape index: {}]
  %s1 = inlined_call_operand.vmem [shape: bf16[4,2], index: 1, kind: input, shape index: {}]
  %s2 = inlined_call_operand.vmem [shape: f32[1,2], index: 2, kind: input, shape index: {}]
  %s3 = inlined_call_operand.vmem [shape: f32[1,2], index: 3, kind: input, shape index: {}]
  %s4 = inlined_call_operand.vmem [shape: bf16[4,2,4], index: 4, kind: input, shape index: {}]
  %s5 = inlined_call_operand.vmem [shape: f32[1,4], index: 5, kind: input, shape index: {}]
  %s6 = inlined_call_operand.vmem [shape: f32[1,4], index: 6, kind: input, shape index: {}]
  %s7 = inlined_call_operand.vmem [shape: f32[2,16,16,4], index: 7, kind: output, shape index: {}]
  %s8 = sld [smem:[#allocation0]]
  $region61: #{sppf_forward.1} parent=0
    _
  %s10 = ssub.s32 1, %s8
  %s11 = scalar_select 0, %s10, %s8
  loop: start=0, step=1, limit=4
  $region2: #{sppf_forward.1} parent=0 // loop_pre_header
    _
  $region3: #{sppf_forward.1} parent=0 // loop_header
    %s13 = sphi 0, %s17
    %p14 = scmp.ge.s32.totalorder %s13, 4
    %s23 = sphi 0, %s25
    %s26 = sphi 0, %s23
    %s27 = sphi 0, %s26
    %s43 = sphi 0, %s27
    %s47 = sphi 0, %s47
    %s49 = sphi 0, %s47
    %s50 = sphi 0, %s49
    %s64 = sphi 0, %s50
    %s68 = sphi 0, %s68
    %s70 = sphi 0, %s68
    %s71 = sphi 0, %s70
    %s85 = sphi 0, %s71
    %s89 = sphi 0, %s89
    %s91 = sphi 0, %s89
    %s92 = sphi 0, %s91
    %s106 = sphi 0, %s92
    %s110 = sphi 0, %s110
    %s112 = sphi 0, %s110
    %s113 = sphi 0, %s112
    %s127 = sphi 0, %s113
    %s131 = sphi 0, %s131
    %s133 = sphi 0, %s131
    %s134 = sphi 0, %s133
    %s148 = sphi 0, %s134
    %s152 = sphi 0, %s152
    %s154 = sphi 0, %s152
    %s155 = sphi 0, %s154
    %s169 = sphi 0, %s155
    %s175 = sphi 0, %s177
    %s178 = sphi 0, %s175
    %s179 = sphi 0, %s178
    %s195 = sphi 0, %s179
  $region4: #{sppf_forward.1} parent=0 // loop_header_branch
    %16 = sbr.rel (%p14) target = $region8
  $region5: #{sppf_forward.1} parent=0 // loop_body
    %s18 = ssub.s32 %s13, 1
    %s19 = ssub.s32 %s13, 2
    %s20 = sadd.s32 %s13, 1
    %s21 = ssub.s32 %s13, %s20
    %p22 = scmp.eq.s32.totalorder %s21, 0
    %s24 = sadd.s32 %s23, 1
    %s25 = scalar_select %p22, %s23, %s24
    %p28 = pneg %p22
    %p29 = scmp.eq.s32.totalorder %s13, 1
    %p30 = por %p28, %p29
    %p31 = scmp.ne.s32.totalorder %s23, %s26
    %p32 = scmp.eq.s32.totalorder %s13, 0
    %p33 = por %p31, %p32
    %p34 = scmp.ne.s32.totalorder %s23, %s26
    %p35 = scmp.eq.s32.totalorder %s18, 1
    %p36 = por %p34, %p35
    %p37 = scmp.ne.s32.totalorder %s26, %s27
    %p38 = scmp.eq.s32.totalorder %s18, 0
    %p39 = por %p37, %p38
    %p40 = scmp.ne.s32.totalorder %s26, %s27
    %p41 = scmp.eq.s32.totalorder %s19, 1
    %p42 = por %p40, %p41
    %p44 = scmp.ne.s32.totalorder %s27, %s43
    %p45 = scmp.eq.s32.totalorder %s19, 0
    %p46 = por %p44, %p45
    %s48 = sadd.s32 %s47, 1
    %p51 = scmp.eq.s32.totalorder %s13, 1
    %p52 = scmp.ne.s32.totalorder %s47, %s49
    %p53 = scmp.eq.s32.totalorder %s13, 0
    %p54 = por %p52, %p53
    %p55 = scmp.ne.s32.totalorder %s47, %s49
    %p56 = scmp.eq.s32.totalorder %s18, 1
    %p57 = por %p55, %p56
    %p58 = scmp.ne.s32.totalorder %s49, %s50
    %p59 = scmp.eq.s32.totalorder %s18, 0
    %p60 = por %p58, %p59
    %p61 = scmp.ne.s32.totalorder %s49, %s50
    %p62 = scmp.eq.s32.totalorder %s19, 1
    %p63 = por %p61, %p62
    %p65 = scmp.ne.s32.totalorder %s50, %s64
    %p66 = scmp.eq.s32.totalorder %s19, 0
    %p67 = por %p65, %p66
    %s69 = sadd.s32 %s68, 1
    %p72 = scmp.eq.s32.totalorder %s13, 1
    %p73 = scmp.ne.s32.totalorder %s68, %s70
    %p74 = scmp.eq.s32.totalorder %s13, 0
    %p75 = por %p73, %p74
    %p76 = scmp.ne.s32.totalorder %s68, %s70
    %p77 = scmp.eq.s32.totalorder %s18, 1
    %p78 = por %p76, %p77
    %p79 = scmp.ne.s32.totalorder %s70, %s71
    %p80 = scmp.eq.s32.totalorder %s18, 0
    %p81 = por %p79, %p80
    %p82 = scmp.ne.s32.totalorder %s70, %s71
    %p83 = scmp.eq.s32.totalorder %s19, 1
    %p84 = por %p82, %p83
    %p86 = scmp.ne.s32.totalorder %s71, %s85
    %p87 = scmp.eq.s32.totalorder %s19, 0
    %p88 = por %p86, %p87
    %s90 = sadd.s32 %s89, 1
    %p93 = scmp.eq.s32.totalorder %s13, 1
    %p94 = scmp.ne.s32.totalorder %s89, %s91
    %p95 = scmp.eq.s32.totalorder %s13, 0
    %p96 = por %p94, %p95
    %p97 = scmp.ne.s32.totalorder %s89, %s91
    %p98 = scmp.eq.s32.totalorder %s18, 1
    %p99 = por %p97, %p98
    %p100 = scmp.ne.s32.totalorder %s91, %s92
    %p101 = scmp.eq.s32.totalorder %s18, 0
    %p102 = por %p100, %p101
    %p103 = scmp.ne.s32.totalorder %s91, %s92
    %p104 = scmp.eq.s32.totalorder %s19, 1
    %p105 = por %p103, %p104
    %p107 = scmp.ne.s32.totalorder %s92, %s106
    %p108 = scmp.eq.s32.totalorder %s19, 0
    %p109 = por %p107, %p108
    %s111 = sadd.s32 %s110, 1
    %p114 = scmp.eq.s32.totalorder %s13, 1
    %p115 = scmp.ne.s32.totalorder %s110, %s112
    %p116 = scmp.eq.s32.totalorder %s13, 0
    %p117 = por %p115, %p116
    %p118 = scmp.ne.s32.totalorder %s110, %s112
    %p119 = scmp.eq.s32.totalorder %s18, 1
    %p120 = por %p118, %p119
    %p121 = scmp.ne.s32.totalorder %s112, %s113
    %p122 = scmp.eq.s32.totalorder %s18, 0
    %p123 = por %p121, %p122
    %p124 = scmp.ne.s32.totalorder %s112, %s113
    %p125 = scmp.eq.s32.totalorder %s19, 1
    %p126 = por %p124, %p125
    %p128 = scmp.ne.s32.totalorder %s113, %s127
    %p129 = scmp.eq.s32.totalorder %s19, 0
    %p130 = por %p128, %p129
    %s132 = sadd.s32 %s131, 1
    %p135 = scmp.eq.s32.totalorder %s13, 1
    %p136 = scmp.ne.s32.totalorder %s131, %s133
    %p137 = scmp.eq.s32.totalorder %s13, 0
    %p138 = por %p136, %p137
    %p139 = scmp.ne.s32.totalorder %s131, %s133
    %p140 = scmp.eq.s32.totalorder %s18, 1
    %p141 = por %p139, %p140
    %p142 = scmp.ne.s32.totalorder %s133, %s134
    %p143 = scmp.eq.s32.totalorder %s18, 0
    %p144 = por %p142, %p143
    %p145 = scmp.ne.s32.totalorder %s133, %s134
    %p146 = scmp.eq.s32.totalorder %s19, 1
    %p147 = por %p145, %p146
    %p149 = scmp.ne.s32.totalorder %s134, %s148
    %p150 = scmp.eq.s32.totalorder %s19, 0
    %p151 = por %p149, %p150
    %s153 = sadd.s32 %s152, 1
    %p156 = scmp.eq.s32.totalorder %s13, 1
    %p157 = scmp.ne.s32.totalorder %s152, %s154
    %p158 = scmp.eq.s32.totalorder %s13, 0
    %p159 = por %p157, %p158
    %p160 = scmp.ne.s32.totalorder %s152, %s154
    %p161 = scmp.eq.s32.totalorder %s18, 1
    %p162 = por %p160, %p161
    %p163 = scmp.ne.s32.totalorder %s154, %s155
    %p164 = scmp.eq.s32.totalorder %s18, 0
    %p165 = por %p163, %p164
    %p166 = scmp.ne.s32.totalorder %s154, %s155
    %p167 = scmp.eq.s32.totalorder %s19, 1
    %p168 = por %p166, %p167
    %p170 = scmp.ne.s32.totalorder %s155, %s169
    %p171 = scmp.eq.s32.totalorder %s19, 0
    %p172 = por %p170, %p171
    %s173 = ssub.s32 %s13, %s20
    %p174 = scmp.eq.s32.totalorder %s173, 0
    %s176 = sadd.s32 %s175, 1
    %s177 = scalar_select %p174, %s175, %s176
    %p180 = pneg %p174
    %p181 = scmp.eq.s32.totalorder %s13, 1
    %p182 = por %p180, %p181
    %p183 = scmp.ne.s32.totalorder %s175, %s178
    %p184 = scmp.eq.s32.totalorder %s13, 0
    %p185 = por %p183, %p184
    %p186 = scmp.ne.s32.totalorder %s175, %s178
    %p187 = scmp.eq.s32.totalorder %s18, 1
    %p188 = por %p186, %p187
    %p189 = scmp.ne.s32.totalorder %s178, %s179
    %p190 = scmp.eq.s32.totalorder %s18, 0
    %p191 = por %p189, %p190
    %p192 = scmp.ne.s32.totalorder %s178, %s179
    %p193 = scmp.eq.s32.totalorder %s19, 1
    %p194 = por %p192, %p193
    %p196 = scmp.ne.s32.totalorder %s179, %s195
    %p197 = scmp.eq.s32.totalorder %s19, 0
    %p198 = por %p196, %p197
    %p199 = scmp.le.s32.totalorder 1, %s13
    %p200 = scmp.lt.s32.totalorder %s13, 3
    %p201 = pnand %p199, %p200
    %p202 = pneg %p201
    // Predicated region
    $region9: #{sppf_forward.1} parent=5 // pred_check
      _
    $region10: #{sppf_forward.1} parent=5 // pred_check_branch
      %204 = sbr.rel (%p201) target = $region12
    $region11: #{sppf_forward.1} parent=5 // pred_region
      %s205 = ssub.s32 %s13, 1
      // Predicated region
      $region13: #{sppf_forward.1} parent=11 // pred_check
        %p206 = pneg %p60
      $region14: #{sppf_forward.1} parent=11 // pred_check_branch
        %208 = sbr.rel (%p206) target = $region16
      $region15: #{sppf_forward.1} parent=11 // pred_region
        _
      $region16: #{sppf_forward.1} parent=11 // pred_fallthru
        _
      // Predicated region
      $region17: #{sppf_forward.1} parent=11 // pred_check
        %p209 = pneg %p81
      $region18: #{sppf_forward.1} parent=11 // pred_check_branch
        %211 = sbr.rel (%p209) target = $region20
      $region19: #{sppf_forward.1} parent=11 // pred_region
        _
      $region20: #{sppf_forward.1} parent=11 // pred_fallthru
        _
      // Predicated region
      $region21: #{sppf_forward.1} parent=11 // pred_check
        %p212 = pneg %p102
      $region22: #{sppf_forward.1} parent=11 // pred_check_branch
        %214 = sbr.rel (%p212) target = $region24
      $region23: #{sppf_forward.1} parent=11 // pred_region
        _
      $region24: #{sppf_forward.1} parent=11 // pred_fallthru
        _
      // Predicated region
      $region25: #{sppf_forward.1} parent=11 // pred_check
        %p215 = pneg %p123
      $region26: #{sppf_forward.1} parent=11 // pred_check_branch
        %217 = sbr.rel (%p215) target = $region28
      $region27: #{sppf_forward.1} parent=11 // pred_region
        _
      $region28: #{sppf_forward.1} parent=11 // pred_fallthru
        _
      // Predicated region
      $region29: #{sppf_forward.1} parent=11 // pred_check
        %p218 = pneg %p144
      $region30: #{sppf_forward.1} parent=11 // pred_check_branch
        %220 = sbr.rel (%p218) target = $region32
      $region31: #{sppf_forward.1} parent=11 // pred_region
        _
      $region32: #{sppf_forward.1} parent=11 // pred_fallthru
        _
      // Predicated region
      $region33: #{sppf_forward.1} parent=11 // pred_check
        %p221 = pneg %p165
      $region34: #{sppf_forward.1} parent=11 // pred_check_branch
        %223 = sbr.rel (%p221) target = $region36
      $region35: #{sppf_forward.1} parent=11 // pred_region
        _
      $region36: #{sppf_forward.1} parent=11 // pred_fallthru
        _
    $region12: #{sppf_forward.1} parent=5 // pred_fallthru
      _
    %p224 = scmp.lt.s32.totalorder %s13, 2
    // Predicated region
    $region37: #{sppf_forward.1} parent=5 // pred_check
      %p225 = pneg %p224
    $region38: #{sppf_forward.1} parent=5 // pred_check_branch
      %227 = sbr.rel (%p225) target = $region40
    $region39: #{sppf_forward.1} parent=5 // pred_region
      // Predicated region
      $region41: #{sppf_forward.1} parent=39 // pred_check
        %p228 = pneg %p33
      $region42: #{sppf_forward.1} parent=39 // pred_check_branch
        %230 = sbr.rel (%p228) target = $region44
      $region43: #{sppf_forward.1} parent=39 // pred_region
        %p231 = scmp.lt.s32.totalorder %s13, 1
        %s232 = scalar_select %p231, %s13, 1
        %s233 = smul.addr %s232, 32
        %s234 = smul.addr %s233, 8
        %s235 = scalar_lea.vmem %s0, %s234
      $region44: #{sppf_forward.1} parent=39 // pred_fallthru
        _
    $region40: #{sppf_forward.1} parent=5 // pred_fallthru
      _
    %p236 = scmp.le.s32.totalorder 1, %s13
    %p237 = scmp.lt.s32.totalorder %s13, 3
    %p238 = pnand %p236, %p237
    %p239 = pneg %p238
    // Predicated region
    $region45: #{sppf_forward.1} parent=5 // pred_check
      _
    $region46: #{sppf_forward.1} parent=5 // pred_check_branch
      %241 = sbr.rel (%p238) target = $region48
    $region47: #{sppf_forward.1} parent=5 // pred_region
      %s242 = ssub.s32 %s13, 1
      %p243 = scmp.lt.s32.totalorder %s18, 1
      %s244 = scalar_select %p243, %s18, 1
      %s245 = smul.addr %s244, 32
      %s246 = smul.addr %s245, 8
      %s247 = scalar_lea.vmem %s0, %s246
      %p248 = pneg %p39
      %p249 = pneg %p36
      %p250 = pneg %p60
      %p251 = pneg %p57
      %p252 = pneg %p81
      %p253 = pneg %p78
      %p254 = pneg %p102
      %p255 = pneg %p99
      %p256 = pneg %p123
      %p257 = pneg %p120
      %p258 = pneg %p144
      %p259 = pneg %p141
      %p260 = pneg %p165
      %p261 = pneg %p162
      %p262 = pneg %p191
      %p263 = pneg %p188
      %p264 = scmp.lt.s32.totalorder %s18, 1
      %s265 = scalar_select %p264, %s18, 1
      %s266 = smul.addr %s265, 32
      %s267 = smul.addr %s266, 8
      %s268 = scalar_lea.vmem %s7, %s267
      %p269 = scmp.lt.s32.totalorder %s18, 1
      %s270 = scalar_select %p269, %s18, 1
      %s271 = smul.addr %s270, 32
      %s272 = smul.addr %s271, 8
      %s273 = scalar_lea.vmem %s0, %s272
      %p274 = scmp.lt.s32.totalorder %s18, 1
      %s275 = scalar_select %p274, %s18, 1
      %s276 = smul.addr %s275, 32
      %s277 = smul.addr %s276, 8
      %s278 = scalar_lea.vmem %s7, %s277
      %vm280 = vcmask 15360
      %281 = vst.msk [vmem:[#allocation2] sm:$0xff] %vm280, -inf
      %282 = vst.msk [vmem:[#allocation2 + $0x8] sm:$0xff] %vm280, -inf
      %283 = vst.msk [vmem:[#allocation2 + $0x10] sm:$0xff] %vm280, -inf
      %284 = vst.msk [vmem:[#allocation2 + $0x18] sm:$0xff] %vm280, -inf
      %s285 = scalar_lea.vmem [#allocation2], 288
      %286 = vst.msk [vmem:[%s285] sm:$0xff] %vm280, -inf
      %287 = vst.msk [vmem:[%s285 + $0x8] sm:$0xff] %vm280, -inf
      %288 = vst.msk [vmem:[%s285 + $0x10] sm:$0xff] %vm280, -inf
      %289 = vst.msk [vmem:[%s285 + $0x18] sm:$0xff] %vm280, -inf
      %vm290 = vcmask 9216
      %291 = vst.msk [vmem:[#allocation3 + $0x6] sm:$0x3] %vm290, -inf
      %292 = vst.msk [vmem:[#allocation3 + $0x26] sm:$0x3] %vm290, -inf
      %293 = vst.msk [vmem:[#allocation3 + $0x46] sm:$0x3] %vm290, -inf
      %294 = vst.msk [vmem:[#allocation3 + $0x66] sm:$0x3] %vm290, -inf
      %295 = vst.msk [vmem:[#allocation3 + $0x86] sm:$0x3] %vm290, -inf
      %296 = vst.msk [vmem:[#allocation3 + $0xa6] sm:$0x3] %vm290, -inf
      %297 = vst.msk [vmem:[#allocation3 + $0xc6] sm:$0x3] %vm290, -inf
      %298 = vst.msk [vmem:[#allocation3 + $0xe6] sm:$0x3] %vm290, -inf
      %299 = vst.msk [vmem:[#allocation3 + $0x106] sm:$0x3] %vm290, -inf
      %300 = vst.msk [vmem:[#allocation3 + $0x126] sm:$0x3] %vm290, -inf
      %301 = vst.msk [vmem:[#allocation3 + $0x146] sm:$0x3] %vm290, -inf
      %302 = vst.msk [vmem:[#allocation3 + $0x166] sm:$0x3] %vm290, -inf
      %303 = vst.msk [vmem:[#allocation3 + $0x186] sm:$0x3] %vm290, -inf
      %304 = vst.msk [vmem:[#allocation3 + $0x1a6] sm:$0x3] %vm290, -inf
      %305 = vst.msk [vmem:[#allocation3 + $0x1c6] sm:$0x3] %vm290, -inf
      %306 = vst.msk [vmem:[#allocation3 + $0x1e6] sm:$0x3] %vm290, -inf
      %307 = vst.msk [vmem:[#allocation3 + $0x18] sm:$0x3] %vm290, -inf
      %308 = vst.msk [vmem:[#allocation3 + $0x38] sm:$0x3] %vm290, -inf
      %309 = vst.msk [vmem:[#allocation3 + $0x58] sm:$0x3] %vm290, -inf
      %310 = vst.msk [vmem:[#allocation3 + $0x78] sm:$0x3] %vm290, -inf
      %311 = vst.msk [vmem:[#allocation3 + $0x98] sm:$0x3] %vm290, -inf
      %312 = vst.msk [vmem:[#allocation3 + $0xb8] sm:$0x3] %vm290, -inf
      %313 = vst.msk [vmem:[#allocation3 + $0xd8] sm:$0x3] %vm290, -inf
      %314 = vst.msk [vmem:[#allocation3 + $0xf8] sm:$0x3] %vm290, -inf
      %315 = vst.msk [vmem:[#allocation3 + $0x118] sm:$0x3] %vm290, -inf
      %316 = vst.msk [vmem:[#allocation3 + $0x138] sm:$0x3] %vm290, -inf
      %317 = vst.msk [vmem:[#allocation3 + $0x158] sm:$0x3] %vm290, -inf
      %318 = vst.msk [vmem:[#allocation3 + $0x178] sm:$0x3] %vm290, -inf
      %319 = vst.msk [vmem:[#allocation3 + $0x198] sm:$0x3] %vm290, -inf
      %320 = vst.msk [vmem:[#allocation3 + $0x1b8] sm:$0x3] %vm290, -inf
      %321 = vst.msk [vmem:[#allocation3 + $0x1d8] sm:$0x3] %vm290, -inf
      %322 = vst.msk [vmem:[#allocation3 + $0x1f8] sm:$0x3] %vm290, -inf
      %v323 = vld [vmem:[%s273] sm:$0xff]
      %v324 = vld [vmem:[%s273 + $0x8] sm:$0xff]
      %v325 = vld [vmem:[%s273 + $0x10] sm:$0xff]
      %v326 = vld [vmem:[%s273 + $0x18] sm:$0xff]
      %v327 = vld [vmem:[%s273 + $0x20] sm:$0xff]
      %v328 = vld [vmem:[%s273 + $0x28] sm:$0xff]
      %v329 = vld [vmem:[%s273 + $0x30] sm:$0xff]
      %v330 = vld [vmem:[%s273 + $0x38] sm:$0xff]
      %v331 = vld [vmem:[%s273 + $0x40] sm:$0xff]
      %v332 = vld [vmem:[%s273 + $0x48] sm:$0xff]
      %v333 = vld [vmem:[%s273 + $0x50] sm:$0xff]
      %v334 = vld [vmem:[%s273 + $0x58] sm:$0xff]
      %v335 = vld [vmem:[%s273 + $0x60] sm:$0xff]
      %v336 = vld [vmem:[%s273 + $0x68] sm:$0xff]
      %v337 = vld [vmem:[%s273 + $0x70] sm:$0xff]
      %v338 = vld [vmem:[%s273 + $0x78] sm:$0xff]
      %v339 = vld [vmem:[%s273 + $0x80] sm:$0xff]
      %v340 = vld [vmem:[%s273 + $0x88] sm:$0xff]
      %v341 = vld [vmem:[%s273 + $0x90] sm:$0xff]
      %v342 = vld [vmem:[%s273 + $0x98] sm:$0xff]
      %v343 = vld [vmem:[%s273 + $0xa0] sm:$0xff]
      %v344 = vld [vmem:[%s273 + $0xa8] sm:$0xff]
      %v345 = vld [vmem:[%s273 + $0xb0] sm:$0xff]
      %v346 = vld [vmem:[%s273 + $0xb8] sm:$0xff]
      %v347 = vld [vmem:[%s273 + $0xc0] sm:$0xff]
      %v348 = vld [vmem:[%s273 + $0xc8] sm:$0xff]
      %v349 = vld [vmem:[%s273 + $0xd0] sm:$0xff]
      %v350 = vld [vmem:[%s273 + $0xd8] sm:$0xff]
      %v351 = vld [vmem:[%s273 + $0xe0] sm:$0xff]
      %v352 = vld [vmem:[%s273 + $0xe8] sm:$0xff]
      %v353 = vld [vmem:[%s273 + $0xf0] sm:$0xff]
      %v354 = vld [vmem:[%s273 + $0xf8] sm:$0xff]
      %v355 = vpack.c.bf16 %v324, %v323
      %v356 = vpack.c.bf16 %v326, %v325
      %v357 = vpack.c.bf16 %v328, %v327
      %v358 = vpack.c.bf16 %v330, %v329
      %v359 = vpack.c.bf16 %v332, %v331
      %v360 = vpack.c.bf16 %v334, %v333
      %v361 = vpack.c.bf16 %v336, %v335
      %v362 = vpack.c.bf16 %v338, %v337
      %v363 = vpack.c.bf16 %v340, %v339
      %v364 = vpack.c.bf16 %v342, %v341
      %v365 = vpack.c.bf16 %v344, %v343
      %v366 = vpack.c.bf16 %v346, %v345
      %v367 = vpack.c.bf16 %v348, %v347
      %v368 = vpack.c.bf16 %v350, %v349
      %v369 = vpack.c.bf16 %v352, %v351
      %v370 = vpack.c.bf16 %v354, %v353
      %v371 = vld [vmem:[%s1] sm:$0x3]
      %vm372 = vcmask 31744
      %v374 = vsel %vm372, %v355, 0
      %v377 = vsel %vm372, %v356, 0
      %v380 = vsel %vm372, %v357, 0
      %v383 = vsel %vm372, %v358, 0
      %v386 = vsel %vm372, %v359, 0
      %v389 = vsel %vm372, %v360, 0
      %v392 = vsel %vm372, %v361, 0
      %v395 = vsel %vm372, %v362, 0
      %v398 = vsel %vm372, %v363, 0
      %v401 = vsel %vm372, %v364, 0
      %v404 = vsel %vm372, %v365, 0
      %v407 = vsel %vm372, %v366, 0
      %v410 = vsel %vm372, %v367, 0
      %v413 = vsel %vm372, %v368, 0
      %v416 = vsel %vm372, %v369, 0
      %v419 = vsel %vm372, %v370, 0
      %vm421 = vcmask 1041408
      %v423 = vsel %vm421, %v371, 0
      %425 = vmatprep.subr.bf16.mxu0 0
      %426 = vmatpush1.bf16.msra.mxu0 %v423
      %427 = vmatprep.subr.bf16.mxu0 0
      %428 = vmatpush1.bf16.msra.mxu0 0
      %429 = vmatprep.subr.bf16.mxu0 0
      %430 = vmatpush1.bf16.msra.mxu0 0
      %431 = vmatprep.subr.bf16.mxu0 0
      %432 = vmatpush1.bf16.msra.mxu0 0
      %433 = vmatprep.subr.bf16.mxu0 0
      %434 = vmatpush1.bf16.msra.mxu0 0
      %435 = vmatprep.subr.bf16.mxu0 0
      %436 = vmatpush1.bf16.msra.mxu0 0
      %437 = vmatprep.subr.bf16.mxu0 0
      %438 = vmatpush1.bf16.msra.mxu0 0
      %439 = vmatprep.subr.bf16.mxu0 0
      %440 = vmatpush1.bf16.msra.mxu0 0
      %441 = vmatprep.subr.bf16.mxu0 0
      %442 = vmatpush1.bf16.msra.mxu0 0
      %443 = vmatprep.subr.bf16.mxu0 0
      %444 = vmatpush1.bf16.msra.mxu0 0
      %445 = vmatprep.subr.bf16.mxu0 0
      %446 = vmatpush1.bf16.msra.mxu0 0
      %447 = vmatprep.subr.bf16.mxu0 0
      %448 = vmatpush1.bf16.msra.mxu0 0
      %449 = vmatprep.subr.bf16.mxu0 0
      %450 = vmatpush1.bf16.msra.mxu0 0
      %451 = vmatprep.subr.bf16.mxu0 0
      %452 = vmatpush1.bf16.msra.mxu0 0
      %453 = vmatprep.subr.bf16.mxu0 0
      %454 = vmatpush1.bf16.msra.mxu0 0
      %455 = vmatprep.subr.bf16.mxu0 0
      %456 = vmatpush1.bf16.msra.mxu0 0
      %457 = vmatprep.mubr.bf16.mxu0 0
      %458 = vmatmul.mubr.bf16.gmra.mrb[0].mxu0 %v374
      %v459 = vpop.f32.mrb[0].mxu0
      %v460 = vadd.f32 0.0, %v459
      %v461 = vpop.f32.mrb[0].mxu0
      %v462 = vpop.f32.mrb[0].mxu0
      %v463 = vadd.f32 0.0, %v462
      %v464 = vpop.f32.mrb[0].mxu0
      %465 = vmatprep.mubr.bf16.mxu0 0
      %466 = vmatmul.mubr.bf16.gmra.mrb[0].mxu0 %v377
      %v467 = vpop.f32.mrb[0].mxu0
      %v468 = vadd.f32 0.0, %v467
      %v469 = vpop.f32.mrb[0].mxu0
      %v470 = vpop.f32.mrb[0].mxu0
      %v471 = vadd.f32 0.0, %v470
      %v472 = vpop.f32.mrb[0].mxu0
      %473 = vmatprep.mubr.bf16.mxu0 0
      %474 = vmatmul.mubr.bf16.gmra.mrb[0].mxu0 %v380
      %v475 = vpop.f32.mrb[0].mxu0
      %v476 = vadd.f32 0.0, %v475
      %v477 = vpop.f32.mrb[0].mxu0
      %v478 = vpop.f32.mrb[0].mxu0
      %v479 = vadd.f32 0.0, %v478
      %v480 = vpop.f32.mrb[0].mxu0
      %481 = vmatprep.mubr.bf16.mxu0 0
      %482 = vmatmul.mubr.bf16.gmra.mrb[0].mxu0 %v383
      %v483 = vpop.f32.mrb[0].mxu0
      %v484 = vadd.f32 0.0, %v483
      %v485 = vpop.f32.mrb[0].mxu0
      %v486 = vpop.f32.mrb[0].mxu0
      %v487 = vadd.f32 0.0, %v486
      %v488 = vpop.f32.mrb[0].mxu0
      %489 = vmatprep.mubr.bf16.mxu0 0
      %490 = vmatmul.mubr.bf16.gmra.mrb[0].mxu0 %v386
      %v491 = vpop.f32.mrb[0].mxu0
      %v492 = vadd.f32 0.0, %v491
      %v493 = vpop.f32.mrb[0].mxu0
      %v494 = vpop.f32.mrb[0].mxu0
      %v495 = vadd.f32 0.0, %v494
      %v496 = vpop.f32.mrb[0].mxu0
      %497 = vmatprep.mubr.bf16.mxu0 0
      %498 = vmatmul.mubr.bf16.gmra.mrb[0].mxu0 %v389
      %v499 = vpop.f32.mrb[0].mxu0
      %v500 = vadd.f32 0.0, %v499
      %v501 = vpop.f32.mrb[0].mxu0
      %v502 = vpop.f32.mrb[0].mxu0
      %v503 = vadd.f32 0.0, %v502
      %v504 = vpop.f32.mrb[0].mxu0
      %505 = vmatprep.mubr.bf16.mxu0 0
      %506 = vmatmul.mubr.bf16.gmra.mrb[0].mxu0 %v392
      %v507 = vpop.f32.mrb[0].mxu0
      %v508 = vadd.f32 0.0, %v507
      %v509 = vpop.f32.mrb[0].mxu0
      %v510 = vpop.f32.mrb[0].mxu0
      %v511 = vadd.f32 0.0, %v510
      %v512 = vpop.f32.mrb[0].mxu0
      %513 = vmatprep.mubr.bf16.mxu0 0
      %514 = vmatmul.mubr.bf16.gmra.mrb[0].mxu0 %v395
      %v515 = vpop.f32.mrb[0].mxu0
      %v516 = vadd.f32 0.0, %v515
      %v517 = vpop.f32.mrb[0].mxu0
      %v518 = vpop.f32.mrb[0].mxu0
      %v519 = vadd.f32 0.0, %v518
      %v520 = vpop.f32.mrb[0].mxu0
      %521 = vmatprep.mubr.bf16.mxu0 0
      %522 = vmatmul.mubr.bf16.gmra.mrb[0].mxu0 %v398
      %v523 = vpop.f32.mrb[0].mxu0
      %v524 = vadd.f32 0.0, %v523
      %v525 = vpop.f32.mrb[0].mxu0
      %v526 = vpop.f32.mrb[0].mxu0
      %v527 = vadd.f32 0.0, %v526
      %v528 = vpop.f32.mrb[0].mxu0
      %529 = vmatprep.mubr.bf16.mxu0 0
      %530 = vmatmul.mubr.bf16.gmra.mrb[0].mxu0 %v401
      %v531 = vpop.f32.mrb[0].mxu0
      %v532 = vadd.f32 0.0, %v531
      %v533 = vpop.f32.mrb[0].mxu0
      %v534 = vpop.f32.mrb[0].mxu0
      %v535 = vadd.f32 0.0, %v534
      %v536 = vpop.f32.mrb[0].mxu0
      %537 = vmatprep.mubr.bf16.mxu0 0
      %538 = vmatmul.mubr.bf16.gmra.mrb[0].mxu0 %v404
      %v539 = vpop.f32.mrb[0].mxu0
      %v540 = vadd.f32 0.0, %v539
      %v541 = vpop.f32.mrb[0].mxu0
      %v542 = vpop.f32.mrb[0].mxu0
      %v543 = vadd.f32 0.0, %v542
      %v544 = vpop.f32.mrb[0].mxu0
      %545 = vmatprep.mubr.bf16.mxu0 0
      %546 = vmatmul.mubr.bf16.gmra.mrb[0].mxu0 %v407
      %v547 = vpop.f32.mrb[0].mxu0
      %v548 = vadd.f32 0.0, %v547
      %v549 = vpop.f32.mrb[0].mxu0
      %v550 = vpop.f32.mrb[0].mxu0
      %v551 = vadd.f32 0.0, %v550
      %v552 = vpop.f32.mrb[0].mxu0
      %553 = vmatprep.mubr.bf16.mxu0 0
      %554 = vmatmul.mubr.bf16.gmra.mrb[0].mxu0 %v410
      %v555 = vpop.f32.mrb[0].mxu0
      %v556 = vadd.f32 0.0, %v555
      %v557 = vpop.f32.mrb[0].mxu0
      %v558 = vpop.f32.mrb[0].mxu0
      %v559 = vadd.f32 0.0, %v558
      %v560 = vpop.f32.mrb[0].mxu0
      %561 = vmatprep.mubr.bf16.mxu0 0
      %562 = vmatmul.mubr.bf16.gmra.mrb[0].mxu0 %v413
      %v563 = vpop.f32.mrb[0].mxu0
      %v564 = vadd.f32 0.0, %v563
      %v565 = vpop.f32.mrb[0].mxu0
      %v566 = vpop.f32.mrb[0].mxu0
      %v567 = vadd.f32 0.0, %v566
      %v568 = vpop.f32.mrb[0].mxu0
      %569 = vmatprep.mubr.bf16.mxu0 0
      %570 = vmatmul.mubr.bf16.gmra.mrb[0].mxu0 %v416
      %v571 = vpop.f32.mrb[0].mxu0
      %v572 = vadd.f32 0.0, %v571
      %v573 = vpop.f32.mrb[0].mxu0
      %v574 = vpop.f32.mrb[0].mxu0
      %v575 = vadd.f32 0.0, %v574
      %v576 = vpop.f32.mrb[0].mxu0
      %577 = vmatprep.mubr.bf16.mxu0 0
      %578 = vmatmul.mubr.bf16.gmra.mrb[0].mxu0 %v419
      %v579 = vpop.f32.mrb[0].mxu0
      %v580 = vadd.f32 0.0, %v579
      %v581 = vpop.f32.mrb[0].mxu0
      %v582 = vpop.f32.mrb[0].mxu0
      %v583 = vadd.f32 0.0, %v582
      %v584 = vpop.f32.mrb[0].mxu0
      %585 = vdwg.mxu0
      %v586 = vld [vmem:[%s2] sm:$0x1]
      %v588 = vlaneseq
      %v589 = vshrl.u32 %v588, 7
      %v590 = vsub.s32 0, %v589
      %v591 = vrot.slane %v586, %v590
      %v593 = vmul.f32 %v460, %v591
      %v594 = vmul.f32 %v463, %v591
      %v595 = vmul.f32 %v468, %v591
      %v596 = vmul.f32 %v471, %v591
      %v597 = vmul.f32 %v476, %v591
      %v598 = vmul.f32 %v479, %v591
      %v599 = vmul.f32 %v484, %v591
      %v600 = vmul.f32 %v487, %v591
      %v601 = vmul.f32 %v492, %v591
      %v602 = vmul.f32 %v495, %v591
      %v603 = vmul.f32 %v500, %v591
      %v604 = vmul.f32 %v503, %v591
      %v605 = vmul.f32 %v508, %v591
      %v606 = vmul.f32 %v511, %v591
      %v607 = vmul.f32 %v516, %v591
      %v608 = vmul.f32 %v519, %v591
      %v609 = vmul.f32 %v524, %v591
      %v610 = vmul.f32 %v527, %v591
      %v611 = vmul.f32 %v532, %v591
      %v612 = vmul.f32 %v535, %v591
      %v613 = vmul.f32 %v540, %v591
      %v614 = vmul.f32 %v543, %v591
      %v615 = vmul.f32 %v548, %v591
      %v616 = vmul.f32 %v551, %v591
      %v617 = vmul.f32 %v556, %v591
      %v618 = vmul.f32 %v559, %v591
      %v619 = vmul.f32 %v564, %v591
      %v620 = vmul.f32 %v567, %v591
      %v621 = vmul.f32 %v572, %v591
      %v622 = vmul.f32 %v575, %v591
      %v623 = vmul.f32 %v580, %v591
      %v624 = vmul.f32 %v583, %v591
      %v625 = vld [vmem:[%s3] sm:$0x1]
      %v627 = vlaneseq
      %v628 = vshrl.u32 %v627, 7
      %v629 = vsub.s32 0, %v628
      %v630 = vrot.slane %v625, %v629
      %v632 = vadd.f32 %v593, %v630
      %v633 = vadd.f32 %v594, %v630
      %v634 = vadd.f32 %v595, %v630
      %v635 = vadd.f32 %v596, %v630
      %v636 = vadd.f32 %v597, %v630
      %v637 = vadd.f32 %v598, %v630
      %v638 = vadd.f32 %v599, %v630
      %v639 = vadd.f32 %v600, %v630
      %v640 = vadd.f32 %v601, %v630
      %v641 = vadd.f32 %v602, %v630
      %v642 = vadd.f32 %v603, %v630
      %v643 = vadd.f32 %v604, %v630
      %v644 = vadd.f32 %v605, %v630
      %v645 = vadd.f32 %v606, %v630
      %v646 = vadd.f32 %v607, %v630
      %v647 = vadd.f32 %v608, %v630
      %v648 = vadd.f32 %v609, %v630
      %v649 = vadd.f32 %v610, %v630
      %v650 = vadd.f32 %v611, %v630
      %v651 = vadd.f32 %v612, %v630
      %v652 = vadd.f32 %v613, %v630
      %v653 = vadd.f32 %v614, %v630
      %v654 = vadd.f32 %v615, %v630
      %v655 = vadd.f32 %v616, %v630
      %v656 = vadd.f32 %v617, %v630
      %v657 = vadd.f32 %v618, %v630
      %v658 = vadd.f32 %v619, %v630
      %v659 = vadd.f32 %v620, %v630
      %v660 = vadd.f32 %v621, %v630
      %v661 = vadd.f32 %v622, %v630
      %v662 = vadd.f32 %v623, %v630
      %v663 = vadd.f32 %v624, %v630
      %v664 = vxor.u32 %v632, 2147483648
      %v665 = vxor.u32 %v633, 2147483648
      %v666 = vxor.u32 %v634, 2147483648
      %v667 = vxor.u32 %v635, 2147483648
      %v668 = vxor.u32 %v636, 2147483648
      %v669 = vxor.u32 %v637, 2147483648
      %v670 = vxor.u32 %v638, 2147483648
      %v671 = vxor.u32 %v639, 2147483648
      %v672 = vxor.u32 %v640, 2147483648
      %v673 = vxor.u32 %v641, 2147483648
      %v674 = vxor.u32 %v642, 2147483648
      %v675 = vxor.u32 %v643, 2147483648
      %v676 = vxor.u32 %v644, 2147483648
      %v677 = vxor.u32 %v645, 2147483648
      %v678 = vxor.u32 %v646, 2147483648
      %v679 = vxor.u32 %v647, 2147483648
      %v680 = vxor.u32 %v648, 2147483648
      %v681 = vxor.u32 %v649, 2147483648
      %v682 = vxor.u32 %v650, 2147483648
      %v683 = vxor.u32 %v651, 2147483648
      %v684 = vxor.u32 %v652, 2147483648
      %v685 = vxor.u32 %v653, 2147483648
      %v686 = vxor.u32 %v654, 2147483648
      %v687 = vxor.u32 %v655, 2147483648
      %v688 = vxor.u32 %v656, 2147483648
      %v689 = vxor.u32 %v657, 2147483648
      %v690 = vxor.u32 %v658, 2147483648
      %v691 = vxor.u32 %v659, 2147483648
      %v692 = vxor.u32 %v660, 2147483648
      %v693 = vxor.u32 %v661, 2147483648
      %v694 = vxor.u32 %v662, 2147483648
      %v695 = vxor.u32 %v663, 2147483648
      %v696 = vmul.f32 %v664, 1.442695
      %v697 = vpow.pop %v696
      %v698 = vmul.f32 %v665, 1.442695
      %v699 = vpow.pop %v698
      %v700 = vmul.f32 %v666, 1.442695
      %v701 = vpow.pop %v700
      %v702 = vmul.f32 %v667, 1.442695
      %v703 = vpow.pop %v702
      %v704 = vmul.f32 %v668, 1.442695
      %v705 = vpow.pop %v704
      %v706 = vmul.f32 %v669, 1.442695
      %v707 = vpow.pop %v706
      %v708 = vmul.f32 %v670, 1.442695
      %v709 = vpow.pop %v708
      %v710 = vmul.f32 %v671, 1.442695
      %v711 = vpow.pop %v710
      %v712 = vmul.f32 %v672, 1.442695
      %v713 = vpow.pop %v712
      %v714 = vmul.f32 %v673, 1.442695
      %v715 = vpow.pop %v714
      %v716 = vmul.f32 %v674, 1.442695
      %v717 = vpow.pop %v716
      %v718 = vmul.f32 %v675, 1.442695
      %v719 = vpow.pop %v718
      %v720 = vmul.f32 %v676, 1.442695
      %v721 = vpow.pop %v720
      %v722 = vmul.f32 %v677, 1.442695
      %v723 = vpow.pop %v722
      %v724 = vmul.f32 %v678, 1.442695
      %v725 = vpow.pop %v724
      %v726 = vmul.f32 %v679, 1.442695
      %v727 = vpow.pop %v726
      %v728 = vmul.f32 %v680, 1.442695
      %v729 = vpow.pop %v728
      %v730 = vmul.f32 %v681, 1.442695
      %v731 = vpow.pop %v730
      %v732 = vmul.f32 %v682, 1.442695
      %v733 = vpow.pop %v732
      %v734 = vmul.f32 %v683, 1.442695
      %v735 = vpow.pop %v734
      %v736 = vmul.f32 %v684, 1.442695
      %v737 = vpow.pop %v736
      %v738 = vmul.f32 %v685, 1.442695
      %v739 = vpow.pop %v738
      %v740 = vmul.f32 %v686, 1.442695
      %v741 = vpow.pop %v740
      %v742 = vmul.f32 %v687, 1.442695
      %v743 = vpow.pop %v742
      %v744 = vmul.f32 %v688, 1.442695
      %v745 = vpow.pop %v744
      %v746 = vmul.f32 %v689, 1.442695
      %v747 = vpow.pop %v746
      %v748 = vmul.f32 %v690, 1.442695
      %v749 = vpow.pop %v748
      %v750 = vmul.f32 %v691, 1.442695
      %v751 = vpow.pop %v750
      %v752 = vmul.f32 %v692, 1.442695
      %v753 = vpow.pop %v752
      %v754 = vmul.f32 %v693, 1.442695
      %v755 = vpow.pop %v754
      %v756 = vmul.f32 %v694, 1.442695
      %v757 = vpow.pop %v756
      %v758 = vmul.f32 %v695, 1.442695
      %v759 = vpow.pop %v758
      %v760 = vadd.f32 %v697, 1.0
      %v761 = vadd.f32 %v699, 1.0
      %v762 = vadd.f32 %v701, 1.0
      %v763 = vadd.f32 %v703, 1.0
      %v764 = vadd.f32 %v705, 1.0
      %v765 = vadd.f32 %v707, 1.0
      %v766 = vadd.f32 %v709, 1.0
      %v767 = vadd.f32 %v711, 1.0
      %v768 = vadd.f32 %v713, 1.0
      %v769 = vadd.f32 %v715, 1.0
      %v770 = vadd.f32 %v717, 1.0
      %v771 = vadd.f32 %v719, 1.0
      %v772 = vadd.f32 %v721, 1.0
      %v773 = vadd.f32 %v723, 1.0
      %v774 = vadd.f32 %v725, 1.0
      %v775 = vadd.f32 %v727, 1.0
      %v776 = vadd.f32 %v729, 1.0
      %v777 = vadd.f32 %v731, 1.0
      %v778 = vadd.f32 %v733, 1.0
      %v779 = vadd.f32 %v735, 1.0
      %v780 = vadd.f32 %v737, 1.0
      %v781 = vadd.f32 %v739, 1.0
      %v782 = vadd.f32 %v741, 1.0
      %v783 = vadd.f32 %v743, 1.0
      %v784 = vadd.f32 %v745, 1.0
      %v785 = vadd.f32 %v747, 1.0
      %v786 = vadd.f32 %v749, 1.0
      %v787 = vadd.f32 %v751, 1.0
      %v788 = vadd.f32 %v753, 1.0
      %v789 = vadd.f32 %v755, 1.0
      %v790 = vadd.f32 %v757, 1.0
      %v791 = vadd.f32 %v759, 1.0
      %v792 = vrcp.pop %v760
      %v793 = vmul.f32 1.0, %v792
      %v794 = vrcp.pop %v761
      %v795 = vmul.f32 1.0, %v794
      %v796 = vrcp.pop %v762
      %v797 = vmul.f32 1.0, %v796
      %v798 = vrcp.pop %v763
      %v799 = vmul.f32 1.0, %v798
      %v800 = vrcp.pop %v764
      %v801 = vmul.f32 1.0, %v800
      %v802 = vrcp.pop %v765
      %v803 = vmul.f32 1.0, %v802
      %v804 = vrcp.pop %v766
      %v805 = vmul.f32 1.0, %v804
      %v806 = vrcp.pop %v767
      %v807 = vmul.f32 1.0, %v806
      %v808 = vrcp.pop %v768
      %v809 = vmul.f32 1.0, %v808
      %v810 = vrcp.pop %v769
      %v811 = vmul.f32 1.0, %v810
      %v812 = vrcp.pop %v770
      %v813 = vmul.f32 1.0, %v812
      %v814 = vrcp.pop %v771
      %v815 = vmul.f32 1.0, %v814
      %v816 = vrcp.pop %v772
      %v817 = vmul.f32 1.0, %v816
      %v818 = vrcp.pop %v773
      %v819 = vmul.f32 1.0, %v818
      %v820 = vrcp.pop %v774
      %v821 = vmul.f32 1.0, %v820
      %v822 = vrcp.pop %v775
      %v823 = vmul.f32 1.0, %v822
      %v824 = vrcp.pop %v776
      %v825 = vmul.f32 1.0, %v824
      %v826 = vrcp.pop %v777
      %v827 = vmul.f32 1.0, %v826
      %v828 = vrcp.pop %v778
      %v829 = vmul.f32 1.0, %v828
      %v830 = vrcp.pop %v779
      %v831 = vmul.f32 1.0, %v830
      %v832 = vrcp.pop %v780
      %v833 = vmul.f32 1.0, %v832
      %v834 = vrcp.pop %v781
      %v835 = vmul.f32 1.0, %v834
      %v836 = vrcp.pop %v782
      %v837 = vmul.f32 1.0, %v836
      %v838 = vrcp.pop %v783
      %v839 = vmul.f32 1.0, %v838
      %v840 = vrcp.pop %v784
      %v841 = vmul.f32 1.0, %v840
      %v842 = vrcp.pop %v785
      %v843 = vmul.f32 1.0, %v842
      %v844 = vrcp.pop %v786
      %v845 = vmul.f32 1.0, %v844
      %v846 = vrcp.pop %v787
      %v847 = vmul.f32 1.0, %v846
      %v848 = vrcp.pop %v788
      %v849 = vmul.f32 1.0, %v848
      %v850 = vrcp.pop %v789
      %v851 = vmul.f32 1.0, %v850
      %v852 = vrcp.pop %v790
      %v853 = vmul.f32 1.0, %v852
      %v854 = vrcp.pop %v791
      %v855 = vmul.f32 1.0, %v854
      %v856 = vmul.f32 %v632, %v793
      %v857 = vmul.f32 %v633, %v795
      %v858 = vmul.f32 %v634, %v797
      %v859 = vmul.f32 %v635, %v799
      %v860 = vmul.f32 %v636, %v801
      %v861 = vmul.f32 %v637, %v803
      %v862 = vmul.f32 %v638, %v805
      %v863 = vmul.f32 %v639, %v807
      %v864 = vmul.f32 %v640, %v809
      %v865 = vmul.f32 %v641, %v811
      %v866 = vmul.f32 %v642, %v813
      %v867 = vmul.f32 %v643, %v815
      %v868 = vmul.f32 %v644, %v817
      %v869 = vmul.f32 %v645, %v819
      %v870 = vmul.f32 %v646, %v821
      %v871 = vmul.f32 %v647, %v823
      %v872 = vmul.f32 %v648, %v825
      %v873 = vmul.f32 %v649, %v827
      %v874 = vmul.f32 %v650, %v829
      %v875 = vmul.f32 %v651, %v831
      %v876 = vmul.f32 %v652, %v833
      %v877 = vmul.f32 %v653, %v835
      %v878 = vmul.f32 %v654, %v837
      %v879 = vmul.f32 %v655, %v839
      %v880 = vmul.f32 %v656, %v841
      %v881 = vmul.f32 %v657, %v843
      %v882 = vmul.f32 %v658, %v845
      %v883 = vmul.f32 %v659, %v847
      %v884 = vmul.f32 %v660, %v849
      %v885 = vmul.f32 %v661, %v851
      %v886 = vmul.f32 %v662, %v853
      %v887 = vmul.f32 %v663, %v855
      %s888 = scalar_lea.vmem [#allocation2], 32
      %889 = vst.msk [vmem:[%s888] sm:$0xff] %vm280, %v856
      %890 = vst.msk [vmem:[%s888 + $0x8] sm:$0xff] %vm280, %v857
      %891 = vst.msk [vmem:[%s888 + $0x10] sm:$0xff] %vm280, %v858
      %892 = vst.msk [vmem:[%s888 + $0x18] sm:$0xff] %vm280, %v859
      %893 = vst.msk [vmem:[%s888 + $0x20] sm:$0xff] %vm280, %v860
      %894 = vst.msk [vmem:[%s888 + $0x28] sm:$0xff] %vm280, %v861
      %895 = vst.msk [vmem:[%s888 + $0x30] sm:$0xff] %vm280, %v862
      %896 = vst.msk [vmem:[%s888 + $0x38] sm:$0xff] %vm280, %v863
      %897 = vst.msk [vmem:[%s888 + $0x40] sm:$0xff] %vm280, %v864
      %898 = vst.msk [vmem:[%s888 + $0x48] sm:$0xff] %vm280, %v865
      %899 = vst.msk [vmem:[%s888 + $0x50] sm:$0xff] %vm280, %v866
      %900 = vst.msk [vmem:[%s888 + $0x58] sm:$0xff] %vm280, %v867
      %901 = vst.msk [vmem:[%s888 + $0x60] sm:$0xff] %vm280, %v868
      %902 = vst.msk [vmem:[%s888 + $0x68] sm:$0xff] %vm280, %v869
      %903 = vst.msk [vmem:[%s888 + $0x70] sm:$0xff] %vm280, %v870
      %904 = vst.msk [vmem:[%s888 + $0x78] sm:$0xff] %vm280, %v871
      %905 = vst.msk [vmem:[%s888 + $0x80] sm:$0xff] %vm280, %v872
      %906 = vst.msk [vmem:[%s888 + $0x88] sm:$0xff] %vm280, %v873
      %907 = vst.msk [vmem:[%s888 + $0x90] sm:$0xff] %vm280, %v874
      %908 = vst.msk [vmem:[%s888 + $0x98] sm:$0xff] %vm280, %v875
      %909 = vst.msk [vmem:[%s888 + $0xa0] sm:$0xff] %vm280, %v876
      %910 = vst.msk [vmem:[%s888 + $0xa8] sm:$0xff] %vm280, %v877
      %911 = vst.msk [vmem:[%s888 + $0xb0] sm:$0xff] %vm280, %v878
      %912 = vst.msk [vmem:[%s888 + $0xb8] sm:$0xff] %vm280, %v879
      %913 = vst.msk [vmem:[%s888 + $0xc0] sm:$0xff] %vm280, %v880
      %914 = vst.msk [vmem:[%s888 + $0xc8] sm:$0xff] %vm280, %v881
      %915 = vst.msk [vmem:[%s888 + $0xd0] sm:$0xff] %vm280, %v882
      %916 = vst.msk [vmem:[%s888 + $0xd8] sm:$0xff] %vm280, %v883
      %917 = vst.msk [vmem:[%s888 + $0xe0] sm:$0xff] %vm280, %v884
      %918 = vst.msk [vmem:[%s888 + $0xe8] sm:$0xff] %vm280, %v885
      %919 = vst.msk [vmem:[%s888 + $0xf0] sm:$0xff] %vm280, %v886
      %920 = vst.msk [vmem:[%s888 + $0xf8] sm:$0xff] %vm280, %v887
      %v921 = vld [vmem:[#allocation2] sm:$0xff]
      %v922 = vld [vmem:[#allocation2 + $0x8] sm:$0xff]
      %v923 = vld [vmem:[#allocation2 + $0x10] sm:$0xff]
      %v924 = vld [vmem:[#allocation2 + $0x18] sm:$0xff]
      %v925 = vld [vmem:[#allocation2 + $0x20] sm:$0xff]
      %v926 = vld [vmem:[#allocation2 + $0x28] sm:$0xff]
      %v927 = vld [vmem:[#allocation2 + $0x30] sm:$0xff]
      %v928 = vld [vmem:[#allocation2 + $0x38] sm:$0xff]
      %v929 = vld [vmem:[#allocation2 + $0x40] sm:$0xff]
      %v930 = vld [vmem:[#allocation2 + $0x48] sm:$0xff]
      %v931 = vld [vmem:[#allocation2 + $0x50] sm:$0xff]
      %v932 = vld [vmem:[#allocation2 + $0x58] sm:$0xff]
      %v933 = vld [vmem:[#allocation2 + $0x60] sm:$0xff]
      %v934 = vld [vmem:[#allocation2 + $0x68] sm:$0xff]
      %v935 = vld [vmem:[#allocation2 + $0x70] sm:$0xff]
      %v936 = vld [vmem:[#allocation2 + $0x78] sm:$0xff]
      %v937 = vld [vmem:[#allocation2 + $0x80] sm:$0xff]
      %v938 = vld [vmem:[#allocation2 + $0x88] sm:$0xff]
      %v939 = vld [vmem:[#allocation2 + $0x90] sm:$0xff]
      %v940 = vld [vmem:[#allocation2 + $0x98] sm:$0xff]
      %v941 = vld [vmem:[#allocation2 + $0xa0] sm:$0xff]
      %v942 = vld [vmem:[#allocation2 + $0xa8] sm:$0xff]
      %v943 = vld [vmem:[#allocation2 + $0xb0] sm:$0xff]
      %v944 = vld [vmem:[#allocation2 + $0xb8] sm:$0xff]
      %v945 = vld [vmem:[#allocation2 + $0xc0] sm:$0xff]
      %v946 = vld [vmem:[#allocation2 + $0xc8] sm:$0xff]
      %v947 = vld [vmem:[#allocation2 + $0xd0] sm:$0xff]
      %v948 = vld [vmem:[#allocation2 + $0xd8] sm:$0xff]
      %v949 = vld [vmem:[#allocation2 + $0xe0] sm:$0xff]
      %v950 = vld [vmem:[#allocation2 + $0xe8] sm:$0xff]
      %v951 = vld [vmem:[#allocation2 + $0xf0] sm:$0xff]
      %v952 = vld [vmem:[#allocation2 + $0xf8] sm:$0xff]
      %s953 = scalar_lea.vmem [#allocation2], 16
      %v954 = vld [vmem:[%s953] sm:$0xff]
      %v955 = vld [vmem:[%s953 + $0x8] sm:$0xff]
      %v956 = vld [vmem:[%s953 + $0x10] sm:$0xff]
      %v957 = vld [vmem:[%s953 + $0x18] sm:$0xff]
      %v958 = vld [vmem:[%s953 + $0x20] sm:$0xff]
      %v959 = vld [vmem:[%s953 + $0x28] sm:$0xff]
      %v960 = vld [vmem:[%s953 + $0x30] sm:$0xff]
      %v961 = vld [vmem:[%s953 + $0x38] sm:$0xff]
      %v962 = vld [vmem:[%s953 + $0x40] sm:$0xff]
      %v963 = vld [vmem:[%s953 + $0x48] sm:$0xff]
      %v964 = vld [vmem:[%s953 + $0x50] sm:$0xff]
      %v965 = vld [vmem:[%s953 + $0x58] sm:$0xff]
      %v966 = vld [vmem:[%s953 + $0x60] sm:$0xff]
      %v967 = vld [vmem:[%s953 + $0x68] sm:$0xff]
      %v968 = vld [vmem:[%s953 + $0x70] sm:$0xff]
      %v969 = vld [vmem:[%s953 + $0x78] sm:$0xff]
      %v970 = vld [vmem:[%s953 + $0x80] sm:$0xff]
      %v971 = vld [vmem:[%s953 + $0x88] sm:$0xff]
      %v972 = vld [vmem:[%s953 + $0x90] sm:$0xff]
      %v973 = vld [vmem:[%s953 + $0x98] sm:$0xff]
      %v974 = vld [vmem:[%s953 + $0xa0] sm:$0xff]
      %v975 = vld [vmem:[%s953 + $0xa8] sm:$0xff]
      %v976 = vld [vmem:[%s953 + $0xb0] sm:$0xff]
      %v977 = vld [vmem:[%s953 + $0xb8] sm:$0xff]
      %v978 = vld [vmem:[%s953 + $0xc0] sm:$0xff]
      %v979 = vld [vmem:[%s953 + $0xc8] sm:$0xff]
      %v980 = vld [vmem:[%s953 + $0xd0] sm:$0xff]
      %v981 = vld [vmem:[%s953 + $0xd8] sm:$0xff]
      %v982 = vld [vmem:[%s953 + $0xe0] sm:$0xff]
      %v983 = vld [vmem:[%s953 + $0xe8] sm:$0xff]
      %v984 = vld [vmem:[%s953 + $0xf0] sm:$0xff]
      %v985 = vld [vmem:[%s953 + $0xf8] sm:$0xff]
      %v986 = vmax.f32 %v921, %v954
      %v987 = vmax.f32 %v922, %v955
      %v988 = vmax.f32 %v923, %v956
      %v989 = vmax.f32 %v924, %v957
      %v990 = vmax.f32 %v925, %v958
      %v991 = vmax.f32 %v926, %v959
      %v992 = vmax.f32 %v927, %v960
      %v993 = vmax.f32 %v928, %v961
      %v994 = vmax.f32 %v929, %v962
      %v995 = vmax.f32 %v930, %v963
      %v996 = vmax.f32 %v931, %v964
      %v997 = vmax.f32 %v932, %v965
      %v998 = vmax.f32 %v933, %v966
      %v999 = vmax.f32 %v934, %v967
      %v1000 = vmax.f32 %v935, %v968
      %v1001 = vmax.f32 %v936, %v969
      %v1002 = vmax.f32 %v937, %v970
      %v1003 = vmax.f32 %v938, %v971
      %v1004 = vmax.f32 %v939, %v972
      %v1005 = vmax.f32 %v940, %v973
      %v1006 = vmax.f32 %v941, %v974
      %v1007 = vmax.f32 %v942, %v975
      %v1008 = vmax.f32 %v943, %v976
      %v1009 = vmax.f32 %v944, %v977
      %v1010 = vmax.f32 %v945, %v978
      %v1011 = vmax.f32 %v946, %v979
      %v1012 = vmax.f32 %v947, %v980
      %v1013 = vmax.f32 %v948, %v981
      %v1014 = vmax.f32 %v949, %v982
      %v1015 = vmax.f32 %v950, %v983
      %v1016 = vmax.f32 %v951, %v984
      %v1017 = vmax.f32 %v952, %v985
      %v1018 = vld [vmem:[%s888] sm:$0xff]
      %v1019 = vld [vmem:[%s888 + $0x8] sm:$0xff]
      %v1020 = vld [vmem:[%s888 + $0x10] sm:$0xff]
      %v1021 = vld [vmem:[%s888 + $0x18] sm:$0xff]
      %v1022 = vld [vmem:[%s888 + $0x20] sm:$0xff]
      %v1023 = vld [vmem:[%s888 + $0x28] sm:$0xff]
      %v1024 = vld [vmem:[%s888 + $0x30] sm:$0xff]
      %v1025 = vld [vmem:[%s888 + $0x38] sm:$0xff]
      %v1026 = vld [vmem:[%s888 + $0x40] sm:$0xff]
      %v1027 = vld [vmem:[%s888 + $0x48] sm:$0xff]
      %v1028 = vld [vmem:[%s888 + $0x50] sm:$0xff]
      %v1029 = vld [vmem:[%s888 + $0x58] sm:$0xff]
      %v1030 = vld [vmem:[%s888 + $0x60] sm:$0xff]
      %v1031 = vld [vmem:[%s888 + $0x68] sm:$0xff]
      %v1032 = vld [vmem:[%s888 + $0x70] sm:$0xff]
      %v1033 = vld [vmem:[%s888 + $0x78] sm:$0xff]
      %v1034 = vld [vmem:[%s888 + $0x80] sm:$0xff]
      %v1035 = vld [vmem:[%s888 + $0x88] sm:$0xff]
      %v1036 = vld [vmem:[%s888 + $0x90] sm:$0xff]
      %v1037 = vld [vmem:[%s888 + $0x98] sm:$0xff]
      %v1038 = vld [vmem:[%s888 + $0xa0] sm:$0xff]
      %v1039 = vld [vmem:[%s888 + $0xa8] sm:$0xff]
      %v1040 = vld [vmem:[%s888 + $0xb0] sm:$0xff]
      %v1041 = vld [vmem:[%s888 + $0xb8] sm:$0xff]
      %v1042 = vld [vmem:[%s888 + $0xc0] sm:$0xff]
      %v1043 = vld [vmem:[%s888 + $0xc8] sm:$0xff]
      %v1044 = vld [vmem:[%s888 + $0xd0] sm:$0xff]
      %v1045 = vld [vmem:[%s888 + $0xd8] sm:$0xff]
      %v1046 = vld [vmem:[%s888 + $0xe0] sm:$0xff]
      %v1047 = vld [vmem:[%s888 + $0xe8] sm:$0xff]
      %v1048 = vld [vmem:[%s888 + $0xf0] sm:$0xff]
      %v1049 = vld [vmem:[%s888 + $0xf8] sm:$0xff]
      %v1050 = vmax.f32 %v986, %v1018
      %v1051 = vmax.f32 %v987, %v1019
      %v1052 = vmax.f32 %v988, %v1020
      %v1053 = vmax.f32 %v989, %v1021
      %v1054 = vmax.f32 %v990, %v1022
      %v1055 = vmax.f32 %v991, %v1023
      %v1056 = vmax.f32 %v992, %v1024
      %v1057 = vmax.f32 %v993, %v1025
      %v1058 = vmax.f32 %v994, %v1026
      %v1059 = vmax.f32 %v995, %v1027
      %v1060 = vmax.f32 %v996, %v1028
      %v1061 = vmax.f32 %v997, %v1029
      %v1062 = vmax.f32 %v998, %v1030
      %v1063 = vmax.f32 %v999, %v1031
      %v1064 = vmax.f32 %v1000, %v1032
      %v1065 = vmax.f32 %v1001, %v1033
      %v1066 = vmax.f32 %v1002, %v1034
      %v1067 = vmax.f32 %v1003, %v1035
      %v1068 = vmax.f32 %v1004, %v1036
      %v1069 = vmax.f32 %v1005, %v1037
      %v1070 = vmax.f32 %v1006, %v1038
      %v1071 = vmax.f32 %v1007, %v1039
      %v1072 = vmax.f32 %v1008, %v1040
      %v1073 = vmax.f32 %v1009, %v1041
      %v1074 = vmax.f32 %v1010, %v1042
      %v1075 = vmax.f32 %v1011, %v1043
      %v1076 = vmax.f32 %v1012, %v1044
      %v1077 = vmax.f32 %v1013, %v1045
      %v1078 = vmax.f32 %v1014, %v1046
      %v1079 = vmax.f32 %v1015, %v1047
      %v1080 = vmax.f32 %v1016, %v1048
      %v1081 = vmax.f32 %v1017, %v1049
      %s1082 = scalar_lea.vmem [#allocation2], 48
      %v1083 = vld [vmem:[%s1082] sm:$0xff]
      %v1084 = vld [vmem:[%s1082 + $0x8] sm:$0xff]
      %v1085 = vld [vmem:[%s1082 + $0x10] sm:$0xff]
      %v1086 = vld [vmem:[%s1082 + $0x18] sm:$0xff]
      %v1087 = vld [vmem:[%s1082 + $0x20] sm:$0xff]
      %v1088 = vld [vmem:[%s1082 + $0x28] sm:$0xff]
      %v1089 = vld [vmem:[%s1082 + $0x30] sm:$0xff]
      %v1090 = vld [vmem:[%s1082 + $0x38] sm:$0xff]
      %v1091 = vld [vmem:[%s1082 + $0x40] sm:$0xff]
      %v1092 = vld [vmem:[%s1082 + $0x48] sm:$0xff]
      %v1093 = vld [vmem:[%s1082 + $0x50] sm:$0xff]
      %v1094 = vld [vmem:[%s1082 + $0x58] sm:$0xff]
      %v1095 = vld [vmem:[%s1082 + $0x60] sm:$0xff]
      %v1096 = vld [vmem:[%s1082 + $0x68] sm:$0xff]
      %v1097 = vld [vmem:[%s1082 + $0x70] sm:$0xff]
      %v1098 = vld [vmem:[%s1082 + $0x78] sm:$0xff]
      %v1099 = vld [vmem:[%s1082 + $0x80] sm:$0xff]
      %v1100 = vld [vmem:[%s1082 + $0x88] sm:$0xff]
      %v1101 = vld [vmem:[%s1082 + $0x90] sm:$0xff]
      %v1102 = vld [vmem:[%s1082 + $0x98] sm:$0xff]
      %v1103 = vld [vmem:[%s1082 + $0xa0] sm:$0xff]
      %v1104 = vld [vmem:[%s1082 + $0xa8] sm:$0xff]
      %v1105 = vld [vmem:[%s1082 + $0xb0] sm:$0xff]
      %v1106 = vld [vmem:[%s1082 + $0xb8] sm:$0xff]
      %v1107 = vld [vmem:[%s1082 + $0xc0] sm:$0xff]
      %v1108 = vld [vmem:[%s1082 + $0xc8] sm:$0xff]
      %v1109 = vld [vmem:[%s1082 + $0xd0] sm:$0xff]
      %v1110 = vld [vmem:[%s1082 + $0xd8] sm:$0xff]
      %v1111 = vld [vmem:[%s1082 + $0xe0] sm:$0xff]
      %v1112 = vld [vmem:[%s1082 + $0xe8] sm:$0xff]
      %v1113 = vld [vmem:[%s1082 + $0xf0] sm:$0xff]
      %v1114 = vld [vmem:[%s1082 + $0xf8] sm:$0xff]
      %v1115 = vmax.f32 %v1050, %v1083
      %v1116 = vmax.f32 %v1051, %v1084
      %v1117 = vmax.f32 %v1052, %v1085
      %v1118 = vmax.f32 %v1053, %v1086
      %v1119 = vmax.f32 %v1054, %v1087
      %v1120 = vmax.f32 %v1055, %v1088
      %v1121 = vmax.f32 %v1056, %v1089
      %v1122 = vmax.f32 %v1057, %v1090
      %v1123 = vmax.f32 %v1058, %v1091
      %v1124 = vmax.f32 %v1059, %v1092
      %v1125 = vmax.f32 %v1060, %v1093
      %v1126 = vmax.f32 %v1061, %v1094
      %v1127 = vmax.f32 %v1062, %v1095
      %v1128 = vmax.f32 %v1063, %v1096
      %v1129 = vmax.f32 %v1064, %v1097
      %v1130 = vmax.f32 %v1065, %v1098
      %v1131 = vmax.f32 %v1066, %v1099
      %v1132 = vmax.f32 %v1067, %v1100
      %v1133 = vmax.f32 %v1068, %v1101
      %v1134 = vmax.f32 %v1069, %v1102
      %v1135 = vmax.f32 %v1070, %v1103
      %v1136 = vmax.f32 %v1071, %v1104
      %v1137 = vmax.f32 %v1072, %v1105
      %v1138 = vmax.f32 %v1073, %v1106
      %v1139 = vmax.f32 %v1074, %v1107
      %v1140 = vmax.f32 %v1075, %v1108
      %v1141 = vmax.f32 %v1076, %v1109
      %v1142 = vmax.f32 %v1077, %v1110
      %v1143 = vmax.f32 %v1078, %v1111
      %v1144 = vmax.f32 %v1079, %v1112
      %v1145 = vmax.f32 %v1080, %v1113
      %v1146 = vmax.f32 %v1081, %v1114
      %s1147 = scalar_lea.vmem [#allocation2], 64
      %v1148 = vld [vmem:[%s1147] sm:$0xff]
      %v1149 = vld [vmem:[%s1147 + $0x8] sm:$0xff]
      %v1150 = vld [vmem:[%s1147 + $0x10] sm:$0xff]
      %v1151 = vld [vmem:[%s1147 + $0x18] sm:$0xff]
      %v1152 = vld [vmem:[%s1147 + $0x20] sm:$0xff]
      %v1153 = vld [vmem:[%s1147 + $0x28] sm:$0xff]
      %v1154 = vld [vmem:[%s1147 + $0x30] sm:$0xff]
      %v1155 = vld [vmem:[%s1147 + $0x38] sm:$0xff]
      %v1156 = vld [vmem:[%s1147 + $0x40] sm:$0xff]
      %v1157 = vld [vmem:[%s1147 + $0x48] sm:$0xff]
      %v1158 = vld [vmem:[%s1147 + $0x50] sm:$0xff]
      %v1159 = vld [vmem:[%s1147 + $0x58] sm:$0xff]
      %v1160 = vld [vmem:[%s1147 + $0x60] sm:$0xff]
      %v1161 = vld [vmem:[%s1147 + $0x68] sm:$0xff]
      %v1162 = vld [vmem:[%s1147 + $0x70] sm:$0xff]
      %v1163 = vld [vmem:[%s1147 + $0x78] sm:$0xff]
      %v1164 = vld [vmem:[%s1147 + $0x80] sm:$0xff]
      %v1165 = vld [vmem:[%s1147 + $0x88] sm:$0xff]
      %v1166 = vld [vmem:[%s1147 + $0x90] sm:$0xff]
      %v1167 = vld [vmem:[%s1147 + $0x98] sm:$0xff]
      %v1168 = vld [vmem:[%s1147 + $0xa0] sm:$0xff]
      %v1169 = vld [vmem:[%s1147 + $0xa8] sm:$0xff]
      %v1170 = vld [vmem:[%s1147 + $0xb0] sm:$0xff]
      %v1171 = vld [vmem:[%s1147 + $0xb8] sm:$0xff]
      %v1172 = vld [vmem:[%s1147 + $0xc0] sm:$0xff]
      %v1173 = vld [vmem:[%s1147 + $0xc8] sm:$0xff]
      %v1174 = vld [vmem:[%s1147 + $0xd0] sm:$0xff]
      %v1175 = vld [vmem:[%s1147 + $0xd8] sm:$0xff]
      %v1176 = vld [vmem:[%s1147 + $0xe0] sm:$0xff]
      %v1177 = vld [vmem:[%s1147 + $0xe8] sm:$0xff]
      %v1178 = vld [vmem:[%s1147 + $0xf0] sm:$0xff]
      %v1179 = vld [vmem:[%s1147 + $0xf8] sm:$0xff]
      %v1180 = vmax.f32 %v1115, %v1148
      %v1181 = vmax.f32 %v1116, %v1149
      %v1182 = vmax.f32 %v1117, %v1150
      %v1183 = vmax.f32 %v1118, %v1151
      %v1184 = vmax.f32 %v1119, %v1152
      %v1185 = vmax.f32 %v1120, %v1153
      %v1186 = vmax.f32 %v1121, %v1154
      %v1187 = vmax.f32 %v1122, %v1155
      %v1188 = vmax.f32 %v1123, %v1156
      %v1189 = vmax.f32 %v1124, %v1157
      %v1190 = vmax.f32 %v1125, %v1158
      %v1191 = vmax.f32 %v1126, %v1159
      %v1192 = vmax.f32 %v1127, %v1160
      %v1193 = vmax.f32 %v1128, %v1161
      %v1194 = vmax.f32 %v1129, %v1162
      %v1195 = vmax.f32 %v1130, %v1163
      %v1196 = vmax.f32 %v1131, %v1164
      %v1197 = vmax.f32 %v1132, %v1165
      %v1198 = vmax.f32 %v1133, %v1166
      %v1199 = vmax.f32 %v1134, %v1167
      %v1200 = vmax.f32 %v1135, %v1168
      %v1201 = vmax.f32 %v1136, %v1169
      %v1202 = vmax.f32 %v1137, %v1170
      %v1203 = vmax.f32 %v1138, %v1171
      %v1204 = vmax.f32 %v1139, %v1172
      %v1205 = vmax.f32 %v1140, %v1173
      %v1206 = vmax.f32 %v1141, %v1174
      %v1207 = vmax.f32 %v1142, %v1175
      %v1208 = vmax.f32 %v1143, %v1176
      %v1209 = vmax.f32 %v1144, %v1177
      %v1210 = vmax.f32 %v1145, %v1178
      %v1211 = vmax.f32 %v1146, %v1179
      %1212 = vst.msk [vmem:[#allocation3 + $0x8] sm:$0xff] %vm280, %v1180
      %1213 = vst.msk [vmem:[#allocation3 + $0x10] sm:$0xff] %vm280, %v1181
      %1214 = vst.msk [vmem:[#allocation3 + $0x28] sm:$0xff] %vm280, %v1182
      %1215 = vst.msk [vmem:[#allocation3 + $0x30] sm:$0xff] %vm280, %v1183
      %1216 = vst.msk [vmem:[#allocation3 + $0x48] sm:$0xff] %vm280, %v1184
      %1217 = vst.msk [vmem:[#allocation3 + $0x50] sm:$0xff] %vm280, %v1185
      %1218 = vst.msk [vmem:[#allocation3 + $0x68] sm:$0xff] %vm280, %v1186
      %1219 = vst.msk [vmem:[#allocation3 + $0x70] sm:$0xff] %vm280, %v1187
      %1220 = vst.msk [vmem:[#allocation3 + $0x88] sm:$0xff] %vm280, %v1188
      %1221 = vst.msk [vmem:[#allocation3 + $0x90] sm:$0xff] %vm280, %v1189
      %1222 = vst.msk [vmem:[#allocation3 + $0xa8] sm:$0xff] %vm280, %v1190
      %1223 = vst.msk [vmem:[#allocation3 + $0xb0] sm:$0xff] %vm280, %v1191
      %1224 = vst.msk [vmem:[#allocation3 + $0xc8] sm:$0xff] %vm280, %v1192
      %1225 = vst.msk [vmem:[#allocation3 + $0xd0] sm:$0xff] %vm280, %v1193
      %1226 = vst.msk [vmem:[#allocation3 + $0xe8] sm:$0xff] %vm280, %v1194
      %1227 = vst.msk [vmem:[#allocation3 + $0xf0] sm:$0xff] %vm280, %v1195
      %1228 = vst.msk [vmem:[#allocation3 + $0x108] sm:$0xff] %vm280, %v1196
      %1229 = vst.msk [vmem:[#allocation3 + $0x110] sm:$0xff] %vm280, %v1197
      %1230 = vst.msk [vmem:[#allocation3 + $0x128] sm:$0xff] %vm280, %v1198
      %1231 = vst.msk [vmem:[#allocation3 + $0x130] sm:$0xff] %vm280, %v1199
      %1232 = vst.msk [vmem:[#allocation3 + $0x148] sm:$0xff] %vm280, %v1200
      %1233 = vst.msk [vmem:[#allocation3 + $0x150] sm:$0xff] %vm280, %v1201
      %1234 = vst.msk [vmem:[#allocation3 + $0x168] sm:$0xff] %vm280, %v1202
      %1235 = vst.msk [vmem:[#allocation3 + $0x170] sm:$0xff] %vm280, %v1203
      %1236 = vst.msk [vmem:[#allocation3 + $0x188] sm:$0xff] %vm280, %v1204
      %1237 = vst.msk [vmem:[#allocation3 + $0x190] sm:$0xff] %vm280, %v1205
      %1238 = vst.msk [vmem:[#allocation3 + $0x1a8] sm:$0xff] %vm280, %v1206
      %1239 = vst.msk [vmem:[#allocation3 + $0x1b0] sm:$0xff] %vm280, %v1207
      %1240 = vst.msk [vmem:[#allocation3 + $0x1c8] sm:$0xff] %vm280, %v1208
      %1241 = vst.msk [vmem:[#allocation3 + $0x1d0] sm:$0xff] %vm280, %v1209
      %1242 = vst.msk [vmem:[#allocation3 + $0x1e8] sm:$0xff] %vm280, %v1210
      %1243 = vst.msk [vmem:[#allocation3 + $0x1f0] sm:$0xff] %vm280, %v1211
      %v1244 = vld [vmem:[#allocation3 + $0x6] sm:$0xff]
      %v1245 = vld [vmem:[#allocation3 + $0xe] sm:$0xff]
      %v1246 = vld [vmem:[#allocation3 + $0x26] sm:$0xff]
      %v1247 = vld [vmem:[#allocation3 + $0x2e] sm:$0xff]
      %v1248 = vld [vmem:[#allocation3 + $0x46] sm:$0xff]
      %v1249 = vld [vmem:[#allocation3 + $0x4e] sm:$0xff]
      %v1250 = vld [vmem:[#allocation3 + $0x66] sm:$0xff]
      %v1251 = vld [vmem:[#allocation3 + $0x6e] sm:$0xff]
      %v1252 = vld [vmem:[#allocation3 + $0x86] sm:$0xff]
      %v1253 = vld [vmem:[#allocation3 + $0x8e] sm:$0xff]
      %v1254 = vld [vmem:[#allocation3 + $0xa6] sm:$0xff]
      %v1255 = vld [vmem:[#allocation3 + $0xae] sm:$0xff]
      %v1256 = vld [vmem:[#allocation3 + $0xc6] sm:$0xff]
      %v1257 = vld [vmem:[#allocation3 + $0xce] sm:$0xff]
      %v1258 = vld [vmem:[#allocation3 + $0xe6] sm:$0xff]
      %v1259 = vld [vmem:[#allocation3 + $0xee] sm:$0xff]
      %v1260 = vld [vmem:[#allocation3 + $0x106] sm:$0xff]
      %v1261 = vld [vmem:[#allocation3 + $0x10e] sm:$0xff]
      %v1262 = vld [vmem:[#allocation3 + $0x126] sm:$0xff]
      %v1263 = vld [vmem:[#allocation3 + $0x12e] sm:$0xff]
      %v1264 = vld [vmem:[#allocation3 + $0x146] sm:$0xff]
      %v1265 = vld [vmem:[#allocation3 + $0x14e] sm:$0xff]
      %v1266 = vld [vmem:[#allocation3 + $0x166] sm:$0xff]
      %v1267 = vld [vmem:[#allocation3 + $0x16e] sm:$0xff]
      %v1268 = vld [vmem:[#allocation3 + $0x186] sm:$0xff]
      %v1269 = vld [vmem:[#allocation3 + $0x18e] sm:$0xff]
      %v1270 = vld [vmem:[#allocation3 + $0x1a6] sm:$0xff]
      %v1271 = vld [vmem:[#allocation3 + $0x1ae] sm:$0xff]
      %v1272 = vld [vmem:[#allocation3 + $0x1c6] sm:$0xff]
      %v1273 = vld [vmem:[#allocation3 + $0x1ce] sm:$0xff]
      %v1274 = vld [vmem:[#allocation3 + $0x1e6] sm:$0xff]
      %v1275 = vld [vmem:[#allocation3 + $0x1ee] sm:$0xff]
      %v1276 = vld [vmem:[#allocation3 + $0x7] sm:$0xff]
      %v1277 = vld [vmem:[#allocation3 + $0xf] sm:$0xff]
      %v1278 = vld [vmem:[#allocation3 + $0x27] sm:$0xff]
      %v1279 = vld [vmem:[#allocation3 + $0x2f] sm:$0xff]
      %v1280 = vld [vmem:[#allocation3 + $0x47] sm:$0xff]
      %v1281 = vld [vmem:[#allocation3 + $0x4f] sm:$0xff]
      %v1282 = vld [vmem:[#allocation3 + $0x67] sm:$0xff]
      %v1283 = vld [vmem:[#allocation3 + $0x6f] sm:$0xff]
      %v1284 = vld [vmem:[#allocation3 + $0x87] sm:$0xff]
      %v1285 = vld [vmem:[#allocation3 + $0x8f] sm:$0xff]
      %v1286 = vld [vmem:[#allocation3 + $0xa7] sm:$0xff]
      %v1287 = vld [vmem:[#allocation3 + $0xaf] sm:$0xff]
      %v1288 = vld [vmem:[#allocation3 + $0xc7] sm:$0xff]
      %v1289 = vld [vmem:[#allocation3 + $0xcf] sm:$0xff]
      %v1290 = vld [vmem:[#allocation3 + $0xe7] sm:$0xff]
      %v1291 = vld [vmem:[#allocation3 + $0xef] sm:$0xff]
      %v1292 = vld [vmem:[#allocation3 + $0x107] sm:$0xff]
      %v1293 = vld [vmem:[#allocation3 + $0x10f] sm:$0xff]
      %v1294 = vld [vmem:[#allocation3 + $0x127] sm:$0xff]
      %v1295 = vld [vmem:[#allocation3 + $0x12f] sm:$0xff]
      %v1296 = vld [vmem:[#allocation3 + $0x147] sm:$0xff]
      %v1297 = vld [vmem:[#allocation3 + $0x14f] sm:$0xff]
      %v1298 = vld [vmem:[#allocation3 + $0x167] sm:$0xff]
      %v1299 = vld [vmem:[#allocation3 + $0x16f] sm:$0xff]
      %v1300 = vld [vmem:[#allocation3 + $0x187] sm:$0xff]
      %v1301 = vld [vmem:[#allocation3 + $0x18f] sm:$0xff]
      %v1302 = vld [vmem:[#allocation3 + $0x1a7] sm:$0xff]
      %v1303 = vld [vmem:[#allocation3 + $0x1af] sm:$0xff]
      %v1304 = vld [vmem:[#allocation3 + $0x1c7] sm:$0xff]
      %v1305 = vld [vmem:[#allocation3 + $0x1cf] sm:$0xff]
      %v1306 = vld [vmem:[#allocation3 + $0x1e7] sm:$0xff]
      %v1307 = vld [vmem:[#allocation3 + $0x1ef] sm:$0xff]
      %v1308 = vmax.f32 %v1244, %v1276
      %v1309 = vmax.f32 %v1245, %v1277
      %v1310 = vmax.f32 %v1246, %v1278
      %v1311 = vmax.f32 %v1247, %v1279
      %v1312 = vmax.f32 %v1248, %v1280
      %v1313 = vmax.f32 %v1249, %v1281
      %v1314 = vmax.f32 %v1250, %v1282
      %v1315 = vmax.f32 %v1251, %v1283
      %v1316 = vmax.f32 %v1252, %v1284
      %v1317 = vmax.f32 %v1253, %v1285
      %v1318 = vmax.f32 %v1254, %v1286
      %v1319 = vmax.f32 %v1255, %v1287
      %v1320 = vmax.f32 %v1256, %v1288
      %v1321 = vmax.f32 %v1257, %v1289
      %v1322 = vmax.f32 %v1258, %v1290
      %v1323 = vmax.f32 %v1259, %v1291
      %v1324 = vmax.f32 %v1260, %v1292
      %v1325 = vmax.f32 %v1261, %v1293
      %v1326 = vmax.f32 %v1262, %v1294
      %v1327 = vmax.f32 %v1263, %v1295
      %v1328 = vmax.f32 %v1264, %v1296
      %v1329 = vmax.f32 %v1265, %v1297
      %v1330 = vmax.f32 %v1266, %v1298
      %v1331 = vmax.f32 %v1267, %v1299
      %v1332 = vmax.f32 %v1268, %v1300
      %v1333 = vmax.f32 %v1269, %v1301
      %v1334 = vmax.f32 %v1270, %v1302
      %v1335 = vmax.f32 %v1271, %v1303
      %v1336 = vmax.f32 %v1272, %v1304
      %v1337 = vmax.f32 %v1273, %v1305
      %v1338 = vmax.f32 %v1274, %v1306
      %v1339 = vmax.f32 %v1275, %v1307
      %v1340 = vld [vmem:[#allocation3 + $0x8] sm:$0xff]
      %v1341 = vld [vmem:[#allocation3 + $0x10] sm:$0xff]
      %v1342 = vld [vmem:[#allocation3 + $0x28] sm:$0xff]
      %v1343 = vld [vmem:[#allocation3 + $0x30] sm:$0xff]
      %v1344 = vld [vmem:[#allocation3 + $0x48] sm:$0xff]
      %v1345 = vld [vmem:[#allocation3 + $0x50] sm:$0xff]
      %v1346 = vld [vmem:[#allocation3 + $0x68] sm:$0xff]
      %v1347 = vld [vmem:[#allocation3 + $0x70] sm:$0xff]
      %v1348 = vld [vmem:[#allocation3 + $0x88] sm:$0xff]
      %v1349 = vld [vmem:[#allocation3 + $0x90] sm:$0xff]
      %v1350 = vld [vmem:[#allocation3 + $0xa8] sm:$0xff]
      %v1351 = vld [vmem:[#allocation3 + $0xb0] sm:$0xff]
      %v1352 = vld [vmem:[#allocation3 + $0xc8] sm:$0xff]
      %v1353 = vld [vmem:[#allocation3 + $0xd0] sm:$0xff]
      %v1354 = vld [vmem:[#allocation3 + $0xe8] sm:$0xff]
      %v1355 = vld [vmem:[#allocation3 + $0xf0] sm:$0xff]
      %v1356 = vld [vmem:[#allocation3 + $0x108] sm:$0xff]
      %v1357 = vld [vmem:[#allocation3 + $0x110] sm:$0xff]
      %v1358 = vld [vmem:[#allocation3 + $0x128] sm:$0xff]
      %v1359 = vld [vmem:[#allocation3 + $0x130] sm:$0xff]
      %v1360 = vld [vmem:[#allocation3 + $0x148] sm:$0xff]
      %v1361 = vld [vmem:[#allocation3 + $0x150] sm:$0xff]
      %v1362 = vld [vmem:[#allocation3 + $0x168] sm:$0xff]
      %v1363 = vld [vmem:[#allocation3 + $0x170] sm:$0xff]
      %v1364 = vld [vmem:[#allocation3 + $0x188] sm:$0xff]
      %v1365 = vld [vmem:[#allocation3 + $0x190] sm:$0xff]
      %v1366 = vld [vmem:[#allocation3 + $0x1a8] sm:$0xff]
      %v1367 = vld [vmem:[#allocation3 + $0x1b0] sm:$0xff]
      %v1368 = vld [vmem:[#allocation3 + $0x1c8] sm:$0xff]
      %v1369 = vld [vmem:[#allocation3 + $0x1d0] sm:$0xff]
      %v1370 = vld [vmem:[#allocation3 + $0x1e8] sm:$0xff]
      %v1371 = vld [vmem:[#allocation3 + $0x1f0] sm:$0xff]
      %v1372 = vmax.f32 %v1308, %v1340
      %v1373 = vmax.f32 %v1309, %v1341
      %v1374 = vmax.f32 %v1310, %v1342
      %v1375 = vmax.f32 %v1311, %v1343
      %v1376 = vmax.f32 %v1312, %v1344
      %v1377 = vmax.f32 %v1313, %v1345
      %v1378 = vmax.f32 %v1314, %v1346
      %v1379 = vmax.f32 %v1315, %v1347
      %v1380 = vmax.f32 %v1316, %v1348
      %v1381 = vmax.f32 %v1317, %v1349
      %v1382 = vmax.f32 %v1318, %v1350
      %v1383 = vmax.f32 %v1319, %v1351
      %v1384 = vmax.f32 %v1320, %v1352
      %v1385 = vmax.f32 %v1321, %v1353
      %v1386 = vmax.f32 %v1322, %v1354
      %v1387 = vmax.f32 %v1323, %v1355
      %v1388 = vmax.f32 %v1324, %v1356
      %v1389 = vmax.f32 %v1325, %v1357
      %v1390 = vmax.f32 %v1326, %v1358
      %v1391 = vmax.f32 %v1327, %v1359
      %v1392 = vmax.f32 %v1328, %v1360
      %v1393 = vmax.f32 %v1329, %v1361
      %v1394 = vmax.f32 %v1330, %v1362
      %v1395 = vmax.f32 %v1331, %v1363
      %v1396 = vmax.f32 %v1332, %v1364
      %v1397 = vmax.f32 %v1333, %v1365
      %v1398 = vmax.f32 %v1334, %v1366
      %v1399 = vmax.f32 %v1335, %v1367
      %v1400 = vmax.f32 %v1336, %v1368
      %v1401 = vmax.f32 %v1337, %v1369
      %v1402 = vmax.f32 %v1338, %v1370
      %v1403 = vmax.f32 %v1339, %v1371
      %v1404 = vld [vmem:[#allocation3 + $0x9] sm:$0xff]
      %v1405 = vld [vmem:[#allocation3 + $0x11] sm:$0xff]
      %v1406 = vld [vmem:[#allocation3 + $0x29] sm:$0xff]
      %v1407 = vld [vmem:[#allocation3 + $0x31] sm:$0xff]
      %v1408 = vld [vmem:[#allocation3 + $0x49] sm:$0xff]
      %v1409 = vld [vmem:[#allocation3 + $0x51] sm:$0xff]
      %v1410 = vld [vmem:[#allocation3 + $0x69] sm:$0xff]
      %v1411 = vld [vmem:[#allocation3 + $0x71] sm:$0xff]
      %v1412 = vld [vmem:[#allocation3 + $0x89] sm:$0xff]
      %v1413 = vld [vmem:[#allocation3 + $0x91] sm:$0xff]
      %v1414 = vld [vmem:[#allocation3 + $0xa9] sm:$0xff]
      %v1415 = vld [vmem:[#allocation3 + $0xb1] sm:$0xff]
      %v1416 = vld [vmem:[#allocation3 + $0xc9] sm:$0xff]
      %v1417 = vld [vmem:[#allocation3 + $0xd1] sm:$0xff]
      %v1418 = vld [vmem:[#allocation3 + $0xe9] sm:$0xff]
      %v1419 = vld [vmem:[#allocation3 + $0xf1] sm:$0xff]
      %v1420 = vld [vmem:[#allocation3 + $0x109] sm:$0xff]
      %v1421 = vld [vmem:[#allocation3 + $0x111] sm:$0xff]
      %v1422 = vld [vmem:[#allocation3 + $0x129] sm:$0xff]
      %v1423 = vld [vmem:[#allocation3 + $0x131] sm:$0xff]
      %v1424 = vld [vmem:[#allocation3 + $0x149] sm:$0xff]
      %v1425 = vld [vmem:[#allocation3 + $0x151] sm:$0xff]
      %v1426 = vld [vmem:[#allocation3 + $0x169] sm:$0xff]
      %v1427 = vld [vmem:[#allocation3 + $0x171] sm:$0xff]
      %v1428 = vld [vmem:[#allocation3 + $0x189] sm:$0xff]
      %v1429 = vld [vmem:[#allocation3 + $0x191] sm:$0xff]
      %v1430 = vld [vmem:[#allocation3 + $0x1a9] sm:$0xff]
      %v1431 = vld [vmem:[#allocation3 + $0x1b1] sm:$0xff]
      %v1432 = vld [vmem:[#allocation3 + $0x1c9] sm:$0xff]
      %v1433 = vld [vmem:[#allocation3 + $0x1d1] sm:$0xff]
      %v1434 = vld [vmem:[#allocation3 + $0x1e9] sm:$0xff]
      %v1435 = vld [vmem:[#allocation3 + $0x1f1] sm:$0xff]
      %v1436 = vmax.f32 %v1372, %v1404
      %v1437 = vmax.f32 %v1373, %v1405
      %v1438 = vmax.f32 %v1374, %v1406
      %v1439 = vmax.f32 %v1375, %v1407
      %v1440 = vmax.f32 %v1376, %v1408
      %v1441 = vmax.f32 %v1377, %v1409
      %v1442 = vmax.f32 %v1378, %v1410
      %v1443 = vmax.f32 %v1379, %v1411
      %v1444 = vmax.f32 %v1380, %v1412
      %v1445 = vmax.f32 %v1381, %v1413
      %v1446 = vmax.f32 %v1382, %v1414
      %v1447 = vmax.f32 %v1383, %v1415
      %v1448 = vmax.f32 %v1384, %v1416
      %v1449 = vmax.f32 %v1385, %v1417
      %v1450 = vmax.f32 %v1386, %v1418
      %v1451 = vmax.f32 %v1387, %v1419
      %v1452 = vmax.f32 %v1388, %v1420
      %v1453 = vmax.f32 %v1389, %v1421
      %v1454 = vmax.f32 %v1390, %v1422
      %v1455 = vmax.f32 %v1391, %v1423
      %v1456 = vmax.f32 %v1392, %v1424
      %v1457 = vmax.f32 %v1393, %v1425
      %v1458 = vmax.f32 %v1394, %v1426
      %v1459 = vmax.f32 %v1395, %v1427
      %v1460 = vmax.f32 %v1396, %v1428
      %v1461 = vmax.f32 %v1397, %v1429
      %v1462 = vmax.f32 %v1398, %v1430
      %v1463 = vmax.f32 %v1399, %v1431
      %v1464 = vmax.f32 %v1400, %v1432
      %v1465 = vmax.f32 %v1401, %v1433
      %v1466 = vmax.f32 %v1402, %v1434
      %v1467 = vmax.f32 %v1403, %v1435
      %v1468 = vld [vmem:[#allocation3 + $0xa] sm:$0xff]
      %v1469 = vld [vmem:[#allocation3 + $0x12] sm:$0xff]
      %v1470 = vld [vmem:[#allocation3 + $0x2a] sm:$0xff]
      %v1471 = vld [vmem:[#allocation3 + $0x32] sm:$0xff]
      %v1472 = vld [vmem:[#allocation3 + $0x4a] sm:$0xff]
      %v1473 = vld [vmem:[#allocation3 + $0x52] sm:$0xff]
      %v1474 = vld [vmem:[#allocation3 + $0x6a] sm:$0xff]
      %v1475 = vld [vmem:[#allocation3 + $0x72] sm:$0xff]
      %v1476 = vld [vmem:[#allocation3 + $0x8a] sm:$0xff]
      %v1477 = vld [vmem:[#allocation3 + $0x92] sm:$0xff]
      %v1478 = vld [vmem:[#allocation3 + $0xaa] sm:$0xff]
      %v1479 = vld [vmem:[#allocation3 + $0xb2] sm:$0xff]
      %v1480 = vld [vmem:[#allocation3 + $0xca] sm:$0xff]
      %v1481 = vld [vmem:[#allocation3 + $0xd2] sm:$0xff]
      %v1482 = vld [vmem:[#allocation3 + $0xea] sm:$0xff]
      %v1483 = vld [vmem:[#allocation3 + $0xf2] sm:$0xff]
      %v1484 = vld [vmem:[#allocation3 + $0x10a] sm:$0xff]
      %v1485 = vld [vmem:[#allocation3 + $0x112] sm:$0xff]
      %v1486 = vld [vmem:[#allocation3 + $0x12a] sm:$0xff]
      %v1487 = vld [vmem:[#allocation3 + $0x132] sm:$0xff]
      %v1488 = vld [vmem:[#allocation3 + $0x14a] sm:$0xff]
      %v1489 = vld [vmem:[#allocation3 + $0x152] sm:$0xff]
      %v1490 = vld [vmem:[#allocation3 + $0x16a] sm:$0xff]
      %v1491 = vld [vmem:[#allocation3 + $0x172] sm:$0xff]
      %v1492 = vld [vmem:[#allocation3 + $0x18a] sm:$0xff]
      %v1493 = vld [vmem:[#allocation3 + $0x192] sm:$0xff]
      %v1494 = vld [vmem:[#allocation3 + $0x1aa] sm:$0xff]
      %v1495 = vld [vmem:[#allocation3 + $0x1b2] sm:$0xff]
      %v1496 = vld [vmem:[#allocation3 + $0x1ca] sm:$0xff]
      %v1497 = vld [vmem:[#allocation3 + $0x1d2] sm:$0xff]
      %v1498 = vld [vmem:[#allocation3 + $0x1ea] sm:$0xff]
      %v1499 = vld [vmem:[#allocation3 + $0x1f2] sm:$0xff]
      %v1500 = vmax.f32 %v1436, %v1468
      %v1501 = vmax.f32 %v1437, %v1469
      %v1502 = vmax.f32 %v1438, %v1470
      %v1503 = vmax.f32 %v1439, %v1471
      %v1504 = vmax.f32 %v1440, %v1472
      %v1505 = vmax.f32 %v1441, %v1473
      %v1506 = vmax.f32 %v1442, %v1474
      %v1507 = vmax.f32 %v1443, %v1475
      %v1508 = vmax.f32 %v1444, %v1476
      %v1509 = vmax.f32 %v1445, %v1477
      %v1510 = vmax.f32 %v1446, %v1478
      %v1511 = vmax.f32 %v1447, %v1479
      %v1512 = vmax.f32 %v1448, %v1480
      %v1513 = vmax.f32 %v1449, %v1481
      %v1514 = vmax.f32 %v1450, %v1482
      %v1515 = vmax.f32 %v1451, %v1483
      %v1516 = vmax.f32 %v1452, %v1484
      %v1517 = vmax.f32 %v1453, %v1485
      %v1518 = vmax.f32 %v1454, %v1486
      %v1519 = vmax.f32 %v1455, %v1487
      %v1520 = vmax.f32 %v1456, %v1488
      %v1521 = vmax.f32 %v1457, %v1489
      %v1522 = vmax.f32 %v1458, %v1490
      %v1523 = vmax.f32 %v1459, %v1491
      %v1524 = vmax.f32 %v1460, %v1492
      %v1525 = vmax.f32 %v1461, %v1493
      %v1526 = vmax.f32 %v1462, %v1494
      %v1527 = vmax.f32 %v1463, %v1495
      %v1528 = vmax.f32 %v1464, %v1496
      %v1529 = vmax.f32 %v1465, %v1497
      %v1530 = vmax.f32 %v1466, %v1498
      %v1531 = vmax.f32 %v1467, %v1499
      %1532 = vst.msk [vmem:[%s888] sm:$0xff] %vm280, %v1500
      %1533 = vst.msk [vmem:[%s888 + $0x8] sm:$0xff] %vm280, %v1501
      %1534 = vst.msk [vmem:[%s888 + $0x10] sm:$0xff] %vm280, %v1502
      %1535 = vst.msk [vmem:[%s888 + $0x18] sm:$0xff] %vm280, %v1503
      %1536 = vst.msk [vmem:[%s888 + $0x20] sm:$0xff] %vm280, %v1504
      %1537 = vst.msk [vmem:[%s888 + $0x28] sm:$0xff] %vm280, %v1505
      %1538 = vst.msk [vmem:[%s888 + $0x30] sm:$0xff] %vm280, %v1506
      %1539 = vst.msk [vmem:[%s888 + $0x38] sm:$0xff] %vm280, %v1507
      %1540 = vst.msk [vmem:[%s888 + $0x40] sm:$0xff] %vm280, %v1508
      %1541 = vst.msk [vmem:[%s888 + $0x48] sm:$0xff] %vm280, %v1509
      %1542 = vst.msk [vmem:[%s888 + $0x50] sm:$0xff] %vm280, %v1510
      %1543 = vst.msk [vmem:[%s888 + $0x58] sm:$0xff] %vm280, %v1511
      %1544 = vst.msk [vmem:[%s888 + $0x60] sm:$0xff] %vm280, %v1512
      %1545 = vst.msk [vmem:[%s888 + $0x68] sm:$0xff] %vm280, %v1513
      %1546 = vst.msk [vmem:[%s888 + $0x70] sm:$0xff] %vm280, %v1514
      %1547 = vst.msk [vmem:[%s888 + $0x78] sm:$0xff] %vm280, %v1515
      %1548 = vst.msk [vmem:[%s888 + $0x80] sm:$0xff] %vm280, %v1516
      %1549 = vst.msk [vmem:[%s888 + $0x88] sm:$0xff] %vm280, %v1517
      %1550 = vst.msk [vmem:[%s888 + $0x90] sm:$0xff] %vm280, %v1518
      %1551 = vst.msk [vmem:[%s888 + $0x98] sm:$0xff] %vm280, %v1519
      %1552 = vst.msk [vmem:[%s888 + $0xa0] sm:$0xff] %vm280, %v1520
      %1553 = vst.msk [vmem:[%s888 + $0xa8] sm:$0xff] %vm280, %v1521
      %1554 = vst.msk [vmem:[%s888 + $0xb0] sm:$0xff] %vm280, %v1522
      %1555 = vst.msk [vmem:[%s888 + $0xb8] sm:$0xff] %vm280, %v1523
      %1556 = vst.msk [vmem:[%s888 + $0xc0] sm:$0xff] %vm280, %v1524
      %1557 = vst.msk [vmem:[%s888 + $0xc8] sm:$0xff] %vm280, %v1525
      %1558 = vst.msk [vmem:[%s888 + $0xd0] sm:$0xff] %vm280, %v1526
      %1559 = vst.msk [vmem:[%s888 + $0xd8] sm:$0xff] %vm280, %v1527
      %1560 = vst.msk [vmem:[%s888 + $0xe0] sm:$0xff] %vm280, %v1528
      %1561 = vst.msk [vmem:[%s888 + $0xe8] sm:$0xff] %vm280, %v1529
      %1562 = vst.msk [vmem:[%s888 + $0xf0] sm:$0xff] %vm280, %v1530
      %1563 = vst.msk [vmem:[%s888 + $0xf8] sm:$0xff] %vm280, %v1531
      %v1564 = vld [vmem:[#allocation2] sm:$0xff]
      %v1565 = vld [vmem:[#allocation2 + $0x8] sm:$0xff]
      %v1566 = vld [vmem:[#allocation2 + $0x10] sm:$0xff]
      %v1567 = vld [vmem:[#allocation2 + $0x18] sm:$0xff]
      %v1568 = vld [vmem:[#allocation2 + $0x20] sm:$0xff]
      %v1569 = vld [vmem:[#allocation2 + $0x28] sm:$0xff]
      %v1570 = vld [vmem:[#allocation2 + $0x30] sm:$0xff]
      %v1571 = vld [vmem:[#allocation2 + $0x38] sm:$0xff]
      %v1572 = vld [vmem:[#allocation2 + $0x40] sm:$0xff]
      %v1573 = vld [vmem:[#allocation2 + $0x48] sm:$0xff]
      %v1574 = vld [vmem:[#allocation2 + $0x50] sm:$0xff]
      %v1575 = vld [vmem:[#allocation2 + $0x58] sm:$0xff]
      %v1576 = vld [vmem:[#allocation2 + $0x60] sm:$0xff]
      %v1577 = vld [vmem:[#allocation2 + $0x68] sm:$0xff]
      %v1578 = vld [vmem:[#allocation2 + $0x70] sm:$0xff]
      %v1579 = vld [vmem:[#allocation2 + $0x78] sm:$0xff]
      %v1580 = vld [vmem:[#allocation2 + $0x80] sm:$0xff]
      %v1581 = vld [vmem:[#allocation2 + $0x88] sm:$0xff]
      %v1582 = vld [vmem:[#allocation2 + $0x90] sm:$0xff]
      %v1583 = vld [vmem:[#allocation2 + $0x98] sm:$0xff]
      %v1584 = vld [vmem:[#allocation2 + $0xa0] sm:$0xff]
      %v1585 = vld [vmem:[#allocation2 + $0xa8] sm:$0xff]
      %v1586 = vld [vmem:[#allocation2 + $0xb0] sm:$0xff]
      %v1587 = vld [vmem:[#allocation2 + $0xb8] sm:$0xff]
      %v1588 = vld [vmem:[#allocation2 + $0xc0] sm:$0xff]
      %v1589 = vld [vmem:[#allocation2 + $0xc8] sm:$0xff]
      %v1590 = vld [vmem:[#allocation2 + $0xd0] sm:$0xff]
      %v1591 = vld [vmem:[#allocation2 + $0xd8] sm:$0xff]
      %v1592 = vld [vmem:[#allocation2 + $0xe0] sm:$0xff]
      %v1593 = vld [vmem:[#allocation2 + $0xe8] sm:$0xff]
      %v1594 = vld [vmem:[#allocation2 + $0xf0] sm:$0xff]
      %v1595 = vld [vmem:[#allocation2 + $0xf8] sm:$0xff]
      %v1596 = vld [vmem:[%s953] sm:$0xff]
      %v1597 = vld [vmem:[%s953 + $0x8] sm:$0xff]
      %v1598 = vld [vmem:[%s953 + $0x10] sm:$0xff]
      %v1599 = vld [vmem:[%s953 + $0x18] sm:$0xff]
      %v1600 = vld [vmem:[%s953 + $0x20] sm:$0xff]
      %v1601 = vld [vmem:[%s953 + $0x28] sm:$0xff]
      %v1602 = vld [vmem:[%s953 + $0x30] sm:$0xff]
      %v1603 = vld [vmem:[%s953 + $0x38] sm:$0xff]
      %v1604 = vld [vmem:[%s953 + $0x40] sm:$0xff]
      %v1605 = vld [vmem:[%s953 + $0x48] sm:$0xff]
      %v1606 = vld [vmem:[%s953 + $0x50] sm:$0xff]
      %v1607 = vld [vmem:[%s953 + $0x58] sm:$0xff]
      %v1608 = vld [vmem:[%s953 + $0x60] sm:$0xff]
      %v1609 = vld [vmem:[%s953 + $0x68] sm:$0xff]
      %v1610 = vld [vmem:[%s953 + $0x70] sm:$0xff]
      %v1611 = vld [vmem:[%s953 + $0x78] sm:$0xff]
      %v1612 = vld [vmem:[%s953 + $0x80] sm:$0xff]
      %v1613 = vld [vmem:[%s953 + $0x88] sm:$0xff]
      %v1614 = vld [vmem:[%s953 + $0x90] sm:$0xff]
      %v1615 = vld [vmem:[%s953 + $0x98] sm:$0xff]
      %v1616 = vld [vmem:[%s953 + $0xa0] sm:$0xff]
      %v1617 = vld [vmem:[%s953 + $0xa8] sm:$0xff]
      %v1618 = vld [vmem:[%s953 + $0xb0] sm:$0xff]
      %v1619 = vld [vmem:[%s953 + $0xb8] sm:$0xff]
      %v1620 = vld [vmem:[%s953 + $0xc0] sm:$0xff]
      %v1621 = vld [vmem:[%s953 + $0xc8] sm:$0xff]
      %v1622 = vld [vmem:[%s953 + $0xd0] sm:$0xff]
      %v1623 = vld [vmem:[%s953 + $0xd8] sm:$0xff]
      %v1624 = vld [vmem:[%s953 + $0xe0] sm:$0xff]
      %v1625 = vld [vmem:[%s953 + $0xe8] sm:$0xff]
      %v1626 = vld [vmem:[%s953 + $0xf0] sm:$0xff]
      %v1627 = vld [vmem:[%s953 + $0xf8] sm:$0xff]
      %v1628 = vmax.f32 %v1564, %v1596
      %v1629 = vmax.f32 %v1565, %v1597
      %v1630 = vmax.f32 %v1566, %v1598
      %v1631 = vmax.f32 %v1567, %v1599
      %v1632 = vmax.f32 %v1568, %v1600
      %v1633 = vmax.f32 %v1569, %v1601
      %v1634 = vmax.f32 %v1570, %v1602
      %v1635 = vmax.f32 %v1571, %v1603
      %v1636 = vmax.f32 %v1572, %v1604
      %v1637 = vmax.f32 %v1573, %v1605
      %v1638 = vmax.f32 %v1574, %v1606
      %v1639 = vmax.f32 %v1575, %v1607
      %v1640 = vmax.f32 %v1576, %v1608
      %v1641 = vmax.f32 %v1577, %v1609
      %v1642 = vmax.f32 %v1578, %v1610
      %v1643 = vmax.f32 %v1579, %v1611
      %v1644 = vmax.f32 %v1580, %v1612
      %v1645 = vmax.f32 %v1581, %v1613
      %v1646 = vmax.f32 %v1582, %v1614
      %v1647 = vmax.f32 %v1583, %v1615
      %v1648 = vmax.f32 %v1584, %v1616
      %v1649 = vmax.f32 %v1585, %v1617
      %v1650 = vmax.f32 %v1586, %v1618
      %v1651 = vmax.f32 %v1587, %v1619
      %v1652 = vmax.f32 %v1588, %v1620
      %v1653 = vmax.f32 %v1589, %v1621
      %v1654 = vmax.f32 %v1590, %v1622
      %v1655 = vmax.f32 %v1591, %v1623
      %v1656 = vmax.f32 %v1592, %v1624
      %v1657 = vmax.f32 %v1593, %v1625
      %v1658 = vmax.f32 %v1594, %v1626
      %v1659 = vmax.f32 %v1595, %v1627
      %v1660 = vld [vmem:[%s888] sm:$0xff]
      %v1661 = vld [vmem:[%s888 + $0x8] sm:$0xff]
      %v1662 = vld [vmem:[%s888 + $0x10] sm:$0xff]
      %v1663 = vld [vmem:[%s888 + $0x18] sm:$0xff]
      %v1664 = vld [vmem:[%s888 + $0x20] sm:$0xff]
      %v1665 = vld [vmem:[%s888 + $0x28] sm:$0xff]
      %v1666 = vld [vmem:[%s888 + $0x30] sm:$0xff]
      %v1667 = vld [vmem:[%s888 + $0x38] sm:$0xff]
      %v1668 = vld [vmem:[%s888 + $0x40] sm:$0xff]
      %v1669 = vld [vmem:[%s888 + $0x48] sm:$0xff]
      %v1670 = vld [vmem:[%s888 + $0x50] sm:$0xff]
      %v1671 = vld [vmem:[%s888 + $0x58] sm:$0xff]
      %v1672 = vld [vmem:[%s888 + $0x60] sm:$0xff]
      %v1673 = vld [vmem:[%s888 + $0x68] sm:$0xff]
      %v1674 = vld [vmem:[%s888 + $0x70] sm:$0xff]
      %v1675 = vld [vmem:[%s888 + $0x78] sm:$0xff]
      %v1676 = vld [vmem:[%s888 + $0x80] sm:$0xff]
      %v1677 = vld [vmem:[%s888 + $0x88] sm:$0xff]
      %v1678 = vld [vmem:[%s888 + $0x90] sm:$0xff]
      %v1679 = vld [vmem:[%s888 + $0x98] sm:$0xff]
      %v1680 = vld [vmem:[%s888 + $0xa0] sm:$0xff]
      %v1681 = vld [vmem:[%s888 + $0xa8] sm:$0xff]
      %v1682 = vld [vmem:[%s888 + $0xb0] sm:$0xff]
      %v1683 = vld [vmem:[%s888 + $0xb8] sm:$0xff]
      %v1684 = vld [vmem:[%s888 + $0xc0] sm:$0xff]
      %v1685 = vld [vmem:[%s888 + $0xc8] sm:$0xff]
      %v1686 = vld [vmem:[%s888 + $0xd0] sm:$0xff]
      %v1687 = vld [vmem:[%s888 + $0xd8] sm:$0xff]
      %v1688 = vld [vmem:[%s888 + $0xe0] sm:$0xff]
      %v1689 = vld [vmem:[%s888 + $0xe8] sm:$0xff]
      %v1690 = vld [vmem:[%s888 + $0xf0] sm:$0xff]
      %v1691 = vld [vmem:[%s888 + $0xf8] sm:$0xff]
      %v1692 = vmax.f32 %v1628, %v1660
      %v1693 = vmax.f32 %v1629, %v1661
      %v1694 = vmax.f32 %v1630, %v1662
      %v1695 = vmax.f32 %v1631, %v1663
      %v1696 = vmax.f32 %v1632, %v1664
      %v1697 = vmax.f32 %v1633, %v1665
      %v1698 = vmax.f32 %v1634, %v1666
      %v1699 = vmax.f32 %v1635, %v1667
      %v1700 = vmax.f32 %v1636, %v1668
      %v1701 = vmax.f32 %v1637, %v1669
      %v1702 = vmax.f32 %v1638, %v1670
      %v1703 = vmax.f32 %v1639, %v1671
      %v1704 = vmax.f32 %v1640, %v1672
      %v1705 = vmax.f32 %v1641, %v1673
      %v1706 = vmax.f32 %v1642, %v1674
      %v1707 = vmax.f32 %v1643, %v1675
      %v1708 = vmax.f32 %v1644, %v1676
      %v1709 = vmax.f32 %v1645, %v1677
      %v1710 = vmax.f32 %v1646, %v1678
      %v1711 = vmax.f32 %v1647, %v1679
      %v1712 = vmax.f32 %v1648, %v1680
      %v1713 = vmax.f32 %v1649, %v1681
      %v1714 = vmax.f32 %v1650, %v1682
      %v1715 = vmax.f32 %v1651, %v1683
      %v1716 = vmax.f32 %v1652, %v1684
      %v1717 = vmax.f32 %v1653, %v1685
      %v1718 = vmax.f32 %v1654, %v1686
      %v1719 = vmax.f32 %v1655, %v1687
      %v1720 = vmax.f32 %v1656, %v1688
      %v1721 = vmax.f32 %v1657, %v1689
      %v1722 = vmax.f32 %v1658, %v1690
      %v1723 = vmax.f32 %v1659, %v1691
      %v1724 = vld [vmem:[%s1082] sm:$0xff]
      %v1725 = vld [vmem:[%s1082 + $0x8] sm:$0xff]
      %v1726 = vld [vmem:[%s1082 + $0x10] sm:$0xff]
      %v1727 = vld [vmem:[%s1082 + $0x18] sm:$0xff]
      %v1728 = vld [vmem:[%s1082 + $0x20] sm:$0xff]
      %v1729 = vld [vmem:[%s1082 + $0x28] sm:$0xff]
      %v1730 = vld [vmem:[%s1082 + $0x30] sm:$0xff]
      %v1731 = vld [vmem:[%s1082 + $0x38] sm:$0xff]
      %v1732 = vld [vmem:[%s1082 + $0x40] sm:$0xff]
      %v1733 = vld [vmem:[%s1082 + $0x48] sm:$0xff]
      %v1734 = vld [vmem:[%s1082 + $0x50] sm:$0xff]
      %v1735 = vld [vmem:[%s1082 + $0x58] sm:$0xff]
      %v1736 = vld [vmem:[%s1082 + $0x60] sm:$0xff]
      %v1737 = vld [vmem:[%s1082 + $0x68] sm:$0xff]
      %v1738 = vld [vmem:[%s1082 + $0x70] sm:$0xff]
      %v1739 = vld [vmem:[%s1082 + $0x78] sm:$0xff]
      %v1740 = vld [vmem:[%s1082 + $0x80] sm:$0xff]
      %v1741 = vld [vmem:[%s1082 + $0x88] sm:$0xff]
      %v1742 = vld [vmem:[%s1082 + $0x90] sm:$0xff]
      %v1743 = vld [vmem:[%s1082 + $0x98] sm:$0xff]
      %v1744 = vld [vmem:[%s1082 + $0xa0] sm:$0xff]
      %v1745 = vld [vmem:[%s1082 + $0xa8] sm:$0xff]
      %v1746 = vld [vmem:[%s1082 + $0xb0] sm:$0xff]
      %v1747 = vld [vmem:[%s1082 + $0xb8] sm:$0xff]
      %v1748 = vld [vmem:[%s1082 + $0xc0] sm:$0xff]
      %v1749 = vld [vmem:[%s1082 + $0xc8] sm:$0xff]
      %v1750 = vld [vmem:[%s1082 + $0xd0] sm:$0xff]
      %v1751 = vld [vmem:[%s1082 + $0xd8] sm:$0xff]
      %v1752 = vld [vmem:[%s1082 + $0xe0] sm:$0xff]
      %v1753 = vld [vmem:[%s1082 + $0xe8] sm:$0xff]
      %v1754 = vld [vmem:[%s1082 + $0xf0] sm:$0xff]
      %v1755 = vld [vmem:[%s1082 + $0xf8] sm:$0xff]
      %v1756 = vmax.f32 %v1692, %v1724
      %v1757 = vmax.f32 %v1693, %v1725
      %v1758 = vmax.f32 %v1694, %v1726
      %v1759 = vmax.f32 %v1695, %v1727
      %v1760 = vmax.f32 %v1696, %v1728
      %v1761 = vmax.f32 %v1697, %v1729
      %v1762 = vmax.f32 %v1698, %v1730
      %v1763 = vmax.f32 %v1699, %v1731
      %v1764 = vmax.f32 %v1700, %v1732
      %v1765 = vmax.f32 %v1701, %v1733
      %v1766 = vmax.f32 %v1702, %v1734
      %v1767 = vmax.f32 %v1703, %v1735
      %v1768 = vmax.f32 %v1704, %v1736
      %v1769 = vmax.f32 %v1705, %v1737
      %v1770 = vmax.f32 %v1706, %v1738
      %v1771 = vmax.f32 %v1707, %v1739
      %v1772 = vmax.f32 %v1708, %v1740
      %v1773 = vmax.f32 %v1709, %v1741
      %v1774 = vmax.f32 %v1710, %v1742
      %v1775 = vmax.f32 %v1711, %v1743
      %v1776 = vmax.f32 %v1712, %v1744
      %v1777 = vmax.f32 %v1713, %v1745
      %v1778 = vmax.f32 %v1714, %v1746
      %v1779 = vmax.f32 %v1715, %v1747
      %v1780 = vmax.f32 %v1716, %v1748
      %v1781 = vmax.f32 %v1717, %v1749
      %v1782 = vmax.f32 %v1718, %v1750
      %v1783 = vmax.f32 %v1719, %v1751
      %v1784 = vmax.f32 %v1720, %v1752
      %v1785 = vmax.f32 %v1721, %v1753
      %v1786 = vmax.f32 %v1722, %v1754
      %v1787 = vmax.f32 %v1723, %v1755
      %v1788 = vld [vmem:[%s1147] sm:$0xff]
      %v1789 = vld [vmem:[%s1147 + $0x8] sm:$0xff]
      %v1790 = vld [vmem:[%s1147 + $0x10] sm:$0xff]
      %v1791 = vld [vmem:[%s1147 + $0x18] sm:$0xff]
      %v1792 = vld [vmem:[%s1147 + $0x20] sm:$0xff]
      %v1793 = vld [vmem:[%s1147 + $0x28] sm:$0xff]
      %v1794 = vld [vmem:[%s1147 + $0x30] sm:$0xff]
      %v1795 = vld [vmem:[%s1147 + $0x38] sm:$0xff]
      %v1796 = vld [vmem:[%s1147 + $0x40] sm:$0xff]
      %v1797 = vld [vmem:[%s1147 + $0x48] sm:$0xff]
      %v1798 = vld [vmem:[%s1147 + $0x50] sm:$0xff]
      %v1799 = vld [vmem:[%s1147 + $0x58] sm:$0xff]
      %v1800 = vld [vmem:[%s1147 + $0x60] sm:$0xff]
      %v1801 = vld [vmem:[%s1147 + $0x68] sm:$0xff]
      %v1802 = vld [vmem:[%s1147 + $0x70] sm:$0xff]
      %v1803 = vld [vmem:[%s1147 + $0x78] sm:$0xff]
      %v1804 = vld [vmem:[%s1147 + $0x80] sm:$0xff]
      %v1805 = vld [vmem:[%s1147 + $0x88] sm:$0xff]
      %v1806 = vld [vmem:[%s1147 + $0x90] sm:$0xff]
      %v1807 = vld [vmem:[%s1147 + $0x98] sm:$0xff]
      %v1808 = vld [vmem:[%s1147 + $0xa0] sm:$0xff]
      %v1809 = vld [vmem:[%s1147 + $0xa8] sm:$0xff]
      %v1810 = vld [vmem:[%s1147 + $0xb0] sm:$0xff]
      %v1811 = vld [vmem:[%s1147 + $0xb8] sm:$0xff]
      %v1812 = vld [vmem:[%s1147 + $0xc0] sm:$0xff]
      %v1813 = vld [vmem:[%s1147 + $0xc8] sm:$0xff]
      %v1814 = vld [vmem:[%s1147 + $0xd0] sm:$0xff]
      %v1815 = vld [vmem:[%s1147 + $0xd8] sm:$0xff]
      %v1816 = vld [vmem:[%s1147 + $0xe0] sm:$0xff]
      %v1817 = vld [vmem:[%s1147 + $0xe8] sm:$0xff]
      %v1818 = vld [vmem:[%s1147 + $0xf0] sm:$0xff]
      %v1819 = vld [vmem:[%s1147 + $0xf8] sm:$0xff]
      %v1820 = vmax.f32 %v1756, %v1788
      %v1821 = vmax.f32 %v1757, %v1789
      %v1822 = vmax.f32 %v1758, %v1790
      %v1823 = vmax.f32 %v1759, %v1791
      %v1824 = vmax.f32 %v1760, %v1792
      %v1825 = vmax.f32 %v1761, %v1793
      %v1826 = vmax.f32 %v1762, %v1794
      %v1827 = vmax.f32 %v1763, %v1795
      %v1828 = vmax.f32 %v1764, %v1796
      %v1829 = vmax.f32 %v1765, %v1797
      %v1830 = vmax.f32 %v1766, %v1798
      %v1831 = vmax.f32 %v1767, %v1799
      %v1832 = vmax.f32 %v1768, %v1800
      %v1833 = vmax.f32 %v1769, %v1801
      %v1834 = vmax.f32 %v1770, %v1802
      %v1835 = vmax.f32 %v1771, %v1803
      %v1836 = vmax.f32 %v1772, %v1804
      %v1837 = vmax.f32 %v1773, %v1805
      %v1838 = vmax.f32 %v1774, %v1806
      %v1839 = vmax.f32 %v1775, %v1807
      %v1840 = vmax.f32 %v1776, %v1808
      %v1841 = vmax.f32 %v1777, %v1809
      %v1842 = vmax.f32 %v1778, %v1810
      %v1843 = vmax.f32 %v1779, %v1811
      %v1844 = vmax.f32 %v1780, %v1812
      %v1845 = vmax.f32 %v1781, %v1813
      %v1846 = vmax.f32 %v1782, %v1814
      %v1847 = vmax.f32 %v1783, %v1815
      %v1848 = vmax.f32 %v1784, %v1816
      %v1849 = vmax.f32 %v1785, %v1817
      %v1850 = vmax.f32 %v1786, %v1818
      %v1851 = vmax.f32 %v1787, %v1819
      %1852 = vst.msk [vmem:[#allocation3 + $0x8] sm:$0xff] %vm280, %v1820
      %1853 = vst.msk [vmem:[#allocation3 + $0x10] sm:$0xff] %vm280, %v1821
      %1854 = vst.msk [vmem:[#allocation3 + $0x28] sm:$0xff] %vm280, %v1822
      %1855 = vst.msk [vmem:[#allocation3 + $0x30] sm:$0xff] %vm280, %v1823
      %1856 = vst.msk [vmem:[#allocation3 + $0x48] sm:$0xff] %vm280, %v1824
      %1857 = vst.msk [vmem:[#allocation3 + $0x50] sm:$0xff] %vm280, %v1825
      %1858 = vst.msk [vmem:[#allocation3 + $0x68] sm:$0xff] %vm280, %v1826
      %1859 = vst.msk [vmem:[#allocation3 + $0x70] sm:$0xff] %vm280, %v1827
      %1860 = vst.msk [vmem:[#allocation3 + $0x88] sm:$0xff] %vm280, %v1828
      %1861 = vst.msk [vmem:[#allocation3 + $0x90] sm:$0xff] %vm280, %v1829
      %1862 = vst.msk [vmem:[#allocation3 + $0xa8] sm:$0xff] %vm280, %v1830
      %1863 = vst.msk [vmem:[#allocation3 + $0xb0] sm:$0xff] %vm280, %v1831
      %1864 = vst.msk [vmem:[#allocation3 + $0xc8] sm:$0xff] %vm280, %v1832
      %1865 = vst.msk [vmem:[#allocation3 + $0xd0] sm:$0xff] %vm280, %v1833
      %1866 = vst.msk [vmem:[#allocation3 + $0xe8] sm:$0xff] %vm280, %v1834
      %1867 = vst.msk [vmem:[#allocation3 + $0xf0] sm:$0xff] %vm280, %v1835
      %1868 = vst.msk [vmem:[#allocation3 + $0x108] sm:$0xff] %vm280, %v1836
      %1869 = vst.msk [vmem:[#allocation3 + $0x110] sm:$0xff] %vm280, %v1837
      %1870 = vst.msk [vmem:[#allocation3 + $0x128] sm:$0xff] %vm280, %v1838
      %1871 = vst.msk [vmem:[#allocation3 + $0x130] sm:$0xff] %vm280, %v1839
      %1872 = vst.msk [vmem:[#allocation3 + $0x148] sm:$0xff] %vm280, %v1840
      %1873 = vst.msk [vmem:[#allocation3 + $0x150] sm:$0xff] %vm280, %v1841
      %1874 = vst.msk [vmem:[#allocation3 + $0x168] sm:$0xff] %vm280, %v1842
      %1875 = vst.msk [vmem:[#allocation3 + $0x170] sm:$0xff] %vm280, %v1843
      %1876 = vst.msk [vmem:[#allocation3 + $0x188] sm:$0xff] %vm280, %v1844
      %1877 = vst.msk [vmem:[#allocation3 + $0x190] sm:$0xff] %vm280, %v1845
      %1878 = vst.msk [vmem:[#allocation3 + $0x1a8] sm:$0xff] %vm280, %v1846
      %1879 = vst.msk [vmem:[#allocation3 + $0x1b0] sm:$0xff] %vm280, %v1847
      %1880 = vst.msk [vmem:[#allocation3 + $0x1c8] sm:$0xff] %vm280, %v1848
      %1881 = vst.msk [vmem:[#allocation3 + $0x1d0] sm:$0xff] %vm280, %v1849
      %1882 = vst.msk [vmem:[#allocation3 + $0x1e8] sm:$0xff] %vm280, %v1850
      %1883 = vst.msk [vmem:[#allocation3 + $0x1f0] sm:$0xff] %vm280, %v1851
      %v1884 = vld [vmem:[#allocation3 + $0x6] sm:$0xff]
      %v1885 = vld [vmem:[#allocation3 + $0xe] sm:$0xff]
      %v1886 = vld [vmem:[#allocation3 + $0x26] sm:$0xff]
      %v1887 = vld [vmem:[#allocation3 + $0x2e] sm:$0xff]
      %v1888 = vld [vmem:[#allocation3 + $0x46] sm:$0xff]
      %v1889 = vld [vmem:[#allocation3 + $0x4e] sm:$0xff]
      %v1890 = vld [vmem:[#allocation3 + $0x66] sm:$0xff]
      %v1891 = vld [vmem:[#allocation3 + $0x6e] sm:$0xff]
      %v1892 = vld [vmem:[#allocation3 + $0x86] sm:$0xff]
      %v1893 = vld [vmem:[#allocation3 + $0x8e] sm:$0xff]
      %v1894 = vld [vmem:[#allocation3 + $0xa6] sm:$0xff]
      %v1895 = vld [vmem:[#allocation3 + $0xae] sm:$0xff]
      %v1896 = vld [vmem:[#allocation3 + $0xc6] sm:$0xff]
      %v1897 = vld [vmem:[#allocation3 + $0xce] sm:$0xff]
      %v1898 = vld [vmem:[#allocation3 + $0xe6] sm:$0xff]
      %v1899 = vld [vmem:[#allocation3 + $0xee] sm:$0xff]
      %v1900 = vld [vmem:[#allocation3 + $0x106] sm:$0xff]
      %v1901 = vld [vmem:[#allocation3 + $0x10e] sm:$0xff]
      %v1902 = vld [vmem:[#allocation3 + $0x126] sm:$0xff]
      %v1903 = vld [vmem:[#allocation3 + $0x12e] sm:$0xff]
      %v1904 = vld [vmem:[#allocation3 + $0x146] sm:$0xff]
      %v1905 = vld [vmem:[#allocation3 + $0x14e] sm:$0xff]
      %v1906 = vld [vmem:[#allocation3 + $0x166] sm:$0xff]
      %v1907 = vld [vmem:[#allocation3 + $0x16e] sm:$0xff]
      %v1908 = vld [vmem:[#allocation3 + $0x186] sm:$0xff]
      %v1909 = vld [vmem:[#allocation3 + $0x18e] sm:$0xff]
      %v1910 = vld [vmem:[#allocation3 + $0x1a6] sm:$0xff]
      %v1911 = vld [vmem:[#allocation3 + $0x1ae] sm:$0xff]
      %v1912 = vld [vmem:[#allocation3 + $0x1c6] sm:$0xff]
      %v1913 = vld [vmem:[#allocation3 + $0x1ce] sm:$0xff]
      %v1914 = vld [vmem:[#allocation3 + $0x1e6] sm:$0xff]
      %v1915 = vld [vmem:[#allocation3 + $0x1ee] sm:$0xff]
      %v1916 = vld [vmem:[#allocation3 + $0x7] sm:$0xff]
      %v1917 = vld [vmem:[#allocation3 + $0xf] sm:$0xff]
      %v1918 = vld [vmem:[#allocation3 + $0x27] sm:$0xff]
      %v1919 = vld [vmem:[#allocation3 + $0x2f] sm:$0xff]
      %v1920 = vld [vmem:[#allocation3 + $0x47] sm:$0xff]
      %v1921 = vld [vmem:[#allocation3 + $0x4f] sm:$0xff]
      %v1922 = vld [vmem:[#allocation3 + $0x67] sm:$0xff]
      %v1923 = vld [vmem:[#allocation3 + $0x6f] sm:$0xff]
      %v1924 = vld [vmem:[#allocation3 + $0x87] sm:$0xff]
      %v1925 = vld [vmem:[#allocation3 + $0x8f] sm:$0xff]
      %v1926 = vld [vmem:[#allocation3 + $0xa7] sm:$0xff]
      %v1927 = vld [vmem:[#allocation3 + $0xaf] sm:$0xff]
      %v1928 = vld [vmem:[#allocation3 + $0xc7] sm:$0xff]
      %v1929 = vld [vmem:[#allocation3 + $0xcf] sm:$0xff]
      %v1930 = vld [vmem:[#allocation3 + $0xe7] sm:$0xff]
      %v1931 = vld [vmem:[#allocation3 + $0xef] sm:$0xff]
      %v1932 = vld [vmem:[#allocation3 + $0x107] sm:$0xff]
      %v1933 = vld [vmem:[#allocation3 + $0x10f] sm:$0xff]
      %v1934 = vld [vmem:[#allocation3 + $0x127] sm:$0xff]
      %v1935 = vld [vmem:[#allocation3 + $0x12f] sm:$0xff]
      %v1936 = vld [vmem:[#allocation3 + $0x147] sm:$0xff]
      %v1937 = vld [vmem:[#allocation3 + $0x14f] sm:$0xff]
      %v1938 = vld [vmem:[#allocation3 + $0x167] sm:$0xff]
      %v1939 = vld [vmem:[#allocation3 + $0x16f] sm:$0xff]
      %v1940 = vld [vmem:[#allocation3 + $0x187] sm:$0xff]
      %v1941 = vld [vmem:[#allocation3 + $0x18f] sm:$0xff]
      %v1942 = vld [vmem:[#allocation3 + $0x1a7] sm:$0xff]
      %v1943 = vld [vmem:[#allocation3 + $0x1af] sm:$0xff]
      %v1944 = vld [vmem:[#allocation3 + $0x1c7] sm:$0xff]
      %v1945 = vld [vmem:[#allocation3 + $0x1cf] sm:$0xff]
      %v1946 = vld [vmem:[#allocation3 + $0x1e7] sm:$0xff]
      %v1947 = vld [vmem:[#allocation3 + $0x1ef] sm:$0xff]
      %v1948 = vmax.f32 %v1884, %v1916
      %v1949 = vmax.f32 %v1885, %v1917
      %v1950 = vmax.f32 %v1886, %v1918
      %v1951 = vmax.f32 %v1887, %v1919
      %v1952 = vmax.f32 %v1888, %v1920
      %v1953 = vmax.f32 %v1889, %v1921
      %v1954 = vmax.f32 %v1890, %v1922
      %v1955 = vmax.f32 %v1891, %v1923
      %v1956 = vmax.f32 %v1892, %v1924
      %v1957 = vmax.f32 %v1893, %v1925
      %v1958 = vmax.f32 %v1894, %v1926
      %v1959 = vmax.f32 %v1895, %v1927
      %v1960 = vmax.f32 %v1896, %v1928
      %v1961 = vmax.f32 %v1897, %v1929
      %v1962 = vmax.f32 %v1898, %v1930
      %v1963 = vmax.f32 %v1899, %v1931
      %v1964 = vmax.f32 %v1900, %v1932
      %v1965 = vmax.f32 %v1901, %v1933
      %v1966 = vmax.f32 %v1902, %v1934
      %v1967 = vmax.f32 %v1903, %v1935
      %v1968 = vmax.f32 %v1904, %v1936
      %v1969 = vmax.f32 %v1905, %v1937
      %v1970 = vmax.f32 %v1906, %v1938
      %v1971 = vmax.f32 %v1907, %v1939
      %v1972 = vmax.f32 %v1908, %v1940
      %v1973 = vmax.f32 %v1909, %v1941
      %v1974 = vmax.f32 %v1910, %v1942
      %v1975 = vmax.f32 %v1911, %v1943
      %v1976 = vmax.f32 %v1912, %v1944
      %v1977 = vmax.f32 %v1913, %v1945
      %v1978 = vmax.f32 %v1914, %v1946
      %v1979 = vmax.f32 %v1915, %v1947
      %v1980 = vld [vmem:[#allocation3 + $0x8] sm:$0xff]
      %v1981 = vld [vmem:[#allocation3 + $0x10] sm:$0xff]
      %v1982 = vld [vmem:[#allocation3 + $0x28] sm:$0xff]
      %v1983 = vld [vmem:[#allocation3 + $0x30] sm:$0xff]
      %v1984 = vld [vmem:[#allocation3 + $0x48] sm:$0xff]
      %v1985 = vld [vmem:[#allocation3 + $0x50] sm:$0xff]
      %v1986 = vld [vmem:[#allocation3 + $0x68] sm:$0xff]
      %v1987 = vld [vmem:[#allocation3 + $0x70] sm:$0xff]
      %v1988 = vld [vmem:[#allocation3 + $0x88] sm:$0xff]
      %v1989 = vld [vmem:[#allocation3 + $0x90] sm:$0xff]
      %v1990 = vld [vmem:[#allocation3 + $0xa8] sm:$0xff]
      %v1991 = vld [vmem:[#allocation3 + $0xb0] sm:$0xff]
      %v1992 = vld [vmem:[#allocation3 + $0xc8] sm:$0xff]
      %v1993 = vld [vmem:[#allocation3 + $0xd0] sm:$0xff]
      %v1994 = vld [vmem:[#allocation3 + $0xe8] sm:$0xff]
      %v1995 = vld [vmem:[#allocation3 + $0xf0] sm:$0xff]
      %v1996 = vld [vmem:[#allocation3 + $0x108] sm:$0xff]
      %v1997 = vld [vmem:[#allocation3 + $0x110] sm:$0xff]
      %v1998 = vld [vmem:[#allocation3 + $0x128] sm:$0xff]
      %v1999 = vld [vmem:[#allocation3 + $0x130] sm:$0xff]
      %v2000 = vld [vmem:[#allocation3 + $0x148] sm:$0xff]
      %v2001 = vld [vmem:[#allocation3 + $0x150] sm:$0xff]
      %v2002 = vld [vmem:[#allocation3 + $0x168] sm:$0xff]
      %v2003 = vld [vmem:[#allocation3 + $0x170] sm:$0xff]
      %v2004 = vld [vmem:[#allocation3 + $0x188] sm:$0xff]
      %v2005 = vld [vmem:[#allocation3 + $0x190] sm:$0xff]
      %v2006 = vld [vmem:[#allocation3 + $0x1a8] sm:$0xff]
      %v2007 = vld [vmem:[#allocation3 + $0x1b0] sm:$0xff]
      %v2008 = vld [vmem:[#allocation3 + $0x1c8] sm:$0xff]
      %v2009 = vld [vmem:[#allocation3 + $0x1d0] sm:$0xff]
      %v2010 = vld [vmem:[#allocation3 + $0x1e8] sm:$0xff]
      %v2011 = vld [vmem:[#allocation3 + $0x1f0] sm:$0xff]
      %v2012 = vmax.f32 %v1948, %v1980
      %v2013 = vmax.f32 %v1949, %v1981
      %v2014 = vmax.f32 %v1950, %v1982
      %v2015 = vmax.f32 %v1951, %v1983
      %v2016 = vmax.f32 %v1952, %v1984
      %v2017 = vmax.f32 %v1953, %v1985
      %v2018 = vmax.f32 %v1954, %v1986
      %v2019 = vmax.f32 %v1955, %v1987
      %v2020 = vmax.f32 %v1956, %v1988
      %v2021 = vmax.f32 %v1957, %v1989
      %v2022 = vmax.f32 %v1958, %v1990
      %v2023 = vmax.f32 %v1959, %v1991
      %v2024 = vmax.f32 %v1960, %v1992
      %v2025 = vmax.f32 %v1961, %v1993
      %v2026 = vmax.f32 %v1962, %v1994
      %v2027 = vmax.f32 %v1963, %v1995
      %v2028 = vmax.f32 %v1964, %v1996
      %v2029 = vmax.f32 %v1965, %v1997
      %v2030 = vmax.f32 %v1966, %v1998
      %v2031 = vmax.f32 %v1967, %v1999
      %v2032 = vmax.f32 %v1968, %v2000
      %v2033 = vmax.f32 %v1969, %v2001
      %v2034 = vmax.f32 %v1970, %v2002
      %v2035 = vmax.f32 %v1971, %v2003
      %v2036 = vmax.f32 %v1972, %v2004
      %v2037 = vmax.f32 %v1973, %v2005
      %v2038 = vmax.f32 %v1974, %v2006
      %v2039 = vmax.f32 %v1975, %v2007
      %v2040 = vmax.f32 %v1976, %v2008
      %v2041 = vmax.f32 %v1977, %v2009
      %v2042 = vmax.f32 %v1978, %v2010
      %v2043 = vmax.f32 %v1979, %v2011
      %v2044 = vld [vmem:[#allocation3 + $0x9] sm:$0xff]
      %v2045 = vld [vmem:[#allocation3 + $0x11] sm:$0xff]
      %v2046 = vld [vmem:[#allocation3 + $0x29] sm:$0xff]
      %v2047 = vld [vmem:[#allocation3 + $0x31] sm:$0xff]
      %v2048 = vld [vmem:[#allocation3 + $0x49] sm:$0xff]
      %v2049 = vld [vmem:[#allocation3 + $0x51] sm:$0xff]
      %v2050 = vld [vmem:[#allocation3 + $0x69] sm:$0xff]
      %v2051 = vld [vmem:[#allocation3 + $0x71] sm:$0xff]
      %v2052 = vld [vmem:[#allocation3 + $0x89] sm:$0xff]
      %v2053 = vld [vmem:[#allocation3 + $0x91] sm:$0xff]
      %v2054 = vld [vmem:[#allocation3 + $0xa9] sm:$0xff]
      %v2055 = vld [vmem:[#allocation3 + $0xb1] sm:$0xff]
      %v2056 = vld [vmem:[#allocation3 + $0xc9] sm:$0xff]
      %v2057 = vld [vmem:[#allocation3 + $0xd1] sm:$0xff]
      %v2058 = vld [vmem:[#allocation3 + $0xe9] sm:$0xff]
      %v2059 = vld [vmem:[#allocation3 + $0xf1] sm:$0xff]
      %v2060 = vld [vmem:[#allocation3 + $0x109] sm:$0xff]
      %v2061 = vld [vmem:[#allocation3 + $0x111] sm:$0xff]
      %v2062 = vld [vmem:[#allocation3 + $0x129] sm:$0xff]
      %v2063 = vld [vmem:[#allocation3 + $0x131] sm:$0xff]
      %v2064 = vld [vmem:[#allocation3 + $0x149] sm:$0xff]
      %v2065 = vld [vmem:[#allocation3 + $0x151] sm:$0xff]
      %v2066 = vld [vmem:[#allocation3 + $0x169] sm:$0xff]
      %v2067 = vld [vmem:[#allocation3 + $0x171] sm:$0xff]
      %v2068 = vld [vmem:[#allocation3 + $0x189] sm:$0xff]
      %v2069 = vld [vmem:[#allocation3 + $0x191] sm:$0xff]
      %v2070 = vld [vmem:[#allocation3 + $0x1a9] sm:$0xff]
      %v2071 = vld [vmem:[#allocation3 + $0x1b1] sm:$0xff]
      %v2072 = vld [vmem:[#allocation3 + $0x1c9] sm:$0xff]
      %v2073 = vld [vmem:[#allocation3 + $0x1d1] sm:$0xff]
      %v2074 = vld [vmem:[#allocation3 + $0x1e9] sm:$0xff]
      %v2075 = vld [vmem:[#allocation3 + $0x1f1] sm:$0xff]
      %v2076 = vmax.f32 %v2012, %v2044
      %v2077 = vmax.f32 %v2013, %v2045
      %v2078 = vmax.f32 %v2014, %v2046
      %v2079 = vmax.f32 %v2015, %v2047
      %v2080 = vmax.f32 %v2016, %v2048
      %v2081 = vmax.f32 %v2017, %v2049
      %v2082 = vmax.f32 %v2018, %v2050
      %v2083 = vmax.f32 %v2019, %v2051
      %v2084 = vmax.f32 %v2020, %v2052
      %v2085 = vmax.f32 %v2021, %v2053
      %v2086 = vmax.f32 %v2022, %v2054
      %v2087 = vmax.f32 %v2023, %v2055
      %v2088 = vmax.f32 %v2024, %v2056
      %v2089 = vmax.f32 %v2025, %v2057
      %v2090 = vmax.f32 %v2026, %v2058
      %v2091 = vmax.f32 %v2027, %v2059
      %v2092 = vmax.f32 %v2028, %v2060
      %v2093 = vmax.f32 %v2029, %v2061
      %v2094 = vmax.f32 %v2030, %v2062
      %v2095 = vmax.f32 %v2031, %v2063
      %v2096 = vmax.f32 %v2032, %v2064
      %v2097 = vmax.f32 %v2033, %v2065
      %v2098 = vmax.f32 %v2034, %v2066
      %v2099 = vmax.f32 %v2035, %v2067
      %v2100 = vmax.f32 %v2036, %v2068
      %v2101 = vmax.f32 %v2037, %v2069
      %v2102 = vmax.f32 %v2038, %v2070
      %v2103 = vmax.f32 %v2039, %v2071
      %v2104 = vmax.f32 %v2040, %v2072
      %v2105 = vmax.f32 %v2041, %v2073
      %v2106 = vmax.f32 %v2042, %v2074
      %v2107 = vmax.f32 %v2043, %v2075
      %v2108 = vld [vmem:[#allocation3 + $0xa] sm:$0xff]
      %v2109 = vld [vmem:[#allocation3 + $0x12] sm:$0xff]
      %v2110 = vld [vmem:[#allocation3 + $0x2a] sm:$0xff]
      %v2111 = vld [vmem:[#allocation3 + $0x32] sm:$0xff]
      %v2112 = vld [vmem:[#allocation3 + $0x4a] sm:$0xff]
      %v2113 = vld [vmem:[#allocation3 + $0x52] sm:$0xff]
      %v2114 = vld [vmem:[#allocation3 + $0x6a] sm:$0xff]
      %v2115 = vld [vmem:[#allocation3 + $0x72] sm:$0xff]
      %v2116 = vld [vmem:[#allocation3 + $0x8a] sm:$0xff]
      %v2117 = vld [vmem:[#allocation3 + $0x92] sm:$0xff]
      %v2118 = vld [vmem:[#allocation3 + $0xaa] sm:$0xff]
      %v2119 = vld [vmem:[#allocation3 + $0xb2] sm:$0xff]
      %v2120 = vld [vmem:[#allocation3 + $0xca] sm:$0xff]
      %v2121 = vld [vmem:[#allocation3 + $0xd2] sm:$0xff]
      %v2122 = vld [vmem:[#allocation3 + $0xea] sm:$0xff]
      %v2123 = vld [vmem:[#allocation3 + $0xf2] sm:$0xff]
      %v2124 = vld [vmem:[#allocation3 + $0x10a] sm:$0xff]
      %v2125 = vld [vmem:[#allocation3 + $0x112] sm:$0xff]
      %v2126 = vld [vmem:[#allocation3 + $0x12a] sm:$0xff]
      %v2127 = vld [vmem:[#allocation3 + $0x132] sm:$0xff]
      %v2128 = vld [vmem:[#allocation3 + $0x14a] sm:$0xff]
      %v2129 = vld [vmem:[#allocation3 + $0x152] sm:$0xff]
      %v2130 = vld [vmem:[#allocation3 + $0x16a] sm:$0xff]
      %v2131 = vld [vmem:[#allocation3 + $0x172] sm:$0xff]
      %v2132 = vld [vmem:[#allocation3 + $0x18a] sm:$0xff]
      %v2133 = vld [vmem:[#allocation3 + $0x192] sm:$0xff]
      %v2134 = vld [vmem:[#allocation3 + $0x1aa] sm:$0xff]
      %v2135 = vld [vmem:[#allocation3 + $0x1b2] sm:$0xff]
      %v2136 = vld [vmem:[#allocation3 + $0x1ca] sm:$0xff]
      %v2137 = vld [vmem:[#allocation3 + $0x1d2] sm:$0xff]
      %v2138 = vld [vmem:[#allocation3 + $0x1ea] sm:$0xff]
      %v2139 = vld [vmem:[#allocation3 + $0x1f2] sm:$0xff]
      %v2140 = vmax.f32 %v2076, %v2108
      %v2141 = vmax.f32 %v2077, %v2109
      %v2142 = vmax.f32 %v2078, %v2110
      %v2143 = vmax.f32 %v2079, %v2111
      %v2144 = vmax.f32 %v2080, %v2112
      %v2145 = vmax.f32 %v2081, %v2113
      %v2146 = vmax.f32 %v2082, %v2114
      %v2147 = vmax.f32 %v2083, %v2115
      %v2148 = vmax.f32 %v2084, %v2116
      %v2149 = vmax.f32 %v2085, %v2117
      %v2150 = vmax.f32 %v2086, %v2118
      %v2151 = vmax.f32 %v2087, %v2119
      %v2152 = vmax.f32 %v2088, %v2120
      %v2153 = vmax.f32 %v2089, %v2121
      %v2154 = vmax.f32 %v2090, %v2122
      %v2155 = vmax.f32 %v2091, %v2123
      %v2156 = vmax.f32 %v2092, %v2124
      %v2157 = vmax.f32 %v2093, %v2125
      %v2158 = vmax.f32 %v2094, %v2126
      %v2159 = vmax.f32 %v2095, %v2127
      %v2160 = vmax.f32 %v2096, %v2128
      %v2161 = vmax.f32 %v2097, %v2129
      %v2162 = vmax.f32 %v2098, %v2130
      %v2163 = vmax.f32 %v2099, %v2131
      %v2164 = vmax.f32 %v2100, %v2132
      %v2165 = vmax.f32 %v2101, %v2133
      %v2166 = vmax.f32 %v2102, %v2134
      %v2167 = vmax.f32 %v2103, %v2135
      %v2168 = vmax.f32 %v2104, %v2136
      %v2169 = vmax.f32 %v2105, %v2137
      %v2170 = vmax.f32 %v2106, %v2138
      %v2171 = vmax.f32 %v2107, %v2139
      %2172 = vst.msk [vmem:[%s888] sm:$0xff] %vm280, %v2140
      %2173 = vst.msk [vmem:[%s888 + $0x8] sm:$0xff] %vm280, %v2141
      %2174 = vst.msk [vmem:[%s888 + $0x10] sm:$0xff] %vm280, %v2142
      %2175 = vst.msk [vmem:[%s888 + $0x18] sm:$0xff] %vm280, %v2143
      %2176 = vst.msk [vmem:[%s888 + $0x20] sm:$0xff] %vm280, %v2144
      %2177 = vst.msk [vmem:[%s888 + $0x28] sm:$0xff] %vm280, %v2145
      %2178 = vst.msk [vmem:[%s888 + $0x30] sm:$0xff] %vm280, %v2146
      %2179 = vst.msk [vmem:[%s888 + $0x38] sm:$0xff] %vm280, %v2147
      %2180 = vst.msk [vmem:[%s888 + $0x40] sm:$0xff] %vm280, %v2148
      %2181 = vst.msk [vmem:[%s888 + $0x48] sm:$0xff] %vm280, %v2149
      %2182 = vst.msk [vmem:[%s888 + $0x50] sm:$0xff] %vm280, %v2150
      %2183 = vst.msk [vmem:[%s888 + $0x58] sm:$0xff] %vm280, %v2151
      %2184 = vst.msk [vmem:[%s888 + $0x60] sm:$0xff] %vm280, %v2152
      %2185 = vst.msk [vmem:[%s888 + $0x68] sm:$0xff] %vm280, %v2153
      %2186 = vst.msk [vmem:[%s888 + $0x70] sm:$0xff] %vm280, %v2154
      %2187 = vst.msk [vmem:[%s888 + $0x78] sm:$0xff] %vm280, %v2155
      %2188 = vst.msk [vmem:[%s888 + $0x80] sm:$0xff] %vm280, %v2156
      %2189 = vst.msk [vmem:[%s888 + $0x88] sm:$0xff] %vm280, %v2157
      %2190 = vst.msk [vmem:[%s888 + $0x90] sm:$0xff] %vm280, %v2158
      %2191 = vst.msk [vmem:[%s888 + $0x98] sm:$0xff] %vm280, %v2159
      %2192 = vst.msk [vmem:[%s888 + $0xa0] sm:$0xff] %vm280, %v2160
      %2193 = vst.msk [vmem:[%s888 + $0xa8] sm:$0xff] %vm280, %v2161
      %2194 = vst.msk [vmem:[%s888 + $0xb0] sm:$0xff] %vm280, %v2162
      %2195 = vst.msk [vmem:[%s888 + $0xb8] sm:$0xff] %vm280, %v2163
      %2196 = vst.msk [vmem:[%s888 + $0xc0] sm:$0xff] %vm280, %v2164
      %2197 = vst.msk [vmem:[%s888 + $0xc8] sm:$0xff] %vm280, %v2165
      %2198 = vst.msk [vmem:[%s888 + $0xd0] sm:$0xff] %vm280, %v2166
      %2199 = vst.msk [vmem:[%s888 + $0xd8] sm:$0xff] %vm280, %v2167
      %2200 = vst.msk [vmem:[%s888 + $0xe0] sm:$0xff] %vm280, %v2168
      %2201 = vst.msk [vmem:[%s888 + $0xe8] sm:$0xff] %vm280, %v2169
      %2202 = vst.msk [vmem:[%s888 + $0xf0] sm:$0xff] %vm280, %v2170
      %2203 = vst.msk [vmem:[%s888 + $0xf8] sm:$0xff] %vm280, %v2171
      %v2204 = vld [vmem:[#allocation2] sm:$0xff]
      %v2205 = vld [vmem:[#allocation2 + $0x8] sm:$0xff]
      %v2206 = vld [vmem:[#allocation2 + $0x10] sm:$0xff]
      %v2207 = vld [vmem:[#allocation2 + $0x18] sm:$0xff]
      %v2208 = vld [vmem:[#allocation2 + $0x20] sm:$0xff]
      %v2209 = vld [vmem:[#allocation2 + $0x28] sm:$0xff]
      %v2210 = vld [vmem:[#allocation2 + $0x30] sm:$0xff]
      %v2211 = vld [vmem:[#allocation2 + $0x38] sm:$0xff]
      %v2212 = vld [vmem:[#allocation2 + $0x40] sm:$0xff]
      %v2213 = vld [vmem:[#allocation2 + $0x48] sm:$0xff]
      %v2214 = vld [vmem:[#allocation2 + $0x50] sm:$0xff]
      %v2215 = vld [vmem:[#allocation2 + $0x58] sm:$0xff]
      %v2216 = vld [vmem:[#allocation2 + $0x60] sm:$0xff]
      %v2217 = vld [vmem:[#allocation2 + $0x68] sm:$0xff]
      %v2218 = vld [vmem:[#allocation2 + $0x70] sm:$0xff]
      %v2219 = vld [vmem:[#allocation2 + $0x78] sm:$0xff]
      %v2220 = vld [vmem:[#allocation2 + $0x80] sm:$0xff]
      %v2221 = vld [vmem:[#allocation2 + $0x88] sm:$0xff]
      %v2222 = vld [vmem:[#allocation2 + $0x90] sm:$0xff]
      %v2223 = vld [vmem:[#allocation2 + $0x98] sm:$0xff]
      %v2224 = vld [vmem:[#allocation2 + $0xa0] sm:$0xff]
      %v2225 = vld [vmem:[#allocation2 + $0xa8] sm:$0xff]
      %v2226 = vld [vmem:[#allocation2 + $0xb0] sm:$0xff]
      %v2227 = vld [vmem:[#allocation2 + $0xb8] sm:$0xff]
      %v2228 = vld [vmem:[#allocation2 + $0xc0] sm:$0xff]
      %v2229 = vld [vmem:[#allocation2 + $0xc8] sm:$0xff]
      %v2230 = vld [vmem:[#allocation2 + $0xd0] sm:$0xff]
      %v2231 = vld [vmem:[#allocation2 + $0xd8] sm:$0xff]
      %v2232 = vld [vmem:[#allocation2 + $0xe0] sm:$0xff]
      %v2233 = vld [vmem:[#allocation2 + $0xe8] sm:$0xff]
      %v2234 = vld [vmem:[#allocation2 + $0xf0] sm:$0xff]
      %v2235 = vld [vmem:[#allocation2 + $0xf8] sm:$0xff]
      %v2236 = vld [vmem:[%s953] sm:$0xff]
      %v2237 = vld [vmem:[%s953 + $0x8] sm:$0xff]
      %v2238 = vld [vmem:[%s953 + $0x10] sm:$0xff]
      %v2239 = vld [vmem:[%s953 + $0x18] sm:$0xff]
      %v2240 = vld [vmem:[%s953 + $0x20] sm:$0xff]
      %v2241 = vld [vmem:[%s953 + $0x28] sm:$0xff]
      %v2242 = vld [vmem:[%s953 + $0x30] sm:$0xff]
      %v2243 = vld [vmem:[%s953 + $0x38] sm:$0xff]
      %v2244 = vld [vmem:[%s953 + $0x40] sm:$0xff]
      %v2245 = vld [vmem:[%s953 + $0x48] sm:$0xff]
      %v2246 = vld [vmem:[%s953 + $0x50] sm:$0xff]
      %v2247 = vld [vmem:[%s953 + $0x58] sm:$0xff]
      %v2248 = vld [vmem:[%s953 + $0x60] sm:$0xff]
      %v2249 = vld [vmem:[%s953 + $0x68] sm:$0xff]
      %v2250 = vld [vmem:[%s953 + $0x70] sm:$0xff]
      %v2251 = vld [vmem:[%s953 + $0x78] sm:$0xff]
      %v2252 = vld [vmem:[%s953 + $0x80] sm:$0xff]
      %v2253 = vld [vmem:[%s953 + $0x88] sm:$0xff]
      %v2254 = vld [vmem:[%s953 + $0x90] sm:$0xff]
      %v2255 = vld [vmem:[%s953 + $0x98] sm:$0xff]
      %v2256 = vld [vmem:[%s953 + $0xa0] sm:$0xff]
      %v2257 = vld [vmem:[%s953 + $0xa8] sm:$0xff]
      %v2258 = vld [vmem:[%s953 + $0xb0] sm:$0xff]
      %v2259 = vld [vmem:[%s953 + $0xb8] sm:$0xff]
      %v2260 = vld [vmem:[%s953 + $0xc0] sm:$0xff]
      %v2261 = vld [vmem:[%s953 + $0xc8] sm:$0xff]
      %v2262 = vld [vmem:[%s953 + $0xd0] sm:$0xff]
      %v2263 = vld [vmem:[%s953 + $0xd8] sm:$0xff]
      %v2264 = vld [vmem:[%s953 + $0xe0] sm:$0xff]
      %v2265 = vld [vmem:[%s953 + $0xe8] sm:$0xff]
      %v2266 = vld [vmem:[%s953 + $0xf0] sm:$0xff]
      %v2267 = vld [vmem:[%s953 + $0xf8] sm:$0xff]
      %v2268 = vmax.f32 %v2204, %v2236
      %v2269 = vmax.f32 %v2205, %v2237
      %v2270 = vmax.f32 %v2206, %v2238
      %v2271 = vmax.f32 %v2207, %v2239
      %v2272 = vmax.f32 %v2208, %v2240
      %v2273 = vmax.f32 %v2209, %v2241
      %v2274 = vmax.f32 %v2210, %v2242
      %v2275 = vmax.f32 %v2211, %v2243
      %v2276 = vmax.f32 %v2212, %v2244
      %v2277 = vmax.f32 %v2213, %v2245
      %v2278 = vmax.f32 %v2214, %v2246
      %v2279 = vmax.f32 %v2215, %v2247
      %v2280 = vmax.f32 %v2216, %v2248
      %v2281 = vmax.f32 %v2217, %v2249
      %v2282 = vmax.f32 %v2218, %v2250
      %v2283 = vmax.f32 %v2219, %v2251
      %v2284 = vmax.f32 %v2220, %v2252
      %v2285 = vmax.f32 %v2221, %v2253
      %v2286 = vmax.f32 %v2222, %v2254
      %v2287 = vmax.f32 %v2223, %v2255
      %v2288 = vmax.f32 %v2224, %v2256
      %v2289 = vmax.f32 %v2225, %v2257
      %v2290 = vmax.f32 %v2226, %v2258
      %v2291 = vmax.f32 %v2227, %v2259
      %v2292 = vmax.f32 %v2228, %v2260
      %v2293 = vmax.f32 %v2229, %v2261
      %v2294 = vmax.f32 %v2230, %v2262
      %v2295 = vmax.f32 %v2231, %v2263
      %v2296 = vmax.f32 %v2232, %v2264
      %v2297 = vmax.f32 %v2233, %v2265
      %v2298 = vmax.f32 %v2234, %v2266
      %v2299 = vmax.f32 %v2235, %v2267
      %v2300 = vld [vmem:[%s888] sm:$0xff]
      %v2301 = vld [vmem:[%s888 + $0x8] sm:$0xff]
      %v2302 = vld [vmem:[%s888 + $0x10] sm:$0xff]
      %v2303 = vld [vmem:[%s888 + $0x18] sm:$0xff]
      %v2304 = vld [vmem:[%s888 + $0x20] sm:$0xff]
      %v2305 = vld [vmem:[%s888 + $0x28] sm:$0xff]
      %v2306 = vld [vmem:[%s888 + $0x30] sm:$0xff]
      %v2307 = vld [vmem:[%s888 + $0x38] sm:$0xff]
      %v2308 = vld [vmem:[%s888 + $0x40] sm:$0xff]
      %v2309 = vld [vmem:[%s888 + $0x48] sm:$0xff]
      %v2310 = vld [vmem:[%s888 + $0x50] sm:$0xff]
      %v2311 = vld [vmem:[%s888 + $0x58] sm:$0xff]
      %v2312 = vld [vmem:[%s888 + $0x60] sm:$0xff]
      %v2313 = vld [vmem:[%s888 + $0x68] sm:$0xff]
      %v2314 = vld [vmem:[%s888 + $0x70] sm:$0xff]
      %v2315 = vld [vmem:[%s888 + $0x78] sm:$0xff]
      %v2316 = vld [vmem:[%s888 + $0x80] sm:$0xff]
      %v2317 = vld [vmem:[%s888 + $0x88] sm:$0xff]
      %v2318 = vld [vmem:[%s888 + $0x90] sm:$0xff]
      %v2319 = vld [vmem:[%s888 + $0x98] sm:$0xff]
      %v2320 = vld [vmem:[%s888 + $0xa0] sm:$0xff]
      %v2321 = vld [vmem:[%s888 + $0xa8] sm:$0xff]
      %v2322 = vld [vmem:[%s888 + $0xb0] sm:$0xff]
      %v2323 = vld [vmem:[%s888 + $0xb8] sm:$0xff]
      %v2324 = vld [vmem:[%s888 + $0xc0] sm:$0xff]
      %v2325 = vld [vmem:[%s888 + $0xc8] sm:$0xff]
      %v2326 = vld [vmem:[%s888 + $0xd0] sm:$0xff]
      %v2327 = vld [vmem:[%s888 + $0xd8] sm:$0xff]
      %v2328 = vld [vmem:[%s888 + $0xe0] sm:$0xff]
      %v2329 = vld [vmem:[%s888 + $0xe8] sm:$0xff]
      %v2330 = vld [vmem:[%s888 + $0xf0] sm:$0xff]
      %v2331 = vld [vmem:[%s888 + $0xf8] sm:$0xff]
      %v2332 = vmax.f32 %v2268, %v2300
      %v2333 = vmax.f32 %v2269, %v2301
      %v2334 = vmax.f32 %v2270, %v2302
      %v2335 = vmax.f32 %v2271, %v2303
      %v2336 = vmax.f32 %v2272, %v2304
      %v2337 = vmax.f32 %v2273, %v2305
      %v2338 = vmax.f32 %v2274, %v2306
      %v2339 = vmax.f32 %v2275, %v2307
      %v2340 = vmax.f32 %v2276, %v2308
      %v2341 = vmax.f32 %v2277, %v2309
      %v2342 = vmax.f32 %v2278, %v2310
      %v2343 = vmax.f32 %v2279, %v2311
      %v2344 = vmax.f32 %v2280, %v2312
      %v2345 = vmax.f32 %v2281, %v2313
      %v2346 = vmax.f32 %v2282, %v2314
      %v2347 = vmax.f32 %v2283, %v2315
      %v2348 = vmax.f32 %v2284, %v2316
      %v2349 = vmax.f32 %v2285, %v2317
      %v2350 = vmax.f32 %v2286, %v2318
      %v2351 = vmax.f32 %v2287, %v2319
      %v2352 = vmax.f32 %v2288, %v2320
      %v2353 = vmax.f32 %v2289, %v2321
      %v2354 = vmax.f32 %v2290, %v2322
      %v2355 = vmax.f32 %v2291, %v2323
      %v2356 = vmax.f32 %v2292, %v2324
      %v2357 = vmax.f32 %v2293, %v2325
      %v2358 = vmax.f32 %v2294, %v2326
      %v2359 = vmax.f32 %v2295, %v2327
      %v2360 = vmax.f32 %v2296, %v2328
      %v2361 = vmax.f32 %v2297, %v2329
      %v2362 = vmax.f32 %v2298, %v2330
      %v2363 = vmax.f32 %v2299, %v2331
      %v2364 = vld [vmem:[%s1082] sm:$0xff]
      %v2365 = vld [vmem:[%s1082 + $0x8] sm:$0xff]
      %v2366 = vld [vmem:[%s1082 + $0x10] sm:$0xff]
      %v2367 = vld [vmem:[%s1082 + $0x18] sm:$0xff]
      %v2368 = vld [vmem:[%s1082 + $0x20] sm:$0xff]
      %v2369 = vld [vmem:[%s1082 + $0x28] sm:$0xff]
      %v2370 = vld [vmem:[%s1082 + $0x30] sm:$0xff]
      %v2371 = vld [vmem:[%s1082 + $0x38] sm:$0xff]
      %v2372 = vld [vmem:[%s1082 + $0x40] sm:$0xff]
      %v2373 = vld [vmem:[%s1082 + $0x48] sm:$0xff]
      %v2374 = vld [vmem:[%s1082 + $0x50] sm:$0xff]
      %v2375 = vld [vmem:[%s1082 + $0x58] sm:$0xff]
      %v2376 = vld [vmem:[%s1082 + $0x60] sm:$0xff]
      %v2377 = vld [vmem:[%s1082 + $0x68] sm:$0xff]
      %v2378 = vld [vmem:[%s1082 + $0x70] sm:$0xff]
      %v2379 = vld [vmem:[%s1082 + $0x78] sm:$0xff]
      %v2380 = vld [vmem:[%s1082 + $0x80] sm:$0xff]
      %v2381 = vld [vmem:[%s1082 + $0x88] sm:$0xff]
      %v2382 = vld [vmem:[%s1082 + $0x90] sm:$0xff]
      %v2383 = vld [vmem:[%s1082 + $0x98] sm:$0xff]
      %v2384 = vld [vmem:[%s1082 + $0xa0] sm:$0xff]
      %v2385 = vld [vmem:[%s1082 + $0xa8] sm:$0xff]
      %v2386 = vld [vmem:[%s1082 + $0xb0] sm:$0xff]
      %v2387 = vld [vmem:[%s1082 + $0xb8] sm:$0xff]
      %v2388 = vld [vmem:[%s1082 + $0xc0] sm:$0xff]
      %v2389 = vld [vmem:[%s1082 + $0xc8] sm:$0xff]
      %v2390 = vld [vmem:[%s1082 + $0xd0] sm:$0xff]
      %v2391 = vld [vmem:[%s1082 + $0xd8] sm:$0xff]
      %v2392 = vld [vmem:[%s1082 + $0xe0] sm:$0xff]
      %v2393 = vld [vmem:[%s1082 + $0xe8] sm:$0xff]
      %v2394 = vld [vmem:[%s1082 + $0xf0] sm:$0xff]
      %v2395 = vld [vmem:[%s1082 + $0xf8] sm:$0xff]
      %v2396 = vmax.f32 %v2332, %v2364
      %v2397 = vmax.f32 %v2333, %v2365
      %v2398 = vmax.f32 %v2334, %v2366
      %v2399 = vmax.f32 %v2335, %v2367
      %v2400 = vmax.f32 %v2336, %v2368
      %v2401 = vmax.f32 %v2337, %v2369
      %v2402 = vmax.f32 %v2338, %v2370
      %v2403 = vmax.f32 %v2339, %v2371
      %v2404 = vmax.f32 %v2340, %v2372
      %v2405 = vmax.f32 %v2341, %v2373
      %v2406 = vmax.f32 %v2342, %v2374
      %v2407 = vmax.f32 %v2343, %v2375
      %v2408 = vmax.f32 %v2344, %v2376
      %v2409 = vmax.f32 %v2345, %v2377
      %v2410 = vmax.f32 %v2346, %v2378
      %v2411 = vmax.f32 %v2347, %v2379
      %v2412 = vmax.f32 %v2348, %v2380
      %v2413 = vmax.f32 %v2349, %v2381
      %v2414 = vmax.f32 %v2350, %v2382
      %v2415 = vmax.f32 %v2351, %v2383
      %v2416 = vmax.f32 %v2352, %v2384
      %v2417 = vmax.f32 %v2353, %v2385
      %v2418 = vmax.f32 %v2354, %v2386
      %v2419 = vmax.f32 %v2355, %v2387
      %v2420 = vmax.f32 %v2356, %v2388
      %v2421 = vmax.f32 %v2357, %v2389
      %v2422 = vmax.f32 %v2358, %v2390
      %v2423 = vmax.f32 %v2359, %v2391
      %v2424 = vmax.f32 %v2360, %v2392
      %v2425 = vmax.f32 %v2361, %v2393
      %v2426 = vmax.f32 %v2362, %v2394
      %v2427 = vmax.f32 %v2363, %v2395
      %v2428 = vld [vmem:[%s1147] sm:$0xff]
      %v2429 = vld [vmem:[%s1147 + $0x8] sm:$0xff]
      %v2430 = vld [vmem:[%s1147 + $0x10] sm:$0xff]
      %v2431 = vld [vmem:[%s1147 + $0x18] sm:$0xff]
      %v2432 = vld [vmem:[%s1147 + $0x20] sm:$0xff]
      %v2433 = vld [vmem:[%s1147 + $0x28] sm:$0xff]
      %v2434 = vld [vmem:[%s1147 + $0x30] sm:$0xff]
      %v2435 = vld [vmem:[%s1147 + $0x38] sm:$0xff]
      %v2436 = vld [vmem:[%s1147 + $0x40] sm:$0xff]
      %v2437 = vld [vmem:[%s1147 + $0x48] sm:$0xff]
      %v2438 = vld [vmem:[%s1147 + $0x50] sm:$0xff]
      %v2439 = vld [vmem:[%s1147 + $0x58] sm:$0xff]
      %v2440 = vld [vmem:[%s1147 + $0x60] sm:$0xff]
      %v2441 = vld [vmem:[%s1147 + $0x68] sm:$0xff]
      %v2442 = vld [vmem:[%s1147 + $0x70] sm:$0xff]
      %v2443 = vld [vmem:[%s1147 + $0x78] sm:$0xff]
      %v2444 = vld [vmem:[%s1147 + $0x80] sm:$0xff]
      %v2445 = vld [vmem:[%s1147 + $0x88] sm:$0xff]
      %v2446 = vld [vmem:[%s1147 + $0x90] sm:$0xff]
      %v2447 = vld [vmem:[%s1147 + $0x98] sm:$0xff]
      %v2448 = vld [vmem:[%s1147 + $0xa0] sm:$0xff]
      %v2449 = vld [vmem:[%s1147 + $0xa8] sm:$0xff]
      %v2450 = vld [vmem:[%s1147 + $0xb0] sm:$0xff]
      %v2451 = vld [vmem:[%s1147 + $0xb8] sm:$0xff]
      %v2452 = vld [vmem:[%s1147 + $0xc0] sm:$0xff]
      %v2453 = vld [vmem:[%s1147 + $0xc8] sm:$0xff]
      %v2454 = vld [vmem:[%s1147 + $0xd0] sm:$0xff]
      %v2455 = vld [vmem:[%s1147 + $0xd8] sm:$0xff]
      %v2456 = vld [vmem:[%s1147 + $0xe0] sm:$0xff]
      %v2457 = vld [vmem:[%s1147 + $0xe8] sm:$0xff]
      %v2458 = vld [vmem:[%s1147 + $0xf0] sm:$0xff]
      %v2459 = vld [vmem:[%s1147 + $0xf8] sm:$0xff]
      %v2460 = vmax.f32 %v2396, %v2428
      %v2461 = vmax.f32 %v2397, %v2429
      %v2462 = vmax.f32 %v2398, %v2430
      %v2463 = vmax.f32 %v2399, %v2431
      %v2464 = vmax.f32 %v2400, %v2432
      %v2465 = vmax.f32 %v2401, %v2433
      %v2466 = vmax.f32 %v2402, %v2434
      %v2467 = vmax.f32 %v2403, %v2435
      %v2468 = vmax.f32 %v2404, %v2436
      %v2469 = vmax.f32 %v2405, %v2437
      %v2470 = vmax.f32 %v2406, %v2438
      %v2471 = vmax.f32 %v2407, %v2439
      %v2472 = vmax.f32 %v2408, %v2440
      %v2473 = vmax.f32 %v2409, %v2441
      %v2474 = vmax.f32 %v2410, %v2442
      %v2475 = vmax.f32 %v2411, %v2443
      %v2476 = vmax.f32 %v2412, %v2444
      %v2477 = vmax.f32 %v2413, %v2445
      %v2478 = vmax.f32 %v2414, %v2446
      %v2479 = vmax.f32 %v2415, %v2447
      %v2480 = vmax.f32 %v2416, %v2448
      %v2481 = vmax.f32 %v2417, %v2449
      %v2482 = vmax.f32 %v2418, %v2450
      %v2483 = vmax.f32 %v2419, %v2451
      %v2484 = vmax.f32 %v2420, %v2452
      %v2485 = vmax.f32 %v2421, %v2453
      %v2486 = vmax.f32 %v2422, %v2454
      %v2487 = vmax.f32 %v2423, %v2455
      %v2488 = vmax.f32 %v2424, %v2456
      %v2489 = vmax.f32 %v2425, %v2457
      %v2490 = vmax.f32 %v2426, %v2458
      %v2491 = vmax.f32 %v2427, %v2459
      %2492 = vst.msk [vmem:[#allocation3 + $0x8] sm:$0xff] %vm280, %v2460
      %2493 = vst.msk [vmem:[#allocation3 + $0x10] sm:$0xff] %vm280, %v2461
      %2494 = vst.msk [vmem:[#allocation3 + $0x28] sm:$0xff] %vm280, %v2462
      %2495 = vst.msk [vmem:[#allocation3 + $0x30] sm:$0xff] %vm280, %v2463
      %2496 = vst.msk [vmem:[#allocation3 + $0x48] sm:$0xff] %vm280, %v2464
      %2497 = vst.msk [vmem:[#allocation3 + $0x50] sm:$0xff] %vm280, %v2465
      %2498 = vst.msk [vmem:[#allocation3 + $0x68] sm:$0xff] %vm280, %v2466
      %2499 = vst.msk [vmem:[#allocation3 + $0x70] sm:$0xff] %vm280, %v2467
      %2500 = vst.msk [vmem:[#allocation3 + $0x88] sm:$0xff] %vm280, %v2468
      %2501 = vst.msk [vmem:[#allocation3 + $0x90] sm:$0xff] %vm280, %v2469
      %2502 = vst.msk [vmem:[#allocation3 + $0xa8] sm:$0xff] %vm280, %v2470
      %2503 = vst.msk [vmem:[#allocation3 + $0xb0] sm:$0xff] %vm280, %v2471
      %2504 = vst.msk [vmem:[#allocation3 + $0xc8] sm:$0xff] %vm280, %v2472
      %2505 = vst.msk [vmem:[#allocation3 + $0xd0] sm:$0xff] %vm280, %v2473
      %2506 = vst.msk [vmem:[#allocation3 + $0xe8] sm:$0xff] %vm280, %v2474
      %2507 = vst.msk [vmem:[#allocation3 + $0xf0] sm:$0xff] %vm280, %v2475
      %2508 = vst.msk [vmem:[#allocation3 + $0x108] sm:$0xff] %vm280, %v2476
      %2509 = vst.msk [vmem:[#allocation3 + $0x110] sm:$0xff] %vm280, %v2477
      %2510 = vst.msk [vmem:[#allocation3 + $0x128] sm:$0xff] %vm280, %v2478
      %2511 = vst.msk [vmem:[#allocation3 + $0x130] sm:$0xff] %vm280, %v2479
      %2512 = vst.msk [vmem:[#allocation3 + $0x148] sm:$0xff] %vm280, %v2480
      %2513 = vst.msk [vmem:[#allocation3 + $0x150] sm:$0xff] %vm280, %v2481
      %2514 = vst.msk [vmem:[#allocation3 + $0x168] sm:$0xff] %vm280, %v2482
      %2515 = vst.msk [vmem:[#allocation3 + $0x170] sm:$0xff] %vm280, %v2483
      %2516 = vst.msk [vmem:[#allocation3 + $0x188] sm:$0xff] %vm280, %v2484
      %2517 = vst.msk [vmem:[#allocation3 + $0x190] sm:$0xff] %vm280, %v2485
      %2518 = vst.msk [vmem:[#allocation3 + $0x1a8] sm:$0xff] %vm280, %v2486
      %2519 = vst.msk [vmem:[#allocation3 + $0x1b0] sm:$0xff] %vm280, %v2487
      %2520 = vst.msk [vmem:[#allocation3 + $0x1c8] sm:$0xff] %vm280, %v2488
      %2521 = vst.msk [vmem:[#allocation3 + $0x1d0] sm:$0xff] %vm280, %v2489
      %2522 = vst.msk [vmem:[#allocation3 + $0x1e8] sm:$0xff] %vm280, %v2490
      %2523 = vst.msk [vmem:[#allocation3 + $0x1f0] sm:$0xff] %vm280, %v2491
      %v2524 = vld [vmem:[#allocation3 + $0x6] sm:$0xff]
      %v2525 = vld [vmem:[#allocation3 + $0xe] sm:$0xff]
      %v2526 = vld [vmem:[#allocation3 + $0x26] sm:$0xff]
      %v2527 = vld [vmem:[#allocation3 + $0x2e] sm:$0xff]
      %v2528 = vld [vmem:[#allocation3 + $0x46] sm:$0xff]
      %v2529 = vld [vmem:[#allocation3 + $0x4e] sm:$0xff]
      %v2530 = vld [vmem:[#allocation3 + $0x66] sm:$0xff]
      %v2531 = vld [vmem:[#allocation3 + $0x6e] sm:$0xff]
      %v2532 = vld [vmem:[#allocation3 + $0x86] sm:$0xff]
      %v2533 = vld [vmem:[#allocation3 + $0x8e] sm:$0xff]
      %v2534 = vld [vmem:[#allocation3 + $0xa6] sm:$0xff]
      %v2535 = vld [vmem:[#allocation3 + $0xae] sm:$0xff]
      %v2536 = vld [vmem:[#allocation3 + $0xc6] sm:$0xff]
      %v2537 = vld [vmem:[#allocation3 + $0xce] sm:$0xff]
      %v2538 = vld [vmem:[#allocation3 + $0xe6] sm:$0xff]
      %v2539 = vld [vmem:[#allocation3 + $0xee] sm:$0xff]
      %v2540 = vld [vmem:[#allocation3 + $0x106] sm:$0xff]
      %v2541 = vld [vmem:[#allocation3 + $0x10e] sm:$0xff]
      %v2542 = vld [vmem:[#allocation3 + $0x126] sm:$0xff]
      %v2543 = vld [vmem:[#allocation3 + $0x12e] sm:$0xff]
      %v2544 = vld [vmem:[#allocation3 + $0x146] sm:$0xff]
      %v2545 = vld [vmem:[#allocation3 + $0x14e] sm:$0xff]
      %v2546 = vld [vmem:[#allocation3 + $0x166] sm:$0xff]
      %v2547 = vld [vmem:[#allocation3 + $0x16e] sm:$0xff]
      %v2548 = vld [vmem:[#allocation3 + $0x186] sm:$0xff]
      %v2549 = vld [vmem:[#allocation3 + $0x18e] sm:$0xff]
      %v2550 = vld [vmem:[#allocation3 + $0x1a6] sm:$0xff]
      %v2551 = vld [vmem:[#allocation3 + $0x1ae] sm:$0xff]
      %v2552 = vld [vmem:[#allocation3 + $0x1c6] sm:$0xff]
      %v2553 = vld [vmem:[#allocation3 + $0x1ce] sm:$0xff]
      %v2554 = vld [vmem:[#allocation3 + $0x1e6] sm:$0xff]
      %v2555 = vld [vmem:[#allocation3 + $0x1ee] sm:$0xff]
      %v2556 = vld [vmem:[#allocation3 + $0x7] sm:$0xff]
      %v2557 = vld [vmem:[#allocation3 + $0xf] sm:$0xff]
      %v2558 = vld [vmem:[#allocation3 + $0x27] sm:$0xff]
      %v2559 = vld [vmem:[#allocation3 + $0x2f] sm:$0xff]
      %v2560 = vld [vmem:[#allocation3 + $0x47] sm:$0xff]
      %v2561 = vld [vmem:[#allocation3 + $0x4f] sm:$0xff]
      %v2562 = vld [vmem:[#allocation3 + $0x67] sm:$0xff]
      %v2563 = vld [vmem:[#allocation3 + $0x6f] sm:$0xff]
      %v2564 = vld [vmem:[#allocation3 + $0x87] sm:$0xff]
      %v2565 = vld [vmem:[#allocation3 + $0x8f] sm:$0xff]
      %v2566 = vld [vmem:[#allocation3 + $0xa7] sm:$0xff]
      %v2567 = vld [vmem:[#allocation3 + $0xaf] sm:$0xff]
      %v2568 = vld [vmem:[#allocation3 + $0xc7] sm:$0xff]
      %v2569 = vld [vmem:[#allocation3 + $0xcf] sm:$0xff]
      %v2570 = vld [vmem:[#allocation3 + $0xe7] sm:$0xff]
      %v2571 = vld [vmem:[#allocation3 + $0xef] sm:$0xff]
      %v2572 = vld [vmem:[#allocation3 + $0x107] sm:$0xff]
      %v2573 = vld [vmem:[#allocation3 + $0x10f] sm:$0xff]
      %v2574 = vld [vmem:[#allocation3 + $0x127] sm:$0xff]
      %v2575 = vld [vmem:[#allocation3 + $0x12f] sm:$0xff]
      %v2576 = vld [vmem:[#allocation3 + $0x147] sm:$0xff]
      %v2577 = vld [vmem:[#allocation3 + $0x14f] sm:$0xff]
      %v2578 = vld [vmem:[#allocation3 + $0x167] sm:$0xff]
      %v2579 = vld [vmem:[#allocation3 + $0x16f] sm:$0xff]
      %v2580 = vld [vmem:[#allocation3 + $0x187] sm:$0xff]
      %v2581 = vld [vmem:[#allocation3 + $0x18f] sm:$0xff]
      %v2582 = vld [vmem:[#allocation3 + $0x1a7] sm:$0xff]
      %v2583 = vld [vmem:[#allocation3 + $0x1af] sm:$0xff]
      %v2584 = vld [vmem:[#allocation3 + $0x1c7] sm:$0xff]
      %v2585 = vld [vmem:[#allocation3 + $0x1cf] sm:$0xff]
      %v2586 = vld [vmem:[#allocation3 + $0x1e7] sm:$0xff]
      %v2587 = vld [vmem:[#allocation3 + $0x1ef] sm:$0xff]
      %v2588 = vmax.f32 %v2524, %v2556
      %v2589 = vmax.f32 %v2525, %v2557
      %v2590 = vmax.f32 %v2526, %v2558
      %v2591 = vmax.f32 %v2527, %v2559
      %v2592 = vmax.f32 %v2528, %v2560
      %v2593 = vmax.f32 %v2529, %v2561
      %v2594 = vmax.f32 %v2530, %v2562
      %v2595 = vmax.f32 %v2531, %v2563
      %v2596 = vmax.f32 %v2532, %v2564
      %v2597 = vmax.f32 %v2533, %v2565
      %v2598 = vmax.f32 %v2534, %v2566
      %v2599 = vmax.f32 %v2535, %v2567
      %v2600 = vmax.f32 %v2536, %v2568
      %v2601 = vmax.f32 %v2537, %v2569
      %v2602 = vmax.f32 %v2538, %v2570
      %v2603 = vmax.f32 %v2539, %v2571
      %v2604 = vmax.f32 %v2540, %v2572
      %v2605 = vmax.f32 %v2541, %v2573
      %v2606 = vmax.f32 %v2542, %v2574
      %v2607 = vmax.f32 %v2543, %v2575
      %v2608 = vmax.f32 %v2544, %v2576
      %v2609 = vmax.f32 %v2545, %v2577
      %v2610 = vmax.f32 %v2546, %v2578
      %v2611 = vmax.f32 %v2547, %v2579
      %v2612 = vmax.f32 %v2548, %v2580
      %v2613 = vmax.f32 %v2549, %v2581
      %v2614 = vmax.f32 %v2550, %v2582
      %v2615 = vmax.f32 %v2551, %v2583
      %v2616 = vmax.f32 %v2552, %v2584
      %v2617 = vmax.f32 %v2553, %v2585
      %v2618 = vmax.f32 %v2554, %v2586
      %v2619 = vmax.f32 %v2555, %v2587
      %v2620 = vld [vmem:[#allocation3 + $0x8] sm:$0xff]
      %v2621 = vld [vmem:[#allocation3 + $0x10] sm:$0xff]
      %v2622 = vld [vmem:[#allocation3 + $0x28] sm:$0xff]
      %v2623 = vld [vmem:[#allocation3 + $0x30] sm:$0xff]
      %v2624 = vld [vmem:[#allocation3 + $0x48] sm:$0xff]
      %v2625 = vld [vmem:[#allocation3 + $0x50] sm:$0xff]
      %v2626 = vld [vmem:[#allocation3 + $0x68] sm:$0xff]
      %v2627 = vld [vmem:[#allocation3 + $0x70] sm:$0xff]
      %v2628 = vld [vmem:[#allocation3 + $0x88] sm:$0xff]
      %v2629 = vld [vmem:[#allocation3 + $0x90] sm:$0xff]
      %v2630 = vld [vmem:[#allocation3 + $0xa8] sm:$0xff]
      %v2631 = vld [vmem:[#allocation3 + $0xb0] sm:$0xff]
      %v2632 = vld [vmem:[#allocation3 + $0xc8] sm:$0xff]
      %v2633 = vld [vmem:[#allocation3 + $0xd0] sm:$0xff]
      %v2634 = vld [vmem:[#allocation3 + $0xe8] sm:$0xff]
      %v2635 = vld [vmem:[#allocation3 + $0xf0] sm:$0xff]
      %v2636 = vld [vmem:[#allocation3 + $0x108] sm:$0xff]
      %v2637 = vld [vmem:[#allocation3 + $0x110] sm:$0xff]
      %v2638 = vld [vmem:[#allocation3 + $0x128] sm:$0xff]
      %v2639 = vld [vmem:[#allocation3 + $0x130] sm:$0xff]
      %v2640 = vld [vmem:[#allocation3 + $0x148] sm:$0xff]
      %v2641 = vld [vmem:[#allocation3 + $0x150] sm:$0xff]
      %v2642 = vld [vmem:[#allocation3 + $0x168] sm:$0xff]
      %v2643 = vld [vmem:[#allocation3 + $0x170] sm:$0xff]
      %v2644 = vld [vmem:[#allocation3 + $0x188] sm:$0xff]
      %v2645 = vld [vmem:[#allocation3 + $0x190] sm:$0xff]
      %v2646 = vld [vmem:[#allocation3 + $0x1a8] sm:$0xff]
      %v2647 = vld [vmem:[#allocation3 + $0x1b0] sm:$0xff]
      %v2648 = vld [vmem:[#allocation3 + $0x1c8] sm:$0xff]
      %v2649 = vld [vmem:[#allocation3 + $0x1d0] sm:$0xff]
      %v2650 = vld [vmem:[#allocation3 + $0x1e8] sm:$0xff]
      %v2651 = vld [vmem:[#allocation3 + $0x1f0] sm:$0xff]
      %v2652 = vmax.f32 %v2588, %v2620
      %v2653 = vmax.f32 %v2589, %v2621
      %v2654 = vmax.f32 %v2590, %v2622
      %v2655 = vmax.f32 %v2591, %v2623
      %v2656 = vmax.f32 %v2592, %v2624
      %v2657 = vmax.f32 %v2593, %v2625
      %v2658 = vmax.f32 %v2594, %v2626
      %v2659 = vmax.f32 %v2595, %v2627
      %v2660 = vmax.f32 %v2596, %v2628
      %v2661 = vmax.f32 %v2597, %v2629
      %v2662 = vmax.f32 %v2598, %v2630
      %v2663 = vmax.f32 %v2599, %v2631
      %v2664 = vmax.f32 %v2600, %v2632
      %v2665 = vmax.f32 %v2601, %v2633
      %v2666 = vmax.f32 %v2602, %v2634
      %v2667 = vmax.f32 %v2603, %v2635
      %v2668 = vmax.f32 %v2604, %v2636
      %v2669 = vmax.f32 %v2605, %v2637
      %v2670 = vmax.f32 %v2606, %v2638
      %v2671 = vmax.f32 %v2607, %v2639
      %v2672 = vmax.f32 %v2608, %v2640
      %v2673 = vmax.f32 %v2609, %v2641
      %v2674 = vmax.f32 %v2610, %v2642
      %v2675 = vmax.f32 %v2611, %v2643
      %v2676 = vmax.f32 %v2612, %v2644
      %v2677 = vmax.f32 %v2613, %v2645
      %v2678 = vmax.f32 %v2614, %v2646
      %v2679 = vmax.f32 %v2615, %v2647
      %v2680 = vmax.f32 %v2616, %v2648
      %v2681 = vmax.f32 %v2617, %v2649
      %v2682 = vmax.f32 %v2618, %v2650
      %v2683 = vmax.f32 %v2619, %v2651
      %v2684 = vld [vmem:[#allocation3 + $0x9] sm:$0xff]
      %v2685 = vld [vmem:[#allocation3 + $0x11] sm:$0xff]
      %v2686 = vld [vmem:[#allocation3 + $0x29] sm:$0xff]
      %v2687 = vld [vmem:[#allocation3 + $0x31] sm:$0xff]
      %v2688 = vld [vmem:[#allocation3 + $0x49] sm:$0xff]
      %v2689 = vld [vmem:[#allocation3 + $0x51] sm:$0xff]
      %v2690 = vld [vmem:[#allocation3 + $0x69] sm:$0xff]
      %v2691 = vld [vmem:[#allocation3 + $0x71] sm:$0xff]
      %v2692 = vld [vmem:[#allocation3 + $0x89] sm:$0xff]
      %v2693 = vld [vmem:[#allocation3 + $0x91] sm:$0xff]
      %v2694 = vld [vmem:[#allocation3 + $0xa9] sm:$0xff]
      %v2695 = vld [vmem:[#allocation3 + $0xb1] sm:$0xff]
      %v2696 = vld [vmem:[#allocation3 + $0xc9] sm:$0xff]
      %v2697 = vld [vmem:[#allocation3 + $0xd1] sm:$0xff]
      %v2698 = vld [vmem:[#allocation3 + $0xe9] sm:$0xff]
      %v2699 = vld [vmem:[#allocation3 + $0xf1] sm:$0xff]
      %v2700 = vld [vmem:[#allocation3 + $0x109] sm:$0xff]
      %v2701 = vld [vmem:[#allocation3 + $0x111] sm:$0xff]
      %v2702 = vld [vmem:[#allocation3 + $0x129] sm:$0xff]
      %v2703 = vld [vmem:[#allocation3 + $0x131] sm:$0xff]
      %v2704 = vld [vmem:[#allocation3 + $0x149] sm:$0xff]
      %v2705 = vld [vmem:[#allocation3 + $0x151] sm:$0xff]
      %v2706 = vld [vmem:[#allocation3 + $0x169] sm:$0xff]
      %v2707 = vld [vmem:[#allocation3 + $0x171] sm:$0xff]
      %v2708 = vld [vmem:[#allocation3 + $0x189] sm:$0xff]
      %v2709 = vld [vmem:[#allocation3 + $0x191] sm:$0xff]
      %v2710 = vld [vmem:[#allocation3 + $0x1a9] sm:$0xff]
      %v2711 = vld [vmem:[#allocation3 + $0x1b1] sm:$0xff]
      %v2712 = vld [vmem:[#allocation3 + $0x1c9] sm:$0xff]
      %v2713 = vld [vmem:[#allocation3 + $0x1d1] sm:$0xff]
      %v2714 = vld [vmem:[#allocation3 + $0x1e9] sm:$0xff]
      %v2715 = vld [vmem:[#allocation3 + $0x1f1] sm:$0xff]
      %v2716 = vmax.f32 %v2652, %v2684
      %v2717 = vmax.f32 %v2653, %v2685
      %v2718 = vmax.f32 %v2654, %v2686
      %v2719 = vmax.f32 %v2655, %v2687
      %v2720 = vmax.f32 %v2656, %v2688
      %v2721 = vmax.f32 %v2657, %v2689
      %v2722 = vmax.f32 %v2658, %v2690
      %v2723 = vmax.f32 %v2659, %v2691
      %v2724 = vmax.f32 %v2660, %v2692
      %v2725 = vmax.f32 %v2661, %v2693
      %v2726 = vmax.f32 %v2662, %v2694
      %v2727 = vmax.f32 %v2663, %v2695
      %v2728 = vmax.f32 %v2664, %v2696
      %v2729 = vmax.f32 %v2665, %v2697
      %v2730 = vmax.f32 %v2666, %v2698
      %v2731 = vmax.f32 %v2667, %v2699
      %v2732 = vmax.f32 %v2668, %v2700
      %v2733 = vmax.f32 %v2669, %v2701
      %v2734 = vmax.f32 %v2670, %v2702
      %v2735 = vmax.f32 %v2671, %v2703
      %v2736 = vmax.f32 %v2672, %v2704
      %v2737 = vmax.f32 %v2673, %v2705
      %v2738 = vmax.f32 %v2674, %v2706
      %v2739 = vmax.f32 %v2675, %v2707
      %v2740 = vmax.f32 %v2676, %v2708
      %v2741 = vmax.f32 %v2677, %v2709
      %v2742 = vmax.f32 %v2678, %v2710
      %v2743 = vmax.f32 %v2679, %v2711
      %v2744 = vmax.f32 %v2680, %v2712
      %v2745 = vmax.f32 %v2681, %v2713
      %v2746 = vmax.f32 %v2682, %v2714
      %v2747 = vmax.f32 %v2683, %v2715
      %v2748 = vld [vmem:[#allocation3 + $0xa] sm:$0xff]
      %v2749 = vld [vmem:[#allocation3 + $0x12] sm:$0xff]
      %v2750 = vld [vmem:[#allocation3 + $0x2a] sm:$0xff]
      %v2751 = vld [vmem:[#allocation3 + $0x32] sm:$0xff]
      %v2752 = vld [vmem:[#allocation3 + $0x4a] sm:$0xff]
      %v2753 = vld [vmem:[#allocation3 + $0x52] sm:$0xff]
      %v2754 = vld [vmem:[#allocation3 + $0x6a] sm:$0xff]
      %v2755 = vld [vmem:[#allocation3 + $0x72] sm:$0xff]
      %v2756 = vld [vmem:[#allocation3 + $0x8a] sm:$0xff]
      %v2757 = vld [vmem:[#allocation3 + $0x92] sm:$0xff]
      %v2758 = vld [vmem:[#allocation3 + $0xaa] sm:$0xff]
      %v2759 = vld [vmem:[#allocation3 + $0xb2] sm:$0xff]
      %v2760 = vld [vmem:[#allocation3 + $0xca] sm:$0xff]
      %v2761 = vld [vmem:[#allocation3 + $0xd2] sm:$0xff]
      %v2762 = vld [vmem:[#allocation3 + $0xea] sm:$0xff]
      %v2763 = vld [vmem:[#allocation3 + $0xf2] sm:$0xff]
      %v2764 = vld [vmem:[#allocation3 + $0x10a] sm:$0xff]
      %v2765 = vld [vmem:[#allocation3 + $0x112] sm:$0xff]
      %v2766 = vld [vmem:[#allocation3 + $0x12a] sm:$0xff]
      %v2767 = vld [vmem:[#allocation3 + $0x132] sm:$0xff]
      %v2768 = vld [vmem:[#allocation3 + $0x14a] sm:$0xff]
      %v2769 = vld [vmem:[#allocation3 + $0x152] sm:$0xff]
      %v2770 = vld [vmem:[#allocation3 + $0x16a] sm:$0xff]
      %v2771 = vld [vmem:[#allocation3 + $0x172] sm:$0xff]
      %v2772 = vld [vmem:[#allocation3 + $0x18a] sm:$0xff]
      %v2773 = vld [vmem:[#allocation3 + $0x192] sm:$0xff]
      %v2774 = vld [vmem:[#allocation3 + $0x1aa] sm:$0xff]
      %v2775 = vld [vmem:[#allocation3 + $0x1b2] sm:$0xff]
      %v2776 = vld [vmem:[#allocation3 + $0x1ca] sm:$0xff]
      %v2777 = vld [vmem:[#allocation3 + $0x1d2] sm:$0xff]
      %v2778 = vld [vmem:[#allocation3 + $0x1ea] sm:$0xff]
      %v2779 = vld [vmem:[#allocation3 + $0x1f2] sm:$0xff]
      %v2780 = vmax.f32 %v2716, %v2748
      %v2781 = vmax.f32 %v2717, %v2749
      %v2782 = vmax.f32 %v2718, %v2750
      %v2783 = vmax.f32 %v2719, %v2751
      %v2784 = vmax.f32 %v2720, %v2752
      %v2785 = vmax.f32 %v2721, %v2753
      %v2786 = vmax.f32 %v2722, %v2754
      %v2787 = vmax.f32 %v2723, %v2755
      %v2788 = vmax.f32 %v2724, %v2756
      %v2789 = vmax.f32 %v2725, %v2757
      %v2790 = vmax.f32 %v2726, %v2758
      %v2791 = vmax.f32 %v2727, %v2759
      %v2792 = vmax.f32 %v2728, %v2760
      %v2793 = vmax.f32 %v2729, %v2761
      %v2794 = vmax.f32 %v2730, %v2762
      %v2795 = vmax.f32 %v2731, %v2763
      %v2796 = vmax.f32 %v2732, %v2764
      %v2797 = vmax.f32 %v2733, %v2765
      %v2798 = vmax.f32 %v2734, %v2766
      %v2799 = vmax.f32 %v2735, %v2767
      %v2800 = vmax.f32 %v2736, %v2768
      %v2801 = vmax.f32 %v2737, %v2769
      %v2802 = vmax.f32 %v2738, %v2770
      %v2803 = vmax.f32 %v2739, %v2771
      %v2804 = vmax.f32 %v2740, %v2772
      %v2805 = vmax.f32 %v2741, %v2773
      %v2806 = vmax.f32 %v2742, %v2774
      %v2807 = vmax.f32 %v2743, %v2775
      %v2808 = vmax.f32 %v2744, %v2776
      %v2809 = vmax.f32 %v2745, %v2777
      %v2810 = vmax.f32 %v2746, %v2778
      %v2811 = vmax.f32 %v2747, %v2779
      %v2812 = vpack.c.bf16 %v857, %v856
      %v2813 = vpack.c.bf16 %v859, %v858
      %v2814 = vpack.c.bf16 %v861, %v860
      %v2815 = vpack.c.bf16 %v863, %v862
      %v2816 = vpack.c.bf16 %v865, %v864
      %v2817 = vpack.c.bf16 %v867, %v866
      %v2818 = vpack.c.bf16 %v869, %v868
      %v2819 = vpack.c.bf16 %v871, %v870
      %v2820 = vpack.c.bf16 %v873, %v872
      %v2821 = vpack.c.bf16 %v875, %v874
      %v2822 = vpack.c.bf16 %v877, %v876
      %v2823 = vpack.c.bf16 %v879, %v878
      %v2824 = vpack.c.bf16 %v881, %v880
      %v2825 = vpack.c.bf16 %v883, %v882
      %v2826 = vpack.c.bf16 %v885, %v884
      %v2827 = vpack.c.bf16 %v887, %v886
      %v2828 = vld [vmem:[%s4] sm:$0x1]
      %v2829 = vpack.c.bf16 %v1501, %v1500
      %v2830 = vpack.c.bf16 %v1503, %v1502
      %v2831 = vpack.c.bf16 %v1505, %v1504
      %v2832 = vpack.c.bf16 %v1507, %v1506
      %v2833 = vpack.c.bf16 %v1509, %v1508
      %v2834 = vpack.c.bf16 %v1511, %v1510
      %v2835 = vpack.c.bf16 %v1513, %v1512
      %v2836 = vpack.c.bf16 %v1515, %v1514
      %v2837 = vpack.c.bf16 %v1517, %v1516
      %v2838 = vpack.c.bf16 %v1519, %v1518
      %v2839 = vpack.c.bf16 %v1521, %v1520
      %v2840 = vpack.c.bf16 %v1523, %v1522
      %v2841 = vpack.c.bf16 %v1525, %v1524
      %v2842 = vpack.c.bf16 %v1527, %v1526
      %v2843 = vpack.c.bf16 %v1529, %v1528
      %v2844 = vpack.c.bf16 %v1531, %v1530
      %s2845 = scalar_lea.vmem %s4, 1
      %v2846 = vld [vmem:[%s2845] sm:$0x1]
      %v2848 = vsel %vm280, %v2829, 0
      %v2851 = vsel %vm280, %v2830, 0
      %v2854 = vsel %vm280, %v2831, 0
      %v2857 = vsel %vm280, %v2832, 0
      %v2860 = vsel %vm280, %v2833, 0
      %v2863 = vsel %vm280, %v2834, 0
      %v2866 = vsel %vm280, %v2835, 0
      %v2869 = vsel %vm280, %v2836, 0
      %v2872 = vsel %vm280, %v2837, 0
      %v2875 = vsel %vm280, %v2838, 0
      %v2878 = vsel %vm280, %v2839, 0
      %v2881 = vsel %vm280, %v2840, 0
      %v2884 = vsel %vm280, %v2841, 0
      %v2887 = vsel %vm280, %v2842, 0
      %v2890 = vsel %vm280, %v2843, 0
      %v2893 = vsel %vm280, %v2844, 0
      %vm2895 = vcmask 1040384
      %v2897 = vsel %vm2895, %v2846, 0
      %2899 = vmatprep.subr.bf16.mxu0 0
      %2900 = vmatpush1.bf16.msra.mxu0 %v2897
      %2901 = vmatprep.subr.bf16.mxu0 0
      %2902 = vmatpush1.bf16.msra.mxu0 0
      %2903 = vmatprep.subr.bf16.mxu0 0
      %2904 = vmatpush1.bf16.msra.mxu0 0
      %2905 = vmatprep.subr.bf16.mxu0 0
      %2906 = vmatpush1.bf16.msra.mxu0 0
      %2907 = vmatprep.subr.bf16.mxu0 0
      %2908 = vmatpush1.bf16.msra.mxu0 0
      %2909 = vmatprep.subr.bf16.mxu0 0
      %2910 = vmatpush1.bf16.msra.mxu0 0
      %2911 = vmatprep.subr.bf16.mxu0 0
      %2912 = vmatpush1.bf16.msra.mxu0 0
      %2913 = vmatprep.subr.bf16.mxu0 0
      %2914 = vmatpush1.bf16.msra.mxu0 0
      %2915 = vmatprep.subr.bf16.mxu0 0
      %2916 = vmatpush1.bf16.msra.mxu0 0
      %2917 = vmatprep.subr.bf16.mxu0 0
      %2918 = vmatpush1.bf16.msra.mxu0 0
      %2919 = vmatprep.subr.bf16.mxu0 0
      %2920 = vmatpush1.bf16.msra.mxu0 0
      %2921 = vmatprep.subr.bf16.mxu0 0
      %2922 = vmatpush1.bf16.msra.mxu0 0
      %2923 = vmatprep.subr.bf16.mxu0 0
      %2924 = vmatpush1.bf16.msra.mxu0 0
      %2925 = vmatprep.subr.bf16.mxu0 0
      %2926 = vmatpush1.bf16.msra.mxu0 0
      %2927 = vmatprep.subr.bf16.mxu0 0
      %2928 = vmatpush1.bf16.msra.mxu0 0
      %2929 = vmatprep.subr.bf16.mxu0 0
      %2930 = vmatpush1.bf16.msra.mxu0 0
      %2931 = vmatprep.mubr.bf16.mxu0 0
      %2932 = vmatmul.mubr.bf16.gmra.mrb[0].mxu0 %v2848
      %v2933 = vpop.f32.mrb[0].mxu0
      %v2934 = vadd.f32 0.0, %v2933
      %v2935 = vpop.f32.mrb[0].mxu0
      %v2936 = vpop.f32.mrb[0].mxu0
      %v2937 = vadd.f32 0.0, %v2936
      %v2938 = vpop.f32.mrb[0].mxu0
      %2939 = vmatprep.mubr.bf16.mxu0 0
      %2940 = vmatmul.mubr.bf16.gmra.mrb[0].mxu0 %v2851
      %v2941 = vpop.f32.mrb[0].mxu0
      %v2942 = vadd.f32 0.0, %v2941
      %v2943 = vpop.f32.mrb[0].mxu0
      %v2944 = vpop.f32.mrb[0].mxu0
      %v2945 = vadd.f32 0.0, %v2944
      %v2946 = vpop.f32.mrb[0].mxu0
      %2947 = vmatprep.mubr.bf16.mxu0 0
      %2948 = vmatmul.mubr.bf16.gmra.mrb[0].mxu0 %v2854
      %v2949 = vpop.f32.mrb[0].mxu0
      %v2950 = vadd.f32 0.0, %v2949
      %v2951 = vpop.f32.mrb[0].mxu0
      %v2952 = vpop.f32.mrb[0].mxu0
      %v2953 = vadd.f32 0.0, %v2952
      %v2954 = vpop.f32.mrb[0].mxu0
      %2955 = vmatprep.mubr.bf16.mxu0 0
      %2956 = vmatmul.mubr.bf16.gmra.mrb[0].mxu0 %v2857
      %v2957 = vpop.f32.mrb[0].mxu0
      %v2958 = vadd.f32 0.0, %v2957
      %v2959 = vpop.f32.mrb[0].mxu0
      %v2960 = vpop.f32.mrb[0].mxu0
      %v2961 = vadd.f32 0.0, %v2960
      %v2962 = vpop.f32.mrb[0].mxu0
      %2963 = vmatprep.mubr.bf16.mxu0 0
      %2964 = vmatmul.mubr.bf16.gmra.mrb[0].mxu0 %v2860
      %v2965 = vpop.f32.mrb[0].mxu0
      %v2966 = vadd.f32 0.0, %v2965
      %v2967 = vpop.f32.mrb[0].mxu0
      %v2968 = vpop.f32.mrb[0].mxu0
      %v2969 = vadd.f32 0.0, %v2968
      %v2970 = vpop.f32.mrb[0].mxu0
      %2971 = vmatprep.mubr.bf16.mxu0 0
      %2972 = vmatmul.mubr.bf16.gmra.mrb[0].mxu0 %v2863
      %v2973 = vpop.f32.mrb[0].mxu0
      %v2974 = vadd.f32 0.0, %v2973
      %v2975 = vpop.f32.mrb[0].mxu0
      %v2976 = vpop.f32.mrb[0].mxu0
      %v2977 = vadd.f32 0.0, %v2976
      %v2978 = vpop.f32.mrb[0].mxu0
      %2979 = vmatprep.mubr.bf16.mxu0 0
      %2980 = vmatmul.mubr.bf16.gmra.mrb[0].mxu0 %v2866
      %v2981 = vpop.f32.mrb[0].mxu0
      %v2982 = vadd.f32 0.0, %v2981
      %v2983 = vpop.f32.mrb[0].mxu0
      %v2984 = vpop.f32.mrb[0].mxu0
      %v2985 = vadd.f32 0.0, %v2984
      %v2986 = vpop.f32.mrb[0].mxu0
      %2987 = vmatprep.mubr.bf16.mxu0 0
      %2988 = vmatmul.mubr.bf16.gmra.mrb[0].mxu0 %v2869
      %v2989 = vpop.f32.mrb[0].mxu0
      %v2990 = vadd.f32 0.0, %v2989
      %v2991 = vpop.f32.mrb[0].mxu0
      %v2992 = vpop.f32.mrb[0].mxu0
      %v2993 = vadd.f32 0.0, %v2992
      %v2994 = vpop.f32.mrb[0].mxu0
      %2995 = vmatprep.mubr.bf16.mxu0 0
      %2996 = vmatmul.mubr.bf16.gmra.mrb[0].mxu0 %v2872
      %v2997 = vpop.f32.mrb[0].mxu0
      %v2998 = vadd.f32 0.0, %v2997
      %v2999 = vpop.f32.mrb[0].mxu0
      %v3000 = vpop.f32.mrb[0].mxu0
      %v3001 = vadd.f32 0.0, %v3000
      %v3002 = vpop.f32.mrb[0].mxu0
      %3003 = vmatprep.mubr.bf16.mxu0 0
      %3004 = vmatmul.mubr.bf16.gmra.mrb[0].mxu0 %v2875
      %v3005 = vpop.f32.mrb[0].mxu0
      %v3006 = vadd.f32 0.0, %v3005
      %v3007 = vpop.f32.mrb[0].mxu0
      %v3008 = vpop.f32.mrb[0].mxu0
      %v3009 = vadd.f32 0.0, %v3008
      %v3010 = vpop.f32.mrb[0].mxu0
      %3011 = vmatprep.mubr.bf16.mxu0 0
      %3012 = vmatmul.mubr.bf16.gmra.mrb[0].mxu0 %v2878
      %v3013 = vpop.f32.mrb[0].mxu0
      %v3014 = vadd.f32 0.0, %v3013
      %v3015 = vpop.f32.mrb[0].mxu0
      %v3016 = vpop.f32.mrb[0].mxu0
      %v3017 = vadd.f32 0.0, %v3016
      %v3018 = vpop.f32.mrb[0].mxu0
      %3019 = vmatprep.mubr.bf16.mxu0 0
      %3020 = vmatmul.mubr.bf16.gmra.mrb[0].mxu0 %v2881
      %v3021 = vpop.f32.mrb[0].mxu0
      %v3022 = vadd.f32 0.0, %v3021
      %v3023 = vpop.f32.mrb[0].mxu0
      %v3024 = vpop.f32.mrb[0].mxu0
      %v3025 = vadd.f32 0.0, %v3024
      %v3026 = vpop.f32.mrb[0].mxu0
      %3027 = vmatprep.mubr.bf16.mxu0 0
      %3028 = vmatmul.mubr.bf16.gmra.mrb[0].mxu0 %v2884
      %v3029 = vpop.f32.mrb[0].mxu0
      %v3030 = vadd.f32 0.0, %v3029
      %v3031 = vpop.f32.mrb[0].mxu0
      %v3032 = vpop.f32.mrb[0].mxu0
      %v3033 = vadd.f32 0.0, %v3032
      %v3034 = vpop.f32.mrb[0].mxu0
      %3035 = vmatprep.mubr.bf16.mxu0 0
      %3036 = vmatmul.mubr.bf16.gmra.mrb[0].mxu0 %v2887
      %v3037 = vpop.f32.mrb[0].mxu0
      %v3038 = vadd.f32 0.0, %v3037
      %v3039 = vpop.f32.mrb[0].mxu0
      %v3040 = vpop.f32.mrb[0].mxu0
      %v3041 = vadd.f32 0.0, %v3040
      %v3042 = vpop.f32.mrb[0].mxu0
      %3043 = vmatprep.mubr.bf16.mxu0 0
      %3044 = vmatmul.mubr.bf16.gmra.mrb[0].mxu0 %v2890
      %v3045 = vpop.f32.mrb[0].mxu0
      %v3046 = vadd.f32 0.0, %v3045
      %v3047 = vpop.f32.mrb[0].mxu0
      %v3048 = vpop.f32.mrb[0].mxu0
      %v3049 = vadd.f32 0.0, %v3048
      %v3050 = vpop.f32.mrb[0].mxu0
      %3051 = vmatprep.mubr.bf16.mxu0 0
      %3052 = vmatmul.mubr.bf16.gmra.mrb[0].mxu0 %v2893
      %v3053 = vpop.f32.mrb[0].mxu0
      %v3054 = vadd.f32 0.0, %v3053
      %v3055 = vpop.f32.mrb[0].mxu0
      %v3056 = vpop.f32.mrb[0].mxu0
      %v3057 = vadd.f32 0.0, %v3056
      %v3058 = vpop.f32.mrb[0].mxu0
      %3059 = vdwg.mxu0
      %v3061 = vsel %vm280, %v2812, 0
      %v3064 = vsel %vm280, %v2813, 0
      %v3067 = vsel %vm280, %v2814, 0
      %v3070 = vsel %vm280, %v2815, 0
      %v3073 = vsel %vm280, %v2816, 0
      %v3076 = vsel %vm280, %v2817, 0
      %v3079 = vsel %vm280, %v2818, 0
      %v3082 = vsel %vm280, %v2819, 0
      %v3085 = vsel %vm280, %v2820, 0
      %v3088 = vsel %vm280, %v2821, 0
      %v3091 = vsel %vm280, %v2822, 0
      %v3094 = vsel %vm280, %v2823, 0
      %v3097 = vsel %vm280, %v2824, 0
      %v3100 = vsel %vm280, %v2825, 0
      %v3103 = vsel %vm280, %v2826, 0
      %v3106 = vsel %vm280, %v2827, 0
      %v3109 = vsel %vm2895, %v2828, 0
      %3111 = vmatprep.subr.bf16.mxu0 0
      %3112 = vmatpush1.bf16.msra.mxu0 %v3109
      %3113 = vmatprep.subr.bf16.mxu0 0
      %3114 = vmatpush1.bf16.msra.mxu0 0
      %3115 = vmatprep.subr.bf16.mxu0 0
      %3116 = vmatpush1.bf16.msra.mxu0 0
      %3117 = vmatprep.subr.bf16.mxu0 0
      %3118 = vmatpush1.bf16.msra.mxu0 0
      %3119 = vmatprep.subr.bf16.mxu0 0
      %3120 = vmatpush1.bf16.msra.mxu0 0
      %3121 = vmatprep.subr.bf16.mxu0 0
      %3122 = vmatpush1.bf16.msra.mxu0 0
      %3123 = vmatprep.subr.bf16.mxu0 0
      %3124 = vmatpush1.bf16.msra.mxu0 0
      %3125 = vmatprep.subr.bf16.mxu0 0
      %3126 = vmatpush1.bf16.msra.mxu0 0
      %3127 = vmatprep.subr.bf16.mxu0 0
      %3128 = vmatpush1.bf16.msra.mxu0 0
      %3129 = vmatprep.subr.bf16.mxu0 0
      %3130 = vmatpush1.bf16.msra.mxu0 0
      %3131 = vmatprep.subr.bf16.mxu0 0
      %3132 = vmatpush1.bf16.msra.mxu0 0
      %3133 = vmatprep.subr.bf16.mxu0 0
      %3134 = vmatpush1.bf16.msra.mxu0 0
      %3135 = vmatprep.subr.bf16.mxu0 0
      %3136 = vmatpush1.bf16.msra.mxu0 0
      %3137 = vmatprep.subr.bf16.mxu0 0
      %3138 = vmatpush1.bf16.msra.mxu0 0
      %3139 = vmatprep.subr.bf16.mxu0 0
      %3140 = vmatpush1.bf16.msra.mxu0 0
      %3141 = vmatprep.subr.bf16.mxu0 0
      %3142 = vmatpush1.bf16.msra.mxu0 0
      %3143 = vmatprep.mubr.bf16.mxu0 0
      %3144 = vmatmul.mubr.bf16.gmra.mrb[0].mxu0 %v3061
      %v3145 = vpop.f32.mrb[0].mxu0
      %v3146 = vadd.f32 %v2934, %v3145
      %v3147 = vpop.f32.mrb[0].mxu0
      %v3148 = vpop.f32.mrb[0].mxu0
      %v3149 = vadd.f32 %v2937, %v3148
      %v3150 = vpop.f32.mrb[0].mxu0
      %3151 = vmatprep.mubr.bf16.mxu0 0
      %3152 = vmatmul.mubr.bf16.gmra.mrb[0].mxu0 %v3064
      %v3153 = vpop.f32.mrb[0].mxu0
      %v3154 = vadd.f32 %v2942, %v3153
      %v3155 = vpop.f32.mrb[0].mxu0
      %v3156 = vpop.f32.mrb[0].mxu0
      %v3157 = vadd.f32 %v2945, %v3156
      %v3158 = vpop.f32.mrb[0].mxu0
      %3159 = vmatprep.mubr.bf16.mxu0 0
      %3160 = vmatmul.mubr.bf16.gmra.mrb[0].mxu0 %v3067
      %v3161 = vpop.f32.mrb[0].mxu0
      %v3162 = vadd.f32 %v2950, %v3161
      %v3163 = vpop.f32.mrb[0].mxu0
      %v3164 = vpop.f32.mrb[0].mxu0
      %v3165 = vadd.f32 %v2953, %v3164
      %v3166 = vpop.f32.mrb[0].mxu0
      %3167 = vmatprep.mubr.bf16.mxu0 0
      %3168 = vmatmul.mubr.bf16.gmra.mrb[0].mxu0 %v3070
      %v3169 = vpop.f32.mrb[0].mxu0
      %v3170 = vadd.f32 %v2958, %v3169
      %v3171 = vpop.f32.mrb[0].mxu0
      %v3172 = vpop.f32.mrb[0].mxu0
      %v3173 = vadd.f32 %v2961, %v3172
      %v3174 = vpop.f32.mrb[0].mxu0
      %3175 = vmatprep.mubr.bf16.mxu0 0
      %3176 = vmatmul.mubr.bf16.gmra.mrb[0].mxu0 %v3073
      %v3177 = vpop.f32.mrb[0].mxu0
      %v3178 = vadd.f32 %v2966, %v3177
      %v3179 = vpop.f32.mrb[0].mxu0
      %v3180 = vpop.f32.mrb[0].mxu0
      %v3181 = vadd.f32 %v2969, %v3180
      %v3182 = vpop.f32.mrb[0].mxu0
      %3183 = vmatprep.mubr.bf16.mxu0 0
      %3184 = vmatmul.mubr.bf16.gmra.mrb[0].mxu0 %v3076
      %v3185 = vpop.f32.mrb[0].mxu0
      %v3186 = vadd.f32 %v2974, %v3185
      %v3187 = vpop.f32.mrb[0].mxu0
      %v3188 = vpop.f32.mrb[0].mxu0
      %v3189 = vadd.f32 %v2977, %v3188
      %v3190 = vpop.f32.mrb[0].mxu0
      %3191 = vmatprep.mubr.bf16.mxu0 0
      %3192 = vmatmul.mubr.bf16.gmra.mrb[0].mxu0 %v3079
      %v3193 = vpop.f32.mrb[0].mxu0
      %v3194 = vadd.f32 %v2982, %v3193
      %v3195 = vpop.f32.mrb[0].mxu0
      %v3196 = vpop.f32.mrb[0].mxu0
      %v3197 = vadd.f32 %v2985, %v3196
      %v3198 = vpop.f32.mrb[0].mxu0
      %3199 = vmatprep.mubr.bf16.mxu0 0
      %3200 = vmatmul.mubr.bf16.gmra.mrb[0].mxu0 %v3082
      %v3201 = vpop.f32.mrb[0].mxu0
      %v3202 = vadd.f32 %v2990, %v3201
      %v3203 = vpop.f32.mrb[0].mxu0
      %v3204 = vpop.f32.mrb[0].mxu0
      %v3205 = vadd.f32 %v2993, %v3204
      %v3206 = vpop.f32.mrb[0].mxu0
      %3207 = vmatprep.mubr.bf16.mxu0 0
      %3208 = vmatmul.mubr.bf16.gmra.mrb[0].mxu0 %v3085
      %v3209 = vpop.f32.mrb[0].mxu0
      %v3210 = vadd.f32 %v2998, %v3209
      %v3211 = vpop.f32.mrb[0].mxu0
      %v3212 = vpop.f32.mrb[0].mxu0
      %v3213 = vadd.f32 %v3001, %v3212
      %v3214 = vpop.f32.mrb[0].mxu0
      %3215 = vmatprep.mubr.bf16.mxu0 0
      %3216 = vmatmul.mubr.bf16.gmra.mrb[0].mxu0 %v3088
      %v3217 = vpop.f32.mrb[0].mxu0
      %v3218 = vadd.f32 %v3006, %v3217
      %v3219 = vpop.f32.mrb[0].mxu0
      %v3220 = vpop.f32.mrb[0].mxu0
      %v3221 = vadd.f32 %v3009, %v3220
      %v3222 = vpop.f32.mrb[0].mxu0
      %3223 = vmatprep.mubr.bf16.mxu0 0
      %3224 = vmatmul.mubr.bf16.gmra.mrb[0].mxu0 %v3091
      %v3225 = vpop.f32.mrb[0].mxu0
      %v3226 = vadd.f32 %v3014, %v3225
      %v3227 = vpop.f32.mrb[0].mxu0
      %v3228 = vpop.f32.mrb[0].mxu0
      %v3229 = vadd.f32 %v3017, %v3228
      %v3230 = vpop.f32.mrb[0].mxu0
      %3231 = vmatprep.mubr.bf16.mxu0 0
      %3232 = vmatmul.mubr.bf16.gmra.mrb[0].mxu0 %v3094
      %v3233 = vpop.f32.mrb[0].mxu0
      %v3234 = vadd.f32 %v3022, %v3233
      %v3235 = vpop.f32.mrb[0].mxu0
      %v3236 = vpop.f32.mrb[0].mxu0
      %v3237 = vadd.f32 %v3025, %v3236
      %v3238 = vpop.f32.mrb[0].mxu0
      %3239 = vmatprep.mubr.bf16.mxu0 0
      %3240 = vmatmul.mubr.bf16.gmra.mrb[0].mxu0 %v3097
      %v3241 = vpop.f32.mrb[0].mxu0
      %v3242 = vadd.f32 %v3030, %v3241
      %v3243 = vpop.f32.mrb[0].mxu0
      %v3244 = vpop.f32.mrb[0].mxu0
      %v3245 = vadd.f32 %v3033, %v3244
      %v3246 = vpop.f32.mrb[0].mxu0
      %3247 = vmatprep.mubr.bf16.mxu0 0
      %3248 = vmatmul.mubr.bf16.gmra.mrb[0].mxu0 %v3100
      %v3249 = vpop.f32.mrb[0].mxu0
      %v3250 = vadd.f32 %v3038, %v3249
      %v3251 = vpop.f32.mrb[0].mxu0
      %v3252 = vpop.f32.mrb[0].mxu0
      %v3253 = vadd.f32 %v3041, %v3252
      %v3254 = vpop.f32.mrb[0].mxu0
      %3255 = vmatprep.mubr.bf16.mxu0 0
      %3256 = vmatmul.mubr.bf16.gmra.mrb[0].mxu0 %v3103
      %v3257 = vpop.f32.mrb[0].mxu0
      %v3258 = vadd.f32 %v3046, %v3257
      %v3259 = vpop.f32.mrb[0].mxu0
      %v3260 = vpop.f32.mrb[0].mxu0
      %v3261 = vadd.f32 %v3049, %v3260
      %v3262 = vpop.f32.mrb[0].mxu0
      %3263 = vmatprep.mubr.bf16.mxu0 0
      %3264 = vmatmul.mubr.bf16.gmra.mrb[0].mxu0 %v3106
      %v3265 = vpop.f32.mrb[0].mxu0
      %v3266 = vadd.f32 %v3054, %v3265
      %v3267 = vpop.f32.mrb[0].mxu0
      %v3268 = vpop.f32.mrb[0].mxu0
      %v3269 = vadd.f32 %v3057, %v3268
      %v3270 = vpop.f32.mrb[0].mxu0
      %3271 = vdwg.mxu0
      %v3272 = vpack.c.bf16 %v2141, %v2140
      %v3273 = vpack.c.bf16 %v2143, %v2142
      %v3274 = vpack.c.bf16 %v2145, %v2144
      %v3275 = vpack.c.bf16 %v2147, %v2146
      %v3276 = vpack.c.bf16 %v2149, %v2148
      %v3277 = vpack.c.bf16 %v2151, %v2150
      %v3278 = vpack.c.bf16 %v2153, %v2152
      %v3279 = vpack.c.bf16 %v2155, %v2154
      %v3280 = vpack.c.bf16 %v2157, %v2156
      %v3281 = vpack.c.bf16 %v2159, %v2158
      %v3282 = vpack.c.bf16 %v2161, %v2160
      %v3283 = vpack.c.bf16 %v2163, %v2162
      %v3284 = vpack.c.bf16 %v2165, %v2164
      %v3285 = vpack.c.bf16 %v2167, %v2166
      %v3286 = vpack.c.bf16 %v2169, %v2168
      %v3287 = vpack.c.bf16 %v2171, %v2170
      %s3288 = scalar_lea.vmem %s4, 2
      %v3289 = vld [vmem:[%s3288] sm:$0x1]
      %v3291 = vsel %vm280, %v3272, 0
      %v3294 = vsel %vm280, %v3273, 0
      %v3297 = vsel %vm280, %v3274, 0
      %v3300 = vsel %vm280, %v3275, 0
      %v3303 = vsel %vm280, %v3276, 0
      %v3306 = vsel %vm280, %v3277, 0
      %v3309 = vsel %vm280, %v3278, 0
      %v3312 = vsel %vm280, %v3279, 0
      %v3315 = vsel %vm280, %v3280, 0
      %v3318 = vsel %vm280, %v3281, 0
      %v3321 = vsel %vm280, %v3282, 0
      %v3324 = vsel %vm280, %v3283, 0
      %v3327 = vsel %vm280, %v3284, 0
      %v3330 = vsel %vm280, %v3285, 0
      %v3333 = vsel %vm280, %v3286, 0
      %v3336 = vsel %vm280, %v3287, 0
      %v3339 = vsel %vm2895, %v3289, 0
      %3341 = vmatprep.subr.bf16.mxu0 0
      %3342 = vmatpush1.bf16.msra.mxu0 %v3339
      %3343 = vmatprep.subr.bf16.mxu0 0
      %3344 = vmatpush1.bf16.msra.mxu0 0
      %3345 = vmatprep.subr.bf16.mxu0 0
      %3346 = vmatpush1.bf16.msra.mxu0 0
      %3347 = vmatprep.subr.bf16.mxu0 0
      %3348 = vmatpush1.bf16.msra.mxu0 0
      %3349 = vmatprep.subr.bf16.mxu0 0
      %3350 = vmatpush1.bf16.msra.mxu0 0
      %3351 = vmatprep.subr.bf16.mxu0 0
      %3352 = vmatpush1.bf16.msra.mxu0 0
      %3353 = vmatprep.subr.bf16.mxu0 0
      %3354 = vmatpush1.bf16.msra.mxu0 0
      %3355 = vmatprep.subr.bf16.mxu0 0
      %3356 = vmatpush1.bf16.msra.mxu0 0
      %3357 = vmatprep.subr.bf16.mxu0 0
      %3358 = vmatpush1.bf16.msra.mxu0 0
      %3359 = vmatprep.subr.bf16.mxu0 0
      %3360 = vmatpush1.bf16.msra.mxu0 0
      %3361 = vmatprep.subr.bf16.mxu0 0
      %3362 = vmatpush1.bf16.msra.mxu0 0
      %3363 = vmatprep.subr.bf16.mxu0 0
      %3364 = vmatpush1.bf16.msra.mxu0 0
      %3365 = vmatprep.subr.bf16.mxu0 0
      %3366 = vmatpush1.bf16.msra.mxu0 0
      %3367 = vmatprep.subr.bf16.mxu0 0
      %3368 = vmatpush1.bf16.msra.mxu0 0
      %3369 = vmatprep.subr.bf16.mxu0 0
      %3370 = vmatpush1.bf16.msra.mxu0 0
      %3371 = vmatprep.subr.bf16.mxu0 0
      %3372 = vmatpush1.bf16.msra.mxu0 0
      %3373 = vmatprep.mubr.bf16.mxu0 0
      %3374 = vmatmul.mubr.bf16.gmra.mrb[0].mxu0 %v3291
      %v3375 = vpop.f32.mrb[0].mxu0
      %v3376 = vadd.f32 0.0, %v3375
      %v3377 = vpop.f32.mrb[0].mxu0
      %v3378 = vpop.f32.mrb[0].mxu0
      %v3379 = vadd.f32 0.0, %v3378
      %v3380 = vpop.f32.mrb[0].mxu0
      %3381 = vmatprep.mubr.bf16.mxu0 0
      %3382 = vmatmul.mubr.bf16.gmra.mrb[0].mxu0 %v3294
      %v3383 = vpop.f32.mrb[0].mxu0
      %v3384 = vadd.f32 0.0, %v3383
      %v3385 = vpop.f32.mrb[0].mxu0
      %v3386 = vpop.f32.mrb[0].mxu0
      %v3387 = vadd.f32 0.0, %v3386
      %v3388 = vpop.f32.mrb[0].mxu0
      %3389 = vmatprep.mubr.bf16.mxu0 0
      %3390 = vmatmul.mubr.bf16.gmra.mrb[0].mxu0 %v3297
      %v3391 = vpop.f32.mrb[0].mxu0
      %v3392 = vadd.f32 0.0, %v3391
      %v3393 = vpop.f32.mrb[0].mxu0
      %v3394 = vpop.f32.mrb[0].mxu0
      %v3395 = vadd.f32 0.0, %v3394
      %v3396 = vpop.f32.mrb[0].mxu0
      %3397 = vmatprep.mubr.bf16.mxu0 0
      %3398 = vmatmul.mubr.bf16.gmra.mrb[0].mxu0 %v3300
      %v3399 = vpop.f32.mrb[0].mxu0
      %v3400 = vadd.f32 0.0, %v3399
      %v3401 = vpop.f32.mrb[0].mxu0
      %v3402 = vpop.f32.mrb[0].mxu0
      %v3403 = vadd.f32 0.0, %v3402
      %v3404 = vpop.f32.mrb[0].mxu0
      %3405 = vmatprep.mubr.bf16.mxu0 0
      %3406 = vmatmul.mubr.bf16.gmra.mrb[0].mxu0 %v3303
      %v3407 = vpop.f32.mrb[0].mxu0
      %v3408 = vadd.f32 0.0, %v3407
      %v3409 = vpop.f32.mrb[0].mxu0
      %v3410 = vpop.f32.mrb[0].mxu0
      %v3411 = vadd.f32 0.0, %v3410
      %v3412 = vpop.f32.mrb[0].mxu0
      %3413 = vmatprep.mubr.bf16.mxu0 0
      %3414 = vmatmul.mubr.bf16.gmra.mrb[0].mxu0 %v3306
      %v3415 = vpop.f32.mrb[0].mxu0
      %v3416 = vadd.f32 0.0, %v3415
      %v3417 = vpop.f32.mrb[0].mxu0
      %v3418 = vpop.f32.mrb[0].mxu0
      %v3419 = vadd.f32 0.0, %v3418
      %v3420 = vpop.f32.mrb[0].mxu0
      %3421 = vmatprep.mubr.bf16.mxu0 0
      %3422 = vmatmul.mubr.bf16.gmra.mrb[0].mxu0 %v3309
      %v3423 = vpop.f32.mrb[0].mxu0
      %v3424 = vadd.f32 0.0, %v3423
      %v3425 = vpop.f32.mrb[0].mxu0
      %v3426 = vpop.f32.mrb[0].mxu0
      %v3427 = vadd.f32 0.0, %v3426
      %v3428 = vpop.f32.mrb[0].mxu0
      %3429 = vmatprep.mubr.bf16.mxu0 0
      %3430 = vmatmul.mubr.bf16.gmra.mrb[0].mxu0 %v3312
      %v3431 = vpop.f32.mrb[0].mxu0
      %v3432 = vadd.f32 0.0, %v3431
      %v3433 = vpop.f32.mrb[0].mxu0
      %v3434 = vpop.f32.mrb[0].mxu0
      %v3435 = vadd.f32 0.0, %v3434
      %v3436 = vpop.f32.mrb[0].mxu0
      %3437 = vmatprep.mubr.bf16.mxu0 0
      %3438 = vmatmul.mubr.bf16.gmra.mrb[0].mxu0 %v3315
      %v3439 = vpop.f32.mrb[0].mxu0
      %v3440 = vadd.f32 0.0, %v3439
      %v3441 = vpop.f32.mrb[0].mxu0
      %v3442 = vpop.f32.mrb[0].mxu0
      %v3443 = vadd.f32 0.0, %v3442
      %v3444 = vpop.f32.mrb[0].mxu0
      %3445 = vmatprep.mubr.bf16.mxu0 0
      %3446 = vmatmul.mubr.bf16.gmra.mrb[0].mxu0 %v3318
      %v3447 = vpop.f32.mrb[0].mxu0
      %v3448 = vadd.f32 0.0, %v3447
      %v3449 = vpop.f32.mrb[0].mxu0
      %v3450 = vpop.f32.mrb[0].mxu0
      %v3451 = vadd.f32 0.0, %v3450
      %v3452 = vpop.f32.mrb[0].mxu0
      %3453 = vmatprep.mubr.bf16.mxu0 0
      %3454 = vmatmul.mubr.bf16.gmra.mrb[0].mxu0 %v3321
      %v3455 = vpop.f32.mrb[0].mxu0
      %v3456 = vadd.f32 0.0, %v3455
      %v3457 = vpop.f32.mrb[0].mxu0
      %v3458 = vpop.f32.mrb[0].mxu0
      %v3459 = vadd.f32 0.0, %v3458
      %v3460 = vpop.f32.mrb[0].mxu0
      %3461 = vmatprep.mubr.bf16.mxu0 0
      %3462 = vmatmul.mubr.bf16.gmra.mrb[0].mxu0 %v3324
      %v3463 = vpop.f32.mrb[0].mxu0
      %v3464 = vadd.f32 0.0, %v3463
      %v3465 = vpop.f32.mrb[0].mxu0
      %v3466 = vpop.f32.mrb[0].mxu0
      %v3467 = vadd.f32 0.0, %v3466
      %v3468 = vpop.f32.mrb[0].mxu0
      %3469 = vmatprep.mubr.bf16.mxu0 0
      %3470 = vmatmul.mubr.bf16.gmra.mrb[0].mxu0 %v3327
      %v3471 = vpop.f32.mrb[0].mxu0
      %v3472 = vadd.f32 0.0, %v3471
      %v3473 = vpop.f32.mrb[0].mxu0
      %v3474 = vpop.f32.mrb[0].mxu0
      %v3475 = vadd.f32 0.0, %v3474
      %v3476 = vpop.f32.mrb[0].mxu0
      %3477 = vmatprep.mubr.bf16.mxu0 0
      %3478 = vmatmul.mubr.bf16.gmra.mrb[0].mxu0 %v3330
      %v3479 = vpop.f32.mrb[0].mxu0
      %v3480 = vadd.f32 0.0, %v3479
      %v3481 = vpop.f32.mrb[0].mxu0
      %v3482 = vpop.f32.mrb[0].mxu0
      %v3483 = vadd.f32 0.0, %v3482
      %v3484 = vpop.f32.mrb[0].mxu0
      %3485 = vmatprep.mubr.bf16.mxu0 0
      %3486 = vmatmul.mubr.bf16.gmra.mrb[0].mxu0 %v3333
      %v3487 = vpop.f32.mrb[0].mxu0
      %v3488 = vadd.f32 0.0, %v3487
      %v3489 = vpop.f32.mrb[0].mxu0
      %v3490 = vpop.f32.mrb[0].mxu0
      %v3491 = vadd.f32 0.0, %v3490
      %v3492 = vpop.f32.mrb[0].mxu0
      %3493 = vmatprep.mubr.bf16.mxu0 0
      %3494 = vmatmul.mubr.bf16.gmra.mrb[0].mxu0 %v3336
      %v3495 = vpop.f32.mrb[0].mxu0
      %v3496 = vadd.f32 0.0, %v3495
      %v3497 = vpop.f32.mrb[0].mxu0
      %v3498 = vpop.f32.mrb[0].mxu0
      %v3499 = vadd.f32 0.0, %v3498
      %v3500 = vpop.f32.mrb[0].mxu0
      %3501 = vdwg.mxu0
      %v3502 = vadd.f32 %v3146, %v3376
      %v3503 = vadd.f32 %v3149, %v3379
      %v3504 = vadd.f32 %v3154, %v3384
      %v3505 = vadd.f32 %v3157, %v3387
      %v3506 = vadd.f32 %v3162, %v3392
      %v3507 = vadd.f32 %v3165, %v3395
      %v3508 = vadd.f32 %v3170, %v3400
      %v3509 = vadd.f32 %v3173, %v3403
      %v3510 = vadd.f32 %v3178, %v3408
      %v3511 = vadd.f32 %v3181, %v3411
      %v3512 = vadd.f32 %v3186, %v3416
      %v3513 = vadd.f32 %v3189, %v3419
      %v3514 = vadd.f32 %v3194, %v3424
      %v3515 = vadd.f32 %v3197, %v3427
      %v3516 = vadd.f32 %v3202, %v3432
      %v3517 = vadd.f32 %v3205, %v3435
      %v3518 = vadd.f32 %v3210, %v3440
      %v3519 = vadd.f32 %v3213, %v3443
      %v3520 = vadd.f32 %v3218, %v3448
      %v3521 = vadd.f32 %v3221, %v3451
      %v3522 = vadd.f32 %v3226, %v3456
      %v3523 = vadd.f32 %v3229, %v3459
      %v3524 = vadd.f32 %v3234, %v3464
      %v3525 = vadd.f32 %v3237, %v3467
      %v3526 = vadd.f32 %v3242, %v3472
      %v3527 = vadd.f32 %v3245, %v3475
      %v3528 = vadd.f32 %v3250, %v3480
      %v3529 = vadd.f32 %v3253, %v3483
      %v3530 = vadd.f32 %v3258, %v3488
      %v3531 = vadd.f32 %v3261, %v3491
      %v3532 = vadd.f32 %v3266, %v3496
      %v3533 = vadd.f32 %v3269, %v3499
      %v3534 = vpack.c.bf16 %v2781, %v2780
      %v3535 = vpack.c.bf16 %v2783, %v2782
      %v3536 = vpack.c.bf16 %v2785, %v2784
      %v3537 = vpack.c.bf16 %v2787, %v2786
      %v3538 = vpack.c.bf16 %v2789, %v2788
      %v3539 = vpack.c.bf16 %v2791, %v2790
      %v3540 = vpack.c.bf16 %v2793, %v2792
      %v3541 = vpack.c.bf16 %v2795, %v2794
      %v3542 = vpack.c.bf16 %v2797, %v2796
      %v3543 = vpack.c.bf16 %v2799, %v2798
      %v3544 = vpack.c.bf16 %v2801, %v2800
      %v3545 = vpack.c.bf16 %v2803, %v2802
      %v3546 = vpack.c.bf16 %v2805, %v2804
      %v3547 = vpack.c.bf16 %v2807, %v2806
      %v3548 = vpack.c.bf16 %v2809, %v2808
      %v3549 = vpack.c.bf16 %v2811, %v2810
      %s3550 = scalar_lea.vmem %s4, 3
      %v3551 = vld [vmem:[%s3550] sm:$0x1]
      %v3553 = vsel %vm280, %v3534, 0
      %v3556 = vsel %vm280, %v3535, 0
      %v3559 = vsel %vm280, %v3536, 0
      %v3562 = vsel %vm280, %v3537, 0
      %v3565 = vsel %vm280, %v3538, 0
      %v3568 = vsel %vm280, %v3539, 0
      %v3571 = vsel %vm280, %v3540, 0
      %v3574 = vsel %vm280, %v3541, 0
      %v3577 = vsel %vm280, %v3542, 0
      %v3580 = vsel %vm280, %v3543, 0
      %v3583 = vsel %vm280, %v3544, 0
      %v3586 = vsel %vm280, %v3545, 0
      %v3589 = vsel %vm280, %v3546, 0
      %v3592 = vsel %vm280, %v3547, 0
      %v3595 = vsel %vm280, %v3548, 0
      %v3598 = vsel %vm280, %v3549, 0
      %v3601 = vsel %vm2895, %v3551, 0
      %3603 = vmatprep.subr.bf16.mxu0 0
      %3604 = vmatpush1.bf16.msra.mxu0 %v3601
      %3605 = vmatprep.subr.bf16.mxu0 0
      %3606 = vmatpush1.bf16.msra.mxu0 0
      %3607 = vmatprep.subr.bf16.mxu0 0
      %3608 = vmatpush1.bf16.msra.mxu0 0
      %3609 = vmatprep.subr.bf16.mxu0 0
      %3610 = vmatpush1.bf16.msra.mxu0 0
      %3611 = vmatprep.subr.bf16.mxu0 0
      %3612 = vmatpush1.bf16.msra.mxu0 0
      %3613 = vmatprep.subr.bf16.mxu0 0
      %3614 = vmatpush1.bf16.msra.mxu0 0
      %3615 = vmatprep.subr.bf16.mxu0 0
      %3616 = vmatpush1.bf16.msra.mxu0 0
      %3617 = vmatprep.subr.bf16.mxu0 0
      %3618 = vmatpush1.bf16.msra.mxu0 0
      %3619 = vmatprep.subr.bf16.mxu0 0
      %3620 = vmatpush1.bf16.msra.mxu0 0
      %3621 = vmatprep.subr.bf16.mxu0 0
      %3622 = vmatpush1.bf16.msra.mxu0 0
      %3623 = vmatprep.subr.bf16.mxu0 0
      %3624 = vmatpush1.bf16.msra.mxu0 0
      %3625 = vmatprep.subr.bf16.mxu0 0
      %3626 = vmatpush1.bf16.msra.mxu0 0
      %3627 = vmatprep.subr.bf16.mxu0 0
      %3628 = vmatpush1.bf16.msra.mxu0 0
      %3629 = vmatprep.subr.bf16.mxu0 0
      %3630 = vmatpush1.bf16.msra.mxu0 0
      %3631 = vmatprep.subr.bf16.mxu0 0
      %3632 = vmatpush1.bf16.msra.mxu0 0
      %3633 = vmatprep.subr.bf16.mxu0 0
      %3634 = vmatpush1.bf16.msra.mxu0 0
      %3635 = vmatprep.mubr.bf16.mxu0 0
      %3636 = vmatmul.mubr.bf16.gmra.mrb[0].mxu0 %v3553
      %v3637 = vpop.f32.mrb[0].mxu0
      %v3638 = vadd.f32 0.0, %v3637
      %v3639 = vpop.f32.mrb[0].mxu0
      %v3640 = vpop.f32.mrb[0].mxu0
      %v3641 = vadd.f32 0.0, %v3640
      %v3642 = vpop.f32.mrb[0].mxu0
      %3643 = vmatprep.mubr.bf16.mxu0 0
      %3644 = vmatmul.mubr.bf16.gmra.mrb[0].mxu0 %v3556
      %v3645 = vpop.f32.mrb[0].mxu0
      %v3646 = vadd.f32 0.0, %v3645
      %v3647 = vpop.f32.mrb[0].mxu0
      %v3648 = vpop.f32.mrb[0].mxu0
      %v3649 = vadd.f32 0.0, %v3648
      %v3650 = vpop.f32.mrb[0].mxu0
      %3651 = vmatprep.mubr.bf16.mxu0 0
      %3652 = vmatmul.mubr.bf16.gmra.mrb[0].mxu0 %v3559
      %v3653 = vpop.f32.mrb[0].mxu0
      %v3654 = vadd.f32 0.0, %v3653
      %v3655 = vpop.f32.mrb[0].mxu0
      %v3656 = vpop.f32.mrb[0].mxu0
      %v3657 = vadd.f32 0.0, %v3656
      %v3658 = vpop.f32.mrb[0].mxu0
      %3659 = vmatprep.mubr.bf16.mxu0 0
      %3660 = vmatmul.mubr.bf16.gmra.mrb[0].mxu0 %v3562
      %v3661 = vpop.f32.mrb[0].mxu0
      %v3662 = vadd.f32 0.0, %v3661
      %v3663 = vpop.f32.mrb[0].mxu0
      %v3664 = vpop.f32.mrb[0].mxu0
      %v3665 = vadd.f32 0.0, %v3664
      %v3666 = vpop.f32.mrb[0].mxu0
      %3667 = vmatprep.mubr.bf16.mxu0 0
      %3668 = vmatmul.mubr.bf16.gmra.mrb[0].mxu0 %v3565
      %v3669 = vpop.f32.mrb[0].mxu0
      %v3670 = vadd.f32 0.0, %v3669
      %v3671 = vpop.f32.mrb[0].mxu0
      %v3672 = vpop.f32.mrb[0].mxu0
      %v3673 = vadd.f32 0.0, %v3672
      %v3674 = vpop.f32.mrb[0].mxu0
      %3675 = vmatprep.mubr.bf16.mxu0 0
      %3676 = vmatmul.mubr.bf16.gmra.mrb[0].mxu0 %v3568
      %v3677 = vpop.f32.mrb[0].mxu0
      %v3678 = vadd.f32 0.0, %v3677
      %v3679 = vpop.f32.mrb[0].mxu0
      %v3680 = vpop.f32.mrb[0].mxu0
      %v3681 = vadd.f32 0.0, %v3680
      %v3682 = vpop.f32.mrb[0].mxu0
      %3683 = vmatprep.mubr.bf16.mxu0 0
      %3684 = vmatmul.mubr.bf16.gmra.mrb[0].mxu0 %v3571
      %v3685 = vpop.f32.mrb[0].mxu0
      %v3686 = vadd.f32 0.0, %v3685
      %v3687 = vpop.f32.mrb[0].mxu0
      %v3688 = vpop.f32.mrb[0].mxu0
      %v3689 = vadd.f32 0.0, %v3688
      %v3690 = vpop.f32.mrb[0].mxu0
      %3691 = vmatprep.mubr.bf16.mxu0 0
      %3692 = vmatmul.mubr.bf16.gmra.mrb[0].mxu0 %v3574
      %v3693 = vpop.f32.mrb[0].mxu0
      %v3694 = vadd.f32 0.0, %v3693
      %v3695 = vpop.f32.mrb[0].mxu0
      %v3696 = vpop.f32.mrb[0].mxu0
      %v3697 = vadd.f32 0.0, %v3696
      %v3698 = vpop.f32.mrb[0].mxu0
      %3699 = vmatprep.mubr.bf16.mxu0 0
      %3700 = vmatmul.mubr.bf16.gmra.mrb[0].mxu0 %v3577
      %v3701 = vpop.f32.mrb[0].mxu0
      %v3702 = vadd.f32 0.0, %v3701
      %v3703 = vpop.f32.mrb[0].mxu0
      %v3704 = vpop.f32.mrb[0].mxu0
      %v3705 = vadd.f32 0.0, %v3704
      %v3706 = vpop.f32.mrb[0].mxu0
      %3707 = vmatprep.mubr.bf16.mxu0 0
      %3708 = vmatmul.mubr.bf16.gmra.mrb[0].mxu0 %v3580
      %v3709 = vpop.f32.mrb[0].mxu0
      %v3710 = vadd.f32 0.0, %v3709
      %v3711 = vpop.f32.mrb[0].mxu0
      %v3712 = vpop.f32.mrb[0].mxu0
      %v3713 = vadd.f32 0.0, %v3712
      %v3714 = vpop.f32.mrb[0].mxu0
      %3715 = vmatprep.mubr.bf16.mxu0 0
      %3716 = vmatmul.mubr.bf16.gmra.mrb[0].mxu0 %v3583
      %v3717 = vpop.f32.mrb[0].mxu0
      %v3718 = vadd.f32 0.0, %v3717
      %v3719 = vpop.f32.mrb[0].mxu0
      %v3720 = vpop.f32.mrb[0].mxu0
      %v3721 = vadd.f32 0.0, %v3720
      %v3722 = vpop.f32.mrb[0].mxu0
      %3723 = vmatprep.mubr.bf16.mxu0 0
      %3724 = vmatmul.mubr.bf16.gmra.mrb[0].mxu0 %v3586
      %v3725 = vpop.f32.mrb[0].mxu0
      %v3726 = vadd.f32 0.0, %v3725
      %v3727 = vpop.f32.mrb[0].mxu0
      %v3728 = vpop.f32.mrb[0].mxu0
      %v3729 = vadd.f32 0.0, %v3728
      %v3730 = vpop.f32.mrb[0].mxu0
      %3731 = vmatprep.mubr.bf16.mxu0 0
      %3732 = vmatmul.mubr.bf16.gmra.mrb[0].mxu0 %v3589
      %v3733 = vpop.f32.mrb[0].mxu0
      %v3734 = vadd.f32 0.0, %v3733
      %v3735 = vpop.f32.mrb[0].mxu0
      %v3736 = vpop.f32.mrb[0].mxu0
      %v3737 = vadd.f32 0.0, %v3736
      %v3738 = vpop.f32.mrb[0].mxu0
      %3739 = vmatprep.mubr.bf16.mxu0 0
      %3740 = vmatmul.mubr.bf16.gmra.mrb[0].mxu0 %v3592
      %v3741 = vpop.f32.mrb[0].mxu0
      %v3742 = vadd.f32 0.0, %v3741
      %v3743 = vpop.f32.mrb[0].mxu0
      %v3744 = vpop.f32.mrb[0].mxu0
      %v3745 = vadd.f32 0.0, %v3744
      %v3746 = vpop.f32.mrb[0].mxu0
      %3747 = vmatprep.mubr.bf16.mxu0 0
      %3748 = vmatmul.mubr.bf16.gmra.mrb[0].mxu0 %v3595
      %v3749 = vpop.f32.mrb[0].mxu0
      %v3750 = vadd.f32 0.0, %v3749
      %v3751 = vpop.f32.mrb[0].mxu0
      %v3752 = vpop.f32.mrb[0].mxu0
      %v3753 = vadd.f32 0.0, %v3752
      %v3754 = vpop.f32.mrb[0].mxu0
      %3755 = vmatprep.mubr.bf16.mxu0 0
      %3756 = vmatmul.mubr.bf16.gmra.mrb[0].mxu0 %v3598
      %v3757 = vpop.f32.mrb[0].mxu0
      %v3758 = vadd.f32 0.0, %v3757
      %v3759 = vpop.f32.mrb[0].mxu0
      %v3760 = vpop.f32.mrb[0].mxu0
      %v3761 = vadd.f32 0.0, %v3760
      %v3762 = vpop.f32.mrb[0].mxu0
      %3763 = vdwg.mxu0
      %v3764 = vadd.f32 %v3502, %v3638
      %v3765 = vadd.f32 %v3503, %v3641
      %v3766 = vadd.f32 %v3504, %v3646
      %v3767 = vadd.f32 %v3505, %v3649
      %v3768 = vadd.f32 %v3506, %v3654
      %v3769 = vadd.f32 %v3507, %v3657
      %v3770 = vadd.f32 %v3508, %v3662
      %v3771 = vadd.f32 %v3509, %v3665
      %v3772 = vadd.f32 %v3510, %v3670
      %v3773 = vadd.f32 %v3511, %v3673
      %v3774 = vadd.f32 %v3512, %v3678
      %v3775 = vadd.f32 %v3513, %v3681
      %v3776 = vadd.f32 %v3514, %v3686
      %v3777 = vadd.f32 %v3515, %v3689
      %v3778 = vadd.f32 %v3516, %v3694
      %v3779 = vadd.f32 %v3517, %v3697
      %v3780 = vadd.f32 %v3518, %v3702
      %v3781 = vadd.f32 %v3519, %v3705
      %v3782 = vadd.f32 %v3520, %v3710
      %v3783 = vadd.f32 %v3521, %v3713
      %v3784 = vadd.f32 %v3522, %v3718
      %v3785 = vadd.f32 %v3523, %v3721
      %v3786 = vadd.f32 %v3524, %v3726
      %v3787 = vadd.f32 %v3525, %v3729
      %v3788 = vadd.f32 %v3526, %v3734
      %v3789 = vadd.f32 %v3527, %v3737
      %v3790 = vadd.f32 %v3528, %v3742
      %v3791 = vadd.f32 %v3529, %v3745
      %v3792 = vadd.f32 %v3530, %v3750
      %v3793 = vadd.f32 %v3531, %v3753
      %v3794 = vadd.f32 %v3532, %v3758
      %v3795 = vadd.f32 %v3533, %v3761
      %v3796 = vld [vmem:[%s5] sm:$0x1]
      %v3798 = vlaneseq
      %v3799 = vshrl.u32 %v3798, 7
      %v3800 = vsub.s32 0, %v3799
      %v3801 = vrot.slane %v3796, %v3800
      %v3803 = vmul.f32 %v3764, %v3801
      %v3804 = vmul.f32 %v3765, %v3801
      %v3805 = vmul.f32 %v3766, %v3801
      %v3806 = vmul.f32 %v3767, %v3801
      %v3807 = vmul.f32 %v3768, %v3801
      %v3808 = vmul.f32 %v3769, %v3801
      %v3809 = vmul.f32 %v3770, %v3801
      %v3810 = vmul.f32 %v3771, %v3801
      %v3811 = vmul.f32 %v3772, %v3801
      %v3812 = vmul.f32 %v3773, %v3801
      %v3813 = vmul.f32 %v3774, %v3801
      %v3814 = vmul.f32 %v3775, %v3801
      %v3815 = vmul.f32 %v3776, %v3801
      %v3816 = vmul.f32 %v3777, %v3801
      %v3817 = vmul.f32 %v3778, %v3801
      %v3818 = vmul.f32 %v3779, %v3801
      %v3819 = vmul.f32 %v3780, %v3801
      %v3820 = vmul.f32 %v3781, %v3801
      %v3821 = vmul.f32 %v3782, %v3801
      %v3822 = vmul.f32 %v3783, %v3801
      %v3823 = vmul.f32 %v3784, %v3801
      %v3824 = vmul.f32 %v3785, %v3801
      %v3825 = vmul.f32 %v3786, %v3801
      %v3826 = vmul.f32 %v3787, %v3801
      %v3827 = vmul.f32 %v3788, %v3801
      %v3828 = vmul.f32 %v3789, %v3801
      %v3829 = vmul.f32 %v3790, %v3801
      %v3830 = vmul.f32 %v3791, %v3801
      %v3831 = vmul.f32 %v3792, %v3801
      %v3832 = vmul.f32 %v3793, %v3801
      %v3833 = vmul.f32 %v3794, %v3801
      %v3834 = vmul.f32 %v3795, %v3801
      %v3835 = vld [vmem:[%s6] sm:$0x1]
      %v3837 = vlaneseq
      %v3838 = vshrl.u32 %v3837, 7
      %v3839 = vsub.s32 0, %v3838
      %v3840 = vrot.slane %v3835, %v3839
      %v3842 = vadd.f32 %v3803, %v3840
      %v3843 = vadd.f32 %v3804, %v3840
      %v3844 = vadd.f32 %v3805, %v3840
      %v3845 = vadd.f32 %v3806, %v3840
      %v3846 = vadd.f32 %v3807, %v3840
      %v3847 = vadd.f32 %v3808, %v3840
      %v3848 = vadd.f32 %v3809, %v3840
      %v3849 = vadd.f32 %v3810, %v3840
      %v3850 = vadd.f32 %v3811, %v3840
      %v3851 = vadd.f32 %v3812, %v3840
      %v3852 = vadd.f32 %v3813, %v3840
      %v3853 = vadd.f32 %v3814, %v3840
      %v3854 = vadd.f32 %v3815, %v3840
      %v3855 = vadd.f32 %v3816, %v3840
      %v3856 = vadd.f32 %v3817, %v3840
      %v3857 = vadd.f32 %v3818, %v3840
      %v3858 = vadd.f32 %v3819, %v3840
      %v3859 = vadd.f32 %v3820, %v3840
      %v3860 = vadd.f32 %v3821, %v3840
      %v3861 = vadd.f32 %v3822, %v3840
      %v3862 = vadd.f32 %v3823, %v3840
      %v3863 = vadd.f32 %v3824, %v3840
      %v3864 = vadd.f32 %v3825, %v3840
      %v3865 = vadd.f32 %v3826, %v3840
      %v3866 = vadd.f32 %v3827, %v3840
      %v3867 = vadd.f32 %v3828, %v3840
      %v3868 = vadd.f32 %v3829, %v3840
      %v3869 = vadd.f32 %v3830, %v3840
      %v3870 = vadd.f32 %v3831, %v3840
      %v3871 = vadd.f32 %v3832, %v3840
      %v3872 = vadd.f32 %v3833, %v3840
      %v3873 = vadd.f32 %v3834, %v3840
      %v3874 = vxor.u32 %v3842, 2147483648
      %v3875 = vxor.u32 %v3843, 2147483648
      %v3876 = vxor.u32 %v3844, 2147483648
      %v3877 = vxor.u32 %v3845, 2147483648
      %v3878 = vxor.u32 %v3846, 2147483648
      %v3879 = vxor.u32 %v3847, 2147483648
      %v3880 = vxor.u32 %v3848, 2147483648
      %v3881 = vxor.u32 %v3849, 2147483648
      %v3882 = vxor.u32 %v3850, 2147483648
      %v3883 = vxor.u32 %v3851, 2147483648
      %v3884 = vxor.u32 %v3852, 2147483648
      %v3885 = vxor.u32 %v3853, 2147483648
      %v3886 = vxor.u32 %v3854, 2147483648
      %v3887 = vxor.u32 %v3855, 2147483648
      %v3888 = vxor.u32 %v3856, 2147483648
      %v3889 = vxor.u32 %v3857, 2147483648
      %v3890 = vxor.u32 %v3858, 2147483648
      %v3891 = vxor.u32 %v3859, 2147483648
      %v3892 = vxor.u32 %v3860, 2147483648
      %v3893 = vxor.u32 %v3861, 2147483648
      %v3894 = vxor.u32 %v3862, 2147483648
      %v3895 = vxor.u32 %v3863, 2147483648
      %v3896 = vxor.u32 %v3864, 2147483648
      %v3897 = vxor.u32 %v3865, 2147483648
      %v3898 = vxor.u32 %v3866, 2147483648
      %v3899 = vxor.u32 %v3867, 2147483648
      %v3900 = vxor.u32 %v3868, 2147483648
      %v3901 = vxor.u32 %v3869, 2147483648
      %v3902 = vxor.u32 %v3870, 2147483648
      %v3903 = vxor.u32 %v3871, 2147483648
      %v3904 = vxor.u32 %v3872, 2147483648
      %v3905 = vxor.u32 %v3873, 2147483648
      %v3906 = vmul.f32 %v3874, 1.442695
      %v3907 = vpow.pop %v3906
      %v3908 = vmul.f32 %v3875, 1.442695
      %v3909 = vpow.pop %v3908
      %v3910 = vmul.f32 %v3876, 1.442695
      %v3911 = vpow.pop %v3910
      %v3912 = vmul.f32 %v3877, 1.442695
      %v3913 = vpow.pop %v3912
      %v3914 = vmul.f32 %v3878, 1.442695
      %v3915 = vpow.pop %v3914
      %v3916 = vmul.f32 %v3879, 1.442695
      %v3917 = vpow.pop %v3916
      %v3918 = vmul.f32 %v3880, 1.442695
      %v3919 = vpow.pop %v3918
      %v3920 = vmul.f32 %v3881, 1.442695
      %v3921 = vpow.pop %v3920
      %v3922 = vmul.f32 %v3882, 1.442695
      %v3923 = vpow.pop %v3922
      %v3924 = vmul.f32 %v3883, 1.442695
      %v3925 = vpow.pop %v3924
      %v3926 = vmul.f32 %v3884, 1.442695
      %v3927 = vpow.pop %v3926
      %v3928 = vmul.f32 %v3885, 1.442695
      %v3929 = vpow.pop %v3928
      %v3930 = vmul.f32 %v3886, 1.442695
      %v3931 = vpow.pop %v3930
      %v3932 = vmul.f32 %v3887, 1.442695
      %v3933 = vpow.pop %v3932
      %v3934 = vmul.f32 %v3888, 1.442695
      %v3935 = vpow.pop %v3934
      %v3936 = vmul.f32 %v3889, 1.442695
      %v3937 = vpow.pop %v3936
      %v3938 = vmul.f32 %v3890, 1.442695
      %v3939 = vpow.pop %v3938
      %v3940 = vmul.f32 %v3891, 1.442695
      %v3941 = vpow.pop %v3940
      %v3942 = vmul.f32 %v3892, 1.442695
      %v3943 = vpow.pop %v3942
      %v3944 = vmul.f32 %v3893, 1.442695
      %v3945 = vpow.pop %v3944
      %v3946 = vmul.f32 %v3894, 1.442695
      %v3947 = vpow.pop %v3946
      %v3948 = vmul.f32 %v3895, 1.442695
      %v3949 = vpow.pop %v3948
      %v3950 = vmul.f32 %v3896, 1.442695
      %v3951 = vpow.pop %v3950
      %v3952 = vmul.f32 %v3897, 1.442695
      %v3953 = vpow.pop %v3952
      %v3954 = vmul.f32 %v3898, 1.442695
      %v3955 = vpow.pop %v3954
      %v3956 = vmul.f32 %v3899, 1.442695
      %v3957 = vpow.pop %v3956
      %v3958 = vmul.f32 %v3900, 1.442695
      %v3959 = vpow.pop %v3958
      %v3960 = vmul.f32 %v3901, 1.442695
      %v3961 = vpow.pop %v3960
      %v3962 = vmul.f32 %v3902, 1.442695
      %v3963 = vpow.pop %v3962
      %v3964 = vmul.f32 %v3903, 1.442695
      %v3965 = vpow.pop %v3964
      %v3966 = vmul.f32 %v3904, 1.442695
      %v3967 = vpow.pop %v3966
      %v3968 = vmul.f32 %v3905, 1.442695
      %v3969 = vpow.pop %v3968
      %v3970 = vadd.f32 %v3907, 1.0
      %v3971 = vadd.f32 %v3909, 1.0
      %v3972 = vadd.f32 %v3911, 1.0
      %v3973 = vadd.f32 %v3913, 1.0
      %v3974 = vadd.f32 %v3915, 1.0
      %v3975 = vadd.f32 %v3917, 1.0
      %v3976 = vadd.f32 %v3919, 1.0
      %v3977 = vadd.f32 %v3921, 1.0
      %v3978 = vadd.f32 %v3923, 1.0
      %v3979 = vadd.f32 %v3925, 1.0
      %v3980 = vadd.f32 %v3927, 1.0
      %v3981 = vadd.f32 %v3929, 1.0
      %v3982 = vadd.f32 %v3931, 1.0
      %v3983 = vadd.f32 %v3933, 1.0
      %v3984 = vadd.f32 %v3935, 1.0
      %v3985 = vadd.f32 %v3937, 1.0
      %v3986 = vadd.f32 %v3939, 1.0
      %v3987 = vadd.f32 %v3941, 1.0
      %v3988 = vadd.f32 %v3943, 1.0
      %v3989 = vadd.f32 %v3945, 1.0
      %v3990 = vadd.f32 %v3947, 1.0
      %v3991 = vadd.f32 %v3949, 1.0
      %v3992 = vadd.f32 %v3951, 1.0
      %v3993 = vadd.f32 %v3953, 1.0
      %v3994 = vadd.f32 %v3955, 1.0
      %v3995 = vadd.f32 %v3957, 1.0
      %v3996 = vadd.f32 %v3959, 1.0
      %v3997 = vadd.f32 %v3961, 1.0
      %v3998 = vadd.f32 %v3963, 1.0
      %v3999 = vadd.f32 %v3965, 1.0
      %v4000 = vadd.f32 %v3967, 1.0
      %v4001 = vadd.f32 %v3969, 1.0
      %v4002 = vrcp.pop %v3970
      %v4003 = vmul.f32 1.0, %v4002
      %v4004 = vrcp.pop %v3971
      %v4005 = vmul.f32 1.0, %v4004
      %v4006 = vrcp.pop %v3972
      %v4007 = vmul.f32 1.0, %v4006
      %v4008 = vrcp.pop %v3973
      %v4009 = vmul.f32 1.0, %v4008
      %v4010 = vrcp.pop %v3974
      %v4011 = vmul.f32 1.0, %v4010
      %v4012 = vrcp.pop %v3975
      %v4013 = vmul.f32 1.0, %v4012
      %v4014 = vrcp.pop %v3976
      %v4015 = vmul.f32 1.0, %v4014
      %v4016 = vrcp.pop %v3977
      %v4017 = vmul.f32 1.0, %v4016
      %v4018 = vrcp.pop %v3978
      %v4019 = vmul.f32 1.0, %v4018
      %v4020 = vrcp.pop %v3979
      %v4021 = vmul.f32 1.0, %v4020
      %v4022 = vrcp.pop %v3980
      %v4023 = vmul.f32 1.0, %v4022
      %v4024 = vrcp.pop %v3981
      %v4025 = vmul.f32 1.0, %v4024
      %v4026 = vrcp.pop %v3982
      %v4027 = vmul.f32 1.0, %v4026
      %v4028 = vrcp.pop %v3983
      %v4029 = vmul.f32 1.0, %v4028
      %v4030 = vrcp.pop %v3984
      %v4031 = vmul.f32 1.0, %v4030
      %v4032 = vrcp.pop %v3985
      %v4033 = vmul.f32 1.0, %v4032
      %v4034 = vrcp.pop %v3986
      %v4035 = vmul.f32 1.0, %v4034
      %v4036 = vrcp.pop %v3987
      %v4037 = vmul.f32 1.0, %v4036
      %v4038 = vrcp.pop %v3988
      %v4039 = vmul.f32 1.0, %v4038
      %v4040 = vrcp.pop %v3989
      %v4041 = vmul.f32 1.0, %v4040
      %v4042 = vrcp.pop %v3990
      %v4043 = vmul.f32 1.0, %v4042
      %v4044 = vrcp.pop %v3991
      %v4045 = vmul.f32 1.0, %v4044
      %v4046 = vrcp.pop %v3992
      %v4047 = vmul.f32 1.0, %v4046
      %v4048 = vrcp.pop %v3993
      %v4049 = vmul.f32 1.0, %v4048
      %v4050 = vrcp.pop %v3994
      %v4051 = vmul.f32 1.0, %v4050
      %v4052 = vrcp.pop %v3995
      %v4053 = vmul.f32 1.0, %v4052
      %v4054 = vrcp.pop %v3996
      %v4055 = vmul.f32 1.0, %v4054
      %v4056 = vrcp.pop %v3997
      %v4057 = vmul.f32 1.0, %v4056
      %v4058 = vrcp.pop %v3998
      %v4059 = vmul.f32 1.0, %v4058
      %v4060 = vrcp.pop %v3999
      %v4061 = vmul.f32 1.0, %v4060
      %v4062 = vrcp.pop %v4000
      %v4063 = vmul.f32 1.0, %v4062
      %v4064 = vrcp.pop %v4001
      %v4065 = vmul.f32 1.0, %v4064
      %v4066 = vmul.f32 %v3842, %v4003
      %v4067 = vmul.f32 %v3843, %v4005
      %v4068 = vmul.f32 %v3844, %v4007
      %v4069 = vmul.f32 %v3845, %v4009
      %v4070 = vmul.f32 %v3846, %v4011
      %v4071 = vmul.f32 %v3847, %v4013
      %v4072 = vmul.f32 %v3848, %v4015
      %v4073 = vmul.f32 %v3849, %v4017
      %v4074 = vmul.f32 %v3850, %v4019
      %v4075 = vmul.f32 %v3851, %v4021
      %v4076 = vmul.f32 %v3852, %v4023
      %v4077 = vmul.f32 %v3853, %v4025
      %v4078 = vmul.f32 %v3854, %v4027
      %v4079 = vmul.f32 %v3855, %v4029
      %v4080 = vmul.f32 %v3856, %v4031
      %v4081 = vmul.f32 %v3857, %v4033
      %v4082 = vmul.f32 %v3858, %v4035
      %v4083 = vmul.f32 %v3859, %v4037
      %v4084 = vmul.f32 %v3860, %v4039
      %v4085 = vmul.f32 %v3861, %v4041
      %v4086 = vmul.f32 %v3862, %v4043
      %v4087 = vmul.f32 %v3863, %v4045
      %v4088 = vmul.f32 %v3864, %v4047
      %v4089 = vmul.f32 %v3865, %v4049
      %v4090 = vmul.f32 %v3866, %v4051
      %v4091 = vmul.f32 %v3867, %v4053
      %v4092 = vmul.f32 %v3868, %v4055
      %v4093 = vmul.f32 %v3869, %v4057
      %v4094 = vmul.f32 %v3870, %v4059
      %v4095 = vmul.f32 %v3871, %v4061
      %v4096 = vmul.f32 %v3872, %v4063
      %v4097 = vmul.f32 %v3873, %v4065
      %4098 = vst.msk [vmem:[%s278] sm:$0xff] %vm372, %v4066
      %4099 = vst.msk [vmem:[%s278 + $0x8] sm:$0xff] %vm372, %v4067
      %4100 = vst.msk [vmem:[%s278 + $0x10] sm:$0xff] %vm372, %v4068
      %4101 = vst.msk [vmem:[%s278 + $0x18] sm:$0xff] %vm372, %v4069
      %4102 = vst.msk [vmem:[%s278 + $0x20] sm:$0xff] %vm372, %v4070
      %4103 = vst.msk [vmem:[%s278 + $0x28] sm:$0xff] %vm372, %v4071
      %4104 = vst.msk [vmem:[%s278 + $0x30] sm:$0xff] %vm372, %v4072
      %4105 = vst.msk [vmem:[%s278 + $0x38] sm:$0xff] %vm372, %v4073
      %4106 = vst.msk [vmem:[%s278 + $0x40] sm:$0xff] %vm372, %v4074
      %4107 = vst.msk [vmem:[%s278 + $0x48] sm:$0xff] %vm372, %v4075
      %4108 = vst.msk [vmem:[%s278 + $0x50] sm:$0xff] %vm372, %v4076
      %4109 = vst.msk [vmem:[%s278 + $0x58] sm:$0xff] %vm372, %v4077
      %4110 = vst.msk [vmem:[%s278 + $0x60] sm:$0xff] %vm372, %v4078
      %4111 = vst.msk [vmem:[%s278 + $0x68] sm:$0xff] %vm372, %v4079
      %4112 = vst.msk [vmem:[%s278 + $0x70] sm:$0xff] %vm372, %v4080
      %4113 = vst.msk [vmem:[%s278 + $0x78] sm:$0xff] %vm372, %v4081
      %4114 = vst.msk [vmem:[%s278 + $0x80] sm:$0xff] %vm372, %v4082
      %4115 = vst.msk [vmem:[%s278 + $0x88] sm:$0xff] %vm372, %v4083
      %4116 = vst.msk [vmem:[%s278 + $0x90] sm:$0xff] %vm372, %v4084
      %4117 = vst.msk [vmem:[%s278 + $0x98] sm:$0xff] %vm372, %v4085
      %4118 = vst.msk [vmem:[%s278 + $0xa0] sm:$0xff] %vm372, %v4086
      %4119 = vst.msk [vmem:[%s278 + $0xa8] sm:$0xff] %vm372, %v4087
      %4120 = vst.msk [vmem:[%s278 + $0xb0] sm:$0xff] %vm372, %v4088
      %4121 = vst.msk [vmem:[%s278 + $0xb8] sm:$0xff] %vm372, %v4089
      %4122 = vst.msk [vmem:[%s278 + $0xc0] sm:$0xff] %vm372, %v4090
      %4123 = vst.msk [vmem:[%s278 + $0xc8] sm:$0xff] %vm372, %v4091
      %4124 = vst.msk [vmem:[%s278 + $0xd0] sm:$0xff] %vm372, %v4092
      %4125 = vst.msk [vmem:[%s278 + $0xd8] sm:$0xff] %vm372, %v4093
      %4126 = vst.msk [vmem:[%s278 + $0xe0] sm:$0xff] %vm372, %v4094
      %4127 = vst.msk [vmem:[%s278 + $0xe8] sm:$0xff] %vm372, %v4095
      %4128 = vst.msk [vmem:[%s278 + $0xf0] sm:$0xff] %vm372, %v4096
      %4129 = vst.msk [vmem:[%s278 + $0xf8] sm:$0xff] %vm372, %v4097
      %p4130 = scmp.lt.s32.totalorder %s18, 1
      %s4131 = scalar_select %p4130, %s18, 1
      %s4132 = smul.addr %s4131, 32
      %s4133 = smul.addr %s4132, 8
      %s4134 = scalar_lea.vmem %s7, %s4133
      // Predicated region
      $region49: #{sppf_forward.1} parent=47 // pred_check
        %p4135 = pneg %p188
      $region50: #{sppf_forward.1} parent=47 // pred_check_branch
        %4137 = sbr.rel (%p4135) target = $region52
      $region51: #{sppf_forward.1} parent=47 // pred_region
        _
      $region52: #{sppf_forward.1} parent=47 // pred_fallthru
        _
    $region48: #{sppf_forward.1} parent=5 // pred_fallthru
      _
    %p4138 = scmp.le.s32.totalorder 2, %s13
    // Predicated region
    $region53: #{sppf_forward.1} parent=5 // pred_check
      %p4139 = pneg %p4138
    $region54: #{sppf_forward.1} parent=5 // pred_check_branch
      %4141 = sbr.rel (%p4139) target = $region56
    $region55: #{sppf_forward.1} parent=5 // pred_region
      %s4142 = ssub.s32 %s13, 2
      // Predicated region
      $region57: #{sppf_forward.1} parent=55 // pred_check
        %p4143 = pneg %p194
      $region58: #{sppf_forward.1} parent=55 // pred_check_branch
        %4145 = sbr.rel (%p4143) target = $region60
      $region59: #{sppf_forward.1} parent=55 // pred_region
        %p4146 = scmp.lt.s32.totalorder %s19, 1
        %s4147 = scalar_select %p4146, %s19, 1
        %s4148 = smul.addr %s4147, 32
        %s4149 = smul.addr %s4148, 8
        %s4150 = scalar_lea.vmem %s7, %s4149
      $region60: #{sppf_forward.1} parent=55 // pred_fallthru
        _
    $region56: #{sppf_forward.1} parent=5 // pred_fallthru
      _
  $region6: #{sppf_forward.1} parent=0 // loop_footer
    %s17 = sadd.s32 1, %s13
  $region7: #{sppf_forward.1} parent=0 // loop_footer_branch
    %12 = sbr.rel target = $region3
  $region8: #{sppf_forward.1} parent=0 // loop_exit
    _

</llo_original>
